<compile_context>
chip_gen: v6e
topology: v6e:2x2x1
jax: 0.10.0
libtpu: 0.0.40
codegen_flags: <defaults>
</compile_context>

<pallas_src>
from functools import partial

import jax
import jax.numpy as jnp
from jax import lax
from jax.experimental import pallas as pl
from jax.experimental.pallas import tpu as pltpu


def _cat(parts, axis):
    return parts[0] if len(parts) == 1 else jnp.concatenate(parts, axis=axis)


# ----------------------------------------------------------------------------
# Fused attention kernel: `block_b` batch elements per grid step.
# ----------------------------------------------------------------------------
def _fused_attention_kernel(x_ref, qkvw_ref, pw_ref, pb_ref, o_ref, *, num_heads):
    """
    x_ref    : (Bb, N, C)  input tokens
    qkvw_ref : (C, 3C)     fused [q*scale | k | v] weight, stored (in, out)
    pw_ref   : (C, C)      proj weight, (in, out)
    pb_ref   : (1, C)      proj bias (f32)
    o_ref    : (Bb, N, C)  output tokens (lane-dense, C on lanes)
    """
    Bb, N, C = x_ref.shape
    d = C // num_heads
    cdt = x_ref.dtype                     # matmul operand dtype (f32 or bf16)

    x = x_ref[...].reshape(Bb * N, C)     # (M, C); M = Bb*N rows for the MXU

    # Fused q/kv projection: one MXU issue, 3C-wide lane-dense output, f32 acc.
    # Softmax scale is already folded into the q columns of the weight.
    qkv = jnp.dot(x, qkvw_ref[...], preferred_element_type=jnp.float32)
    qkv = qkv.astype(cdt)
    q = qkv[:, :C]
    k = qkv[:, C:2 * C]
    v = qkv[:, 2 * C:]

    # Per-(batch, head) attention; head outputs stay in registers and are
    # concatenated into a lane-dense (M, C) proj input (no masked VMEM stores).
    outs = []
    for b in range(Bb):
        rows = slice(b * N, (b + 1) * N)
        head_outs = []
        for h in range(num_heads):
            cols = slice(h * d, (h + 1) * d)
            qh = q[rows, cols]                                      # (N, d)
            kh = k[rows, cols]
            vh = v[rows, cols]
            # Contract the last dims of q and k directly (no kh.T transpose).
            s = lax.dot_general(qh, kh, (((1,), (1,)), ((), ())),
                                preferred_element_type=jnp.float32)  # (N, N)
            m = jnp.max(s, axis=-1, keepdims=True)
            p = jnp.exp(s - m)
            l = jnp.sum(p, axis=-1, keepdims=True)
            # Deferred normalization: scale the (N, d) PV product, not the
            # (N, N) probabilities; reciprocal runs on the EUP slot.
            oh = jnp.dot(p.astype(cdt), vh, preferred_element_type=jnp.float32)
            oh = oh * pl.reciprocal(l, approx=True)
            head_outs.append(oh)
        outs.append(_cat(head_outs, axis=-1))                        # (N, C)
    attn = _cat(outs, axis=0)                                        # (M, C) f32

    # Output projection + bias: single C-wide MXU contraction, fused epilogue.
    o = jnp.dot(attn.astype(pw_ref.dtype), pw_ref[...],
                preferred_element_type=jnp.float32) + pb_ref[...]
    o_ref[...] = o.reshape(Bb, N, C).astype(o_ref.dtype)


# ----------------------------------------------------------------------------
# Parameter preparation (done once, outside the hot path)
# ----------------------------------------------------------------------------
def prepare_params(q_w, kv_w, proj_w, proj_b, *, num_heads, scale=None,
                   param_dtype=None):
    """Build fused qkv weight with the softmax scale folded into the q columns.

    q_w    : (C, C)   = PyTorch self.q.weight.T
    kv_w   : (C, 2C)  = PyTorch self.kv.weight.T
    proj_w : (C, C)   = PyTorch self.proj.weight.T
    proj_b : (C,)     = PyTorch self.proj.bias
    param_dtype : optionally cast matmul weights (e.g. jnp.bfloat16).
    """
    C = q_w.shape[0]
    assert C % num_heads == 0
    if scale is None:
        scale = float((C // num_heads) ** -0.5)      # qk_scale=None default
    qkv_w = jnp.concatenate([q_w * scale, kv_w], axis=1)             # (C, 3C)
    if param_dtype is not None:
        qkv_w = qkv_w.astype(param_dtype)
        proj_w = proj_w.astype(param_dtype)
    proj_b2 = proj_b.reshape(1, C).astype(jnp.float32)               # keep f32
    return qkv_w, proj_w, proj_b2


def _choose_block_b(B, N, max_rows=128):
    """Pick batch elements per grid step.

    Targets M = block_b*N big enough to feed the MXU while (a) keeping >= 2
    grid steps when B >= 2 (v7x has two TensorCores) and (b) keeping the fully
    in-register head loop within the 64-vreg budget (max_rows cap).
    """
    cands = [bb for bb in range(1, B + 1) if B % bb == 0 and bb * N <= max_rows]
    if not cands:
        return 1
    multi = [bb for bb in cands if B // bb >= 2]
    return max(multi) if multi else max(cands)


# ----------------------------------------------------------------------------
# Wrapper
# ----------------------------------------------------------------------------
def pvt_attention(x, qkv_w, proj_w, proj_b2, *, num_heads, H=None, W=None,
                  sr_ratio=1, linear=False, block_b=None):
    """PVTv2 Attention forward (sr_ratio=1, linear=False, qkv_bias=False).

    x       : (B, N, C) tokens
    qkv_w   : (C, 3C)  from prepare_params (scale folded into q columns)
    proj_w  : (C, C)
    proj_b2 : (1, C)   f32
    H, W    : unused in the sr_ratio=1 / linear=False path (kept for fidelity)
    """
    del H, W
    if sr_ratio != 1 or linear:
        # TODO(synk): spatial-reduction (Conv2d+LayerNorm) / linear (pool+GELU)
        # branches are not implemented.
        raise NotImplementedError("only sr_ratio=1, linear=False is supported")

    B, N, C = x.shape
    assert C % num_heads == 0
    assert qkv_w.shape == (C, 3 * C)
    if block_b is None:
        block_b = _choose_block_b(B, N)
    assert B % block_b == 0
    grid = B // block_b

    kernel = partial(_fused_attention_kernel, num_heads=num_heads)
    return pl.pallas_call(
        kernel,
        out_shape=jax.ShapeDtypeStruct((B, N, C), x.dtype),
        grid=(grid,),
        in_specs=[
            pl.BlockSpec((block_b, N, C), lambda i: (i, 0, 0)),   # x
            pl.BlockSpec((C, 3 * C), lambda i: (0, 0)),           # qkv_w (resident)
            pl.BlockSpec((C, C), lambda i: (0, 0)),               # proj_w
            pl.BlockSpec((1, C), lambda i: (0, 0)),               # proj_b
        ],
        out_specs=pl.BlockSpec((block_b, N, C), lambda i: (i, 0, 0)),
        compiler_params=pltpu.CompilerParams(
            dimension_semantics=("parallel",)),
    )(x, qkv_w, proj_w, proj_b2)


# ----------------------------------------------------------------------------
# Pure-JAX reference (sanity check only)
# ----------------------------------------------------------------------------
def attention_ref(x, q_w, kv_w, proj_w, proj_b, num_heads):
    B, N, C = x.shape
    d = C // num_heads
    scale = d ** -0.5
    q = (x @ q_w).reshape(B, N, num_heads, d).transpose(0, 2, 1, 3)
    kv = x @ kv_w
    k = kv[..., :C].reshape(B, N, num_heads, d).transpose(0, 2, 1, 3)
    v = kv[..., C:].reshape(B, N, num_heads, d).transpose(0, 2, 1, 3)
    s = jnp.einsum("bhqd,bhkd->bhqk", q, k) * scale
    p = jax.nn.softmax(s, axis=-1)
    o = jnp.einsum("bhqk,bhkd->bhqd", p, v).transpose(0, 2, 1, 3).reshape(B, N, C)
    return o @ proj_w + proj_b


# ----------------------------------------------------------------------------
# Demo
# ----------------------------------------------------------------------------
if __name__ == "__main__":
    # Tokens from an 8x8 feature map, dim=128, num_heads=8 -> head_dim=16.
    B, Himg, Wimg = 2, 8, 8
    C, num_heads = 128, 8
    N = Himg * Wimg

    key = jax.random.PRNGKey(0)
    kx, kq, kkv, kp, kb = jax.random.split(key, 5)
    x = jax.random.normal(kx, (B, N, C), jnp.float32)
    q_w = 0.02 * jax.random.normal(kq, (C, C), jnp.float32)
    kv_w = 0.02 * jax.random.normal(kkv, (C, 2 * C), jnp.float32)
    proj_w = 0.02 * jax.random.normal(kp, (C, C), jnp.float32)
    proj_b = 0.02 * jax.random.normal(kb, (C,), jnp.float32)

    ref = attention_ref(x, q_w, kv_w, proj_w, proj_b, num_heads)

    # ---- f32 path ----
    qkv_w, pw, pb2 = prepare_params(q_w, kv_w, proj_w, proj_b,
                                    num_heads=num_heads)
    fwd = jax.jit(partial(pvt_attention, num_heads=num_heads, H=Himg, W=Wimg))
    out = fwd(x, qkv_w, pw, pb2)
    jax.block_until_ready(out)
    assert out.shape == (B, N, C), out.shape
    err = float(jnp.max(jnp.abs(out - ref)))
    assert err < 2e-2, f"f32 max_err={err}"

    # ---- bf16-operand path (recommended on v5e/v6e; f32 accumulation) ----
    qkv_w16, pw16, pb16 = prepare_params(q_w, kv_w, proj_w, proj_b,
                                         num_heads=num_heads,
                                         param_dtype=jnp.bfloat16)
    out16 = jax.jit(partial(pvt_attention, num_heads=num_heads,
                            H=Himg, W=Wimg))(
        x.astype(jnp.bfloat16), qkv_w16, pw16, pb16)
    jax.block_until_ready(out16)
    err16 = float(jnp.max(jnp.abs(out16.astype(jnp.float32) - ref)))
    assert err16 < 5e-2, f"bf16 max_err={err16}"

    print("KERNEL_OK")
</pallas_src>

<mosaic_0001>
module attributes {stable_mosaic.version = 11 : i64} {
  func.func @_fused_attention_kernel(%arg0: i32, %arg1: memref<1x64x128xf32, #tpu.memory_space<vmem>>, %arg2: memref<128x384xf32, #tpu.memory_space<vmem>>, %arg3: memref<128x128xf32, #tpu.memory_space<vmem>>, %arg4: memref<1x128xf32, #tpu.memory_space<vmem>>, %arg5: memref<1x64x128xf32, #tpu.memory_space<vmem>>) attributes {dimension_semantics = [#tpu.dimension_semantics<parallel>], iteration_bounds = array<i64: 2>, scalar_prefetch = 0 : i64, scratch_operands = 0 : i64, tpu.core_type = #tpu.core_type<tc>, window_params = [{transform_indices = @transform_0, window_bounds = array<i64: 1, 64, 128>}, {pipeline_mode = #tpu.pipeline_mode<synchronous>, transform_indices = @transform_1, window_bounds = array<i64: 128, 384>}, {pipeline_mode = #tpu.pipeline_mode<synchronous>, transform_indices = @transform_2, window_bounds = array<i64: 128, 128>}, {pipeline_mode = #tpu.pipeline_mode<synchronous>, transform_indices = @transform_3, window_bounds = array<i64: 1, 128>}, {transform_indices = @transform_4, window_bounds = array<i64: 1, 64, 128>}]} {
    %c0 = arith.constant 0 : index
    %c0_0 = arith.constant 0 : index
    %c0_1 = arith.constant 0 : index
    %0 = vector.load %arg1[%c0, %c0_0, %c0_1] : memref<1x64x128xf32, #tpu.memory_space<vmem>>, vector<1x64x128xf32>
    %1 = vector.shape_cast %0 : vector<1x64x128xf32> to vector<64x128xf32>
    %c0_2 = arith.constant 0 : index
    %c0_3 = arith.constant 0 : index
    %2 = vector.load %arg2[%c0_2, %c0_3] : memref<128x384xf32, #tpu.memory_space<vmem>>, vector<128x384xf32>
    %cst = arith.constant dense<0.000000e+00> : vector<64x384xf32>
    %3 = tpu.matmul %1, %2, %cst {dimension_numbers = #tpu.dot_dimension_numbers<[1], [0], [0], [1], [0, 0, 1, 1], [], []>} : vector<64x128xf32>, vector<128x384xf32>, vector<64x384xf32> -> vector<64x384xf32>
    %4 = vector.extract_strided_slice %3 {offsets = [0, 0], sizes = [64, 128], strides = [1, 1]} : vector<64x384xf32> to vector<64x128xf32>
    %5 = vector.extract_strided_slice %3 {offsets = [0, 128], sizes = [64, 128], strides = [1, 1]} : vector<64x384xf32> to vector<64x128xf32>
    %6 = vector.extract_strided_slice %3 {offsets = [0, 256], sizes = [64, 128], strides = [1, 1]} : vector<64x384xf32> to vector<64x128xf32>
    %7 = vector.extract_strided_slice %4 {offsets = [0, 0], sizes = [64, 16], strides = [1, 1]} : vector<64x128xf32> to vector<64x16xf32>
    %8 = vector.extract_strided_slice %5 {offsets = [0, 0], sizes = [64, 16], strides = [1, 1]} : vector<64x128xf32> to vector<64x16xf32>
    %9 = vector.extract_strided_slice %6 {offsets = [0, 0], sizes = [64, 16], strides = [1, 1]} : vector<64x128xf32> to vector<64x16xf32>
    %cst_4 = arith.constant dense<0.000000e+00> : vector<64x64xf32>
    %10 = tpu.matmul %7, %8, %cst_4 {dimension_numbers = #tpu.dot_dimension_numbers<[1], [1], [0], [0], [0, 0, 1, 0], [], []>} : vector<64x16xf32>, vector<64x16xf32>, vector<64x64xf32> -> vector<64x64xf32>
    %cst_5 = arith.constant dense<0xFF800000> : vector<64xf32>
    %11 = vector.multi_reduction <maximumf>, %10, %cst_5 [1] : vector<64x64xf32> to vector<64xf32>
    %12 = vector.shape_cast %11 : vector<64xf32> to vector<64x1xf32>
    %13 = vector.broadcast %12 : vector<64x1xf32> to vector<64x64xf32>
    %14 = arith.subf %10, %13 : vector<64x64xf32>
    %15 = math.exp %14 : vector<64x64xf32>
    %cst_6 = arith.constant dense<0.000000e+00> : vector<64xf32>
    %16 = vector.multi_reduction <add>, %15, %cst_6 [1] : vector<64x64xf32> to vector<64xf32>
    %17 = vector.shape_cast %16 : vector<64xf32> to vector<64x1xf32>
    %cst_7 = arith.constant dense<0.000000e+00> : vector<64x16xf32>
    %18 = tpu.matmul %15, %9, %cst_7 {dimension_numbers = #tpu.dot_dimension_numbers<[1], [0], [0], [1], [0, 0, 1, 1], [], []>} : vector<64x64xf32>, vector<64x16xf32>, vector<64x16xf32> -> vector<64x16xf32>
    %19 = tpu.reciprocal %17 {approx = true} : vector<64x1xf32> -> vector<64x1xf32>
    %20 = vector.broadcast %19 : vector<64x1xf32> to vector<64x16xf32>
    %21 = arith.mulf %18, %20 : vector<64x16xf32>
    %22 = vector.extract_strided_slice %4 {offsets = [0, 16], sizes = [64, 16], strides = [1, 1]} : vector<64x128xf32> to vector<64x16xf32>
    %23 = vector.extract_strided_slice %5 {offsets = [0, 16], sizes = [64, 16], strides = [1, 1]} : vector<64x128xf32> to vector<64x16xf32>
    %24 = vector.extract_strided_slice %6 {offsets = [0, 16], sizes = [64, 16], strides = [1, 1]} : vector<64x128xf32> to vector<64x16xf32>
    %cst_8 = arith.constant dense<0.000000e+00> : vector<64x64xf32>
    %25 = tpu.matmul %22, %23, %cst_8 {dimension_numbers = #tpu.dot_dimension_numbers<[1], [1], [0], [0], [0, 0, 1, 0], [], []>} : vector<64x16xf32>, vector<64x16xf32>, vector<64x64xf32> -> vector<64x64xf32>
    %cst_9 = arith.constant dense<0xFF800000> : vector<64xf32>
    %26 = vector.multi_reduction <maximumf>, %25, %cst_9 [1] : vector<64x64xf32> to vector<64xf32>
    %27 = vector.shape_cast %26 : vector<64xf32> to vector<64x1xf32>
    %28 = vector.broadcast %27 : vector<64x1xf32> to vector<64x64xf32>
    %29 = arith.subf %25, %28 : vector<64x64xf32>
    %30 = math.exp %29 : vector<64x64xf32>
    %cst_10 = arith.constant dense<0.000000e+00> : vector<64xf32>
    %31 = vector.multi_reduction <add>, %30, %cst_10 [1] : vector<64x64xf32> to vector<64xf32>
    %32 = vector.shape_cast %31 : vector<64xf32> to vector<64x1xf32>
    %cst_11 = arith.constant dense<0.000000e+00> : vector<64x16xf32>
    %33 = tpu.matmul %30, %24, %cst_11 {dimension_numbers = #tpu.dot_dimension_numbers<[1], [0], [0], [1], [0, 0, 1, 1], [], []>} : vector<64x64xf32>, vector<64x16xf32>, vector<64x16xf32> -> vector<64x16xf32>
    %34 = tpu.reciprocal %32 {approx = true} : vector<64x1xf32> -> vector<64x1xf32>
    %35 = vector.broadcast %34 : vector<64x1xf32> to vector<64x16xf32>
    %36 = arith.mulf %33, %35 : vector<64x16xf32>
    %37 = vector.extract_strided_slice %4 {offsets = [0, 32], sizes = [64, 16], strides = [1, 1]} : vector<64x128xf32> to vector<64x16xf32>
    %38 = vector.extract_strided_slice %5 {offsets = [0, 32], sizes = [64, 16], strides = [1, 1]} : vector<64x128xf32> to vector<64x16xf32>
    %39 = vector.extract_strided_slice %6 {offsets = [0, 32], sizes = [64, 16], strides = [1, 1]} : vector<64x128xf32> to vector<64x16xf32>
    %cst_12 = arith.constant dense<0.000000e+00> : vector<64x64xf32>
    %40 = tpu.matmul %37, %38, %cst_12 {dimension_numbers = #tpu.dot_dimension_numbers<[1], [1], [0], [0], [0, 0, 1, 0], [], []>} : vector<64x16xf32>, vector<64x16xf32>, vector<64x64xf32> -> vector<64x64xf32>
    %cst_13 = arith.constant dense<0xFF800000> : vector<64xf32>
    %41 = vector.multi_reduction <maximumf>, %40, %cst_13 [1] : vector<64x64xf32> to vector<64xf32>
    %42 = vector.shape_cast %41 : vector<64xf32> to vector<64x1xf32>
    %43 = vector.broadcast %42 : vector<64x1xf32> to vector<64x64xf32>
    %44 = arith.subf %40, %43 : vector<64x64xf32>
    %45 = math.exp %44 : vector<64x64xf32>
    %cst_14 = arith.constant dense<0.000000e+00> : vector<64xf32>
    %46 = vector.multi_reduction <add>, %45, %cst_14 [1] : vector<64x64xf32> to vector<64xf32>
    %47 = vector.shape_cast %46 : vector<64xf32> to vector<64x1xf32>
    %cst_15 = arith.constant dense<0.000000e+00> : vector<64x16xf32>
    %48 = tpu.matmul %45, %39, %cst_15 {dimension_numbers = #tpu.dot_dimension_numbers<[1], [0], [0], [1], [0, 0, 1, 1], [], []>} : vector<64x64xf32>, vector<64x16xf32>, vector<64x16xf32> -> vector<64x16xf32>
    %49 = tpu.reciprocal %47 {approx = true} : vector<64x1xf32> -> vector<64x1xf32>
    %50 = vector.broadcast %49 : vector<64x1xf32> to vector<64x16xf32>
    %51 = arith.mulf %48, %50 : vector<64x16xf32>
    %52 = vector.extract_strided_slice %4 {offsets = [0, 48], sizes = [64, 16], strides = [1, 1]} : vector<64x128xf32> to vector<64x16xf32>
    %53 = vector.extract_strided_slice %5 {offsets = [0, 48], sizes = [64, 16], strides = [1, 1]} : vector<64x128xf32> to vector<64x16xf32>
    %54 = vector.extract_strided_slice %6 {offsets = [0, 48], sizes = [64, 16], strides = [1, 1]} : vector<64x128xf32> to vector<64x16xf32>
    %cst_16 = arith.constant dense<0.000000e+00> : vector<64x64xf32>
    %55 = tpu.matmul %52, %53, %cst_16 {dimension_numbers = #tpu.dot_dimension_numbers<[1], [1], [0], [0], [0, 0, 1, 0], [], []>} : vector<64x16xf32>, vector<64x16xf32>, vector<64x64xf32> -> vector<64x64xf32>
    %cst_17 = arith.constant dense<0xFF800000> : vector<64xf32>
    %56 = vector.multi_reduction <maximumf>, %55, %cst_17 [1] : vector<64x64xf32> to vector<64xf32>
    %57 = vector.shape_cast %56 : vector<64xf32> to vector<64x1xf32>
    %58 = vector.broadcast %57 : vector<64x1xf32> to vector<64x64xf32>
    %59 = arith.subf %55, %58 : vector<64x64xf32>
    %60 = math.exp %59 : vector<64x64xf32>
    %cst_18 = arith.constant dense<0.000000e+00> : vector<64xf32>
    %61 = vector.multi_reduction <add>, %60, %cst_18 [1] : vector<64x64xf32> to vector<64xf32>
    %62 = vector.shape_cast %61 : vector<64xf32> to vector<64x1xf32>
    %cst_19 = arith.constant dense<0.000000e+00> : vector<64x16xf32>
    %63 = tpu.matmul %60, %54, %cst_19 {dimension_numbers = #tpu.dot_dimension_numbers<[1], [0], [0], [1], [0, 0, 1, 1], [], []>} : vector<64x64xf32>, vector<64x16xf32>, vector<64x16xf32> -> vector<64x16xf32>
    %64 = tpu.reciprocal %62 {approx = true} : vector<64x1xf32> -> vector<64x1xf32>
    %65 = vector.broadcast %64 : vector<64x1xf32> to vector<64x16xf32>
    %66 = arith.mulf %63, %65 : vector<64x16xf32>
    %67 = vector.extract_strided_slice %4 {offsets = [0, 64], sizes = [64, 16], strides = [1, 1]} : vector<64x128xf32> to vector<64x16xf32>
    %68 = vector.extract_strided_slice %5 {offsets = [0, 64], sizes = [64, 16], strides = [1, 1]} : vector<64x128xf32> to vector<64x16xf32>
    %69 = vector.extract_strided_slice %6 {offsets = [0, 64], sizes = [64, 16], strides = [1, 1]} : vector<64x128xf32> to vector<64x16xf32>
    %cst_20 = arith.constant dense<0.000000e+00> : vector<64x64xf32>
    %70 = tpu.matmul %67, %68, %cst_20 {dimension_numbers = #tpu.dot_dimension_numbers<[1], [1], [0], [0], [0, 0, 1, 0], [], []>} : vector<64x16xf32>, vector<64x16xf32>, vector<64x64xf32> -> vector<64x64xf32>
    %cst_21 = arith.constant dense<0xFF800000> : vector<64xf32>
    %71 = vector.multi_reduction <maximumf>, %70, %cst_21 [1] : vector<64x64xf32> to vector<64xf32>
    %72 = vector.shape_cast %71 : vector<64xf32> to vector<64x1xf32>
    %73 = vector.broadcast %72 : vector<64x1xf32> to vector<64x64xf32>
    %74 = arith.subf %70, %73 : vector<64x64xf32>
    %75 = math.exp %74 : vector<64x64xf32>
    %cst_22 = arith.constant dense<0.000000e+00> : vector<64xf32>
    %76 = vector.multi_reduction <add>, %75, %cst_22 [1] : vector<64x64xf32> to vector<64xf32>
    %77 = vector.shape_cast %76 : vector<64xf32> to vector<64x1xf32>
    %cst_23 = arith.constant dense<0.000000e+00> : vector<64x16xf32>
    %78 = tpu.matmul %75, %69, %cst_23 {dimension_numbers = #tpu.dot_dimension_numbers<[1], [0], [0], [1], [0, 0, 1, 1], [], []>} : vector<64x64xf32>, vector<64x16xf32>, vector<64x16xf32> -> vector<64x16xf32>
    %79 = tpu.reciprocal %77 {approx = true} : vector<64x1xf32> -> vector<64x1xf32>
    %80 = vector.broadcast %79 : vector<64x1xf32> to vector<64x16xf32>
    %81 = arith.mulf %78, %80 : vector<64x16xf32>
    %82 = vector.extract_strided_slice %4 {offsets = [0, 80], sizes = [64, 16], strides = [1, 1]} : vector<64x128xf32> to vector<64x16xf32>
    %83 = vector.extract_strided_slice %5 {offsets = [0, 80], sizes = [64, 16], strides = [1, 1]} : vector<64x128xf32> to vector<64x16xf32>
    %84 = vector.extract_strided_slice %6 {offsets = [0, 80], sizes = [64, 16], strides = [1, 1]} : vector<64x128xf32> to vector<64x16xf32>
    %cst_24 = arith.constant dense<0.000000e+00> : vector<64x64xf32>
    %85 = tpu.matmul %82, %83, %cst_24 {dimension_numbers = #tpu.dot_dimension_numbers<[1], [1], [0], [0], [0, 0, 1, 0], [], []>} : vector<64x16xf32>, vector<64x16xf32>, vector<64x64xf32> -> vector<64x64xf32>
    %cst_25 = arith.constant dense<0xFF800000> : vector<64xf32>
    %86 = vector.multi_reduction <maximumf>, %85, %cst_25 [1] : vector<64x64xf32> to vector<64xf32>
    %87 = vector.shape_cast %86 : vector<64xf32> to vector<64x1xf32>
    %88 = vector.broadcast %87 : vector<64x1xf32> to vector<64x64xf32>
    %89 = arith.subf %85, %88 : vector<64x64xf32>
    %90 = math.exp %89 : vector<64x64xf32>
    %cst_26 = arith.constant dense<0.000000e+00> : vector<64xf32>
    %91 = vector.multi_reduction <add>, %90, %cst_26 [1] : vector<64x64xf32> to vector<64xf32>
    %92 = vector.shape_cast %91 : vector<64xf32> to vector<64x1xf32>
    %cst_27 = arith.constant dense<0.000000e+00> : vector<64x16xf32>
    %93 = tpu.matmul %90, %84, %cst_27 {dimension_numbers = #tpu.dot_dimension_numbers<[1], [0], [0], [1], [0, 0, 1, 1], [], []>} : vector<64x64xf32>, vector<64x16xf32>, vector<64x16xf32> -> vector<64x16xf32>
    %94 = tpu.reciprocal %92 {approx = true} : vector<64x1xf32> -> vector<64x1xf32>
    %95 = vector.broadcast %94 : vector<64x1xf32> to vector<64x16xf32>
    %96 = arith.mulf %93, %95 : vector<64x16xf32>
    %97 = vector.extract_strided_slice %4 {offsets = [0, 96], sizes = [64, 16], strides = [1, 1]} : vector<64x128xf32> to vector<64x16xf32>
    %98 = vector.extract_strided_slice %5 {offsets = [0, 96], sizes = [64, 16], strides = [1, 1]} : vector<64x128xf32> to vector<64x16xf32>
    %99 = vector.extract_strided_slice %6 {offsets = [0, 96], sizes = [64, 16], strides = [1, 1]} : vector<64x128xf32> to vector<64x16xf32>
    %cst_28 = arith.constant dense<0.000000e+00> : vector<64x64xf32>
    %100 = tpu.matmul %97, %98, %cst_28 {dimension_numbers = #tpu.dot_dimension_numbers<[1], [1], [0], [0], [0, 0, 1, 0], [], []>} : vector<64x16xf32>, vector<64x16xf32>, vector<64x64xf32> -> vector<64x64xf32>
    %cst_29 = arith.constant dense<0xFF800000> : vector<64xf32>
    %101 = vector.multi_reduction <maximumf>, %100, %cst_29 [1] : vector<64x64xf32> to vector<64xf32>
    %102 = vector.shape_cast %101 : vector<64xf32> to vector<64x1xf32>
    %103 = vector.broadcast %102 : vector<64x1xf32> to vector<64x64xf32>
    %104 = arith.subf %100, %103 : vector<64x64xf32>
    %105 = math.exp %104 : vector<64x64xf32>
    %cst_30 = arith.constant dense<0.000000e+00> : vector<64xf32>
    %106 = vector.multi_reduction <add>, %105, %cst_30 [1] : vector<64x64xf32> to vector<64xf32>
    %107 = vector.shape_cast %106 : vector<64xf32> to vector<64x1xf32>
    %cst_31 = arith.constant dense<0.000000e+00> : vector<64x16xf32>
    %108 = tpu.matmul %105, %99, %cst_31 {dimension_numbers = #tpu.dot_dimension_numbers<[1], [0], [0], [1], [0, 0, 1, 1], [], []>} : vector<64x64xf32>, vector<64x16xf32>, vector<64x16xf32> -> vector<64x16xf32>
    %109 = tpu.reciprocal %107 {approx = true} : vector<64x1xf32> -> vector<64x1xf32>
    %110 = vector.broadcast %109 : vector<64x1xf32> to vector<64x16xf32>
    %111 = arith.mulf %108, %110 : vector<64x16xf32>
    %112 = vector.extract_strided_slice %4 {offsets = [0, 112], sizes = [64, 16], strides = [1, 1]} : vector<64x128xf32> to vector<64x16xf32>
    %113 = vector.extract_strided_slice %5 {offsets = [0, 112], sizes = [64, 16], strides = [1, 1]} : vector<64x128xf32> to vector<64x16xf32>
    %114 = vector.extract_strided_slice %6 {offsets = [0, 112], sizes = [64, 16], strides = [1, 1]} : vector<64x128xf32> to vector<64x16xf32>
    %cst_32 = arith.constant dense<0.000000e+00> : vector<64x64xf32>
    %115 = tpu.matmul %112, %113, %cst_32 {dimension_numbers = #tpu.dot_dimension_numbers<[1], [1], [0], [0], [0, 0, 1, 0], [], []>} : vector<64x16xf32>, vector<64x16xf32>, vector<64x64xf32> -> vector<64x64xf32>
    %cst_33 = arith.constant dense<0xFF800000> : vector<64xf32>
    %116 = vector.multi_reduction <maximumf>, %115, %cst_33 [1] : vector<64x64xf32> to vector<64xf32>
    %117 = vector.shape_cast %116 : vector<64xf32> to vector<64x1xf32>
    %118 = vector.broadcast %117 : vector<64x1xf32> to vector<64x64xf32>
    %119 = arith.subf %115, %118 : vector<64x64xf32>
    %120 = math.exp %119 : vector<64x64xf32>
    %cst_34 = arith.constant dense<0.000000e+00> : vector<64xf32>
    %121 = vector.multi_reduction <add>, %120, %cst_34 [1] : vector<64x64xf32> to vector<64xf32>
    %122 = vector.shape_cast %121 : vector<64xf32> to vector<64x1xf32>
    %cst_35 = arith.constant dense<0.000000e+00> : vector<64x16xf32>
    %123 = tpu.matmul %120, %114, %cst_35 {dimension_numbers = #tpu.dot_dimension_numbers<[1], [0], [0], [1], [0, 0, 1, 1], [], []>} : vector<64x64xf32>, vector<64x16xf32>, vector<64x16xf32> -> vector<64x16xf32>
    %124 = tpu.reciprocal %122 {approx = true} : vector<64x1xf32> -> vector<64x1xf32>
    %125 = vector.broadcast %124 : vector<64x1xf32> to vector<64x16xf32>
    %126 = arith.mulf %123, %125 : vector<64x16xf32>
    %127 = tpu.concatenate %21, %36, %51, %66, %81, %96, %111, %126 in 1 : vector<64x16xf32>, vector<64x16xf32>, vector<64x16xf32>, vector<64x16xf32>, vector<64x16xf32>, vector<64x16xf32>, vector<64x16xf32>, vector<64x16xf32> -> vector<64x128xf32>
    %c0_36 = arith.constant 0 : index
    %c0_37 = arith.constant 0 : index
    %128 = vector.load %arg3[%c0_36, %c0_37] : memref<128x128xf32, #tpu.memory_space<vmem>>, vector<128x128xf32>
    %cst_38 = arith.constant dense<0.000000e+00> : vector<64x128xf32>
    %129 = tpu.matmul %127, %128, %cst_38 {dimension_numbers = #tpu.dot_dimension_numbers<[1], [0], [0], [1], [0, 0, 1, 1], [], []>} : vector<64x128xf32>, vector<128x128xf32>, vector<64x128xf32> -> vector<64x128xf32>
    %c0_39 = arith.constant 0 : index
    %c0_40 = arith.constant 0 : index
    %130 = vector.load %arg4[%c0_39, %c0_40] : memref<1x128xf32, #tpu.memory_space<vmem>>, vector<1x128xf32>
    %131 = vector.broadcast %130 : vector<1x128xf32> to vector<64x128xf32>
    %132 = arith.addf %129, %131 : vector<64x128xf32>
    %133 = vector.shape_cast %132 : vector<64x128xf32> to vector<1x64x128xf32>
    %c0_41 = arith.constant 0 : index
    %c0_42 = arith.constant 0 : index
    %c0_43 = arith.constant 0 : index
    %134 = vector.load %arg5[%c0_41, %c0_42, %c0_43] : memref<1x64x128xf32, #tpu.memory_space<vmem>>, vector<1x64x128xf32>
    tpu.vector_store %arg5[%c0_41, %c0_42, %c0_43], %133 {strides = array<i32>} : memref<1x64x128xf32, #tpu.memory_space<vmem>>, vector<1x64x128xf32>,
    return
  }
  func.func @transform_0(%arg0: i32) -> (i32, i32, i32) {
    %c0_i32 = arith.constant 0 : i32
    %c0_i32_0 = arith.constant 0 : i32
    %c0_i32_1 = arith.constant 0 : i32
    return %arg0, %c0_i32, %c0_i32_0 : i32, i32, i32
  }
  func.func @transform_1(%arg0: i32) -> (i32, i32) {
    %c0_i32 = arith.constant 0 : i32
    %c0_i32_0 = arith.constant 0 : i32
    %c0_i32_1 = arith.constant 0 : i32
    return %c0_i32, %c0_i32_0 : i32, i32
  }
  func.func @transform_2(%arg0: i32) -> (i32, i32) {
    %c0_i32 = arith.constant 0 : i32
    %c0_i32_0 = arith.constant 0 : i32
    %c0_i32_1 = arith.constant 0 : i32
    return %c0_i32, %c0_i32_0 : i32, i32
  }
  func.func @transform_3(%arg0: i32) -> (i32, i32) {
    %c0_i32 = arith.constant 0 : i32
    %c0_i32_0 = arith.constant 0 : i32
    %c0_i32_1 = arith.constant 0 : i32
    return %c0_i32, %c0_i32_0 : i32, i32
  }
  func.func @transform_4(%arg0: i32) -> (i32, i32, i32) {
    %c0_i32 = arith.constant 0 : i32
    %c0_i32_0 = arith.constant 0 : i32
    %c0_i32_1 = arith.constant 0 : i32
    return %arg0, %c0_i32, %c0_i32_0 : i32, i32, i32
  }
}

</mosaic_0001>

<llo_original>
// kernel: pvt_attention.1
$region0: #{pvt_attention.1}
  #allocation0 [shape = 'u32[]', space=smem, size = 0x4, offset = 0x4, fixed_abs, tag = 'smem constant byte address 0x4 - core index']
  #allocation1 [shape = 'u32[144,128]{1,0:T(1,128)}', space=vmem, size = 0x12000, scoped, tag = 'internal scratch']
  %s0 = inlined_call_operand.hbm [shape: f32[2,64,128], index: 0, kind: input, shape index: {}]
  %s1 = inlined_call_operand.hbm [shape: f32[128,384], index: 1, kind: input, shape index: {}]
  %s2 = inlined_call_operand.hbm [shape: f32[128,128], index: 2, kind: input, shape index: {}]
  %s3 = inlined_call_operand.vmem [shape: f32[1,128], index: 3, kind: input, shape index: {}]
  %s4 = inlined_call_operand.hbm [shape: f32[2,64,128], index: 4, kind: output, shape index: {}]
  %s5 = sld [smem:[#allocation0]]
  $region61: #{pvt_attention.1} parent=0
    _
  %s7 = ssub.s32 1, %s5
  %s8 = scalar_select 0, %s7, %s5
  $region1: #{pvt_attention.1} parent=0
    #allocation2 [shape = 'u8[65536]{0}', space=vmem, size = 0x10000, scoped, tag = 'input window, operand 0']
    #allocation3 [shape = 's32[2]{0}', space=sflag, size = 0x8, scoped, tag = 'scoped memory for pvt_attention.1']
    #allocation4 [shape = 's32[2]{0}', space=sflag, size = 0x8, scoped, tag = 'scoped memory for pvt_attention.1']
    #allocation5 [shape = 'u8[196608]{0}', space=vmem, size = 0x30000, scoped, tag = 'input window, operand 1, single buffered']
    #allocation6 [shape = 's32[1]{0}', space=sflag, size = 0x4, scoped, tag = 'scoped memory for pvt_attention.1']
    #allocation7 [shape = 'u8[65536]{0}', space=vmem, size = 0x10000, scoped, tag = 'input window, operand 2, single buffered']
    #allocation8 [shape = 'u8[65536]{0}', space=vmem, size = 0x10000, scoped, tag = 'output window, operand 0']
    %9 = vsyncpa [#allocation3], 0
    %s10 = scalar_lea.sflag [#allocation3], 1
    %11 = vsyncpa %s10, 0
    %12 = vsyncpa [#allocation6], 0
    %13 = vsyncpa [#allocation4], 0
    %s14 = scalar_lea.sflag [#allocation4], 1
    %15 = vsyncpa %s14, 0
    loop: start=0, step=1, limit=4
    $region2: #{pvt_attention.1} parent=1 // loop_pre_header
      _
    $region3: #{pvt_attention.1} parent=1 // loop_header
      %s17 = sphi 0, %s21
      %p18 = scmp.ge.s32.totalorder %s17, 4
      %s27 = sphi 0, %s29
      %s30 = sphi 0, %s27
      %s31 = sphi 0, %s30
      %s47 = sphi 0, %s31
      %s51 = sphi 0, %s51
      %s53 = sphi 0, %s51
      %s54 = sphi 0, %s53
      %s68 = sphi 0, %s54
      %s72 = sphi 0, %s72
      %s74 = sphi 0, %s72
      %s75 = sphi 0, %s74
      %s89 = sphi 0, %s75
      %s93 = sphi 0, %s93
      %s95 = sphi 0, %s93
      %s96 = sphi 0, %s95
      %s110 = sphi 0, %s96
      %s116 = sphi 0, %s118
      %s119 = sphi 0, %s116
      %s120 = sphi 0, %s119
      %s136 = sphi 0, %s120
    $region4: #{pvt_attention.1} parent=1 // loop_header_branch
      %20 = sbr.rel (%p18) target = $region8
    $region5: #{pvt_attention.1} parent=1 // loop_body
      %s22 = ssub.s32 %s17, 1
      %s23 = ssub.s32 %s17, 2
      %s24 = sadd.s32 %s17, 1
      %s25 = ssub.s32 %s17, %s24
      %p26 = scmp.eq.s32.totalorder %s25, 0
      %s28 = sadd.s32 %s27, 1
      %s29 = scalar_select %p26, %s27, %s28
      %p32 = pneg %p26
      %p33 = scmp.eq.s32.totalorder %s17, 1
      %p34 = por %p32, %p33
      %p35 = scmp.ne.s32.totalorder %s27, %s30
      %p36 = scmp.eq.s32.totalorder %s17, 0
      %p37 = por %p35, %p36
      %p38 = scmp.ne.s32.totalorder %s27, %s30
      %p39 = scmp.eq.s32.totalorder %s22, 1
      %p40 = por %p38, %p39
      %p41 = scmp.ne.s32.totalorder %s30, %s31
      %p42 = scmp.eq.s32.totalorder %s22, 0
      %p43 = por %p41, %p42
      %p44 = scmp.ne.s32.totalorder %s30, %s31
      %p45 = scmp.eq.s32.totalorder %s23, 1
      %p46 = por %p44, %p45
      %p48 = scmp.ne.s32.totalorder %s31, %s47
      %p49 = scmp.eq.s32.totalorder %s23, 0
      %p50 = por %p48, %p49
      %s52 = sadd.s32 %s51, 1
      %p55 = scmp.eq.s32.totalorder %s17, 1
      %p56 = scmp.ne.s32.totalorder %s51, %s53
      %p57 = scmp.eq.s32.totalorder %s17, 0
      %p58 = por %p56, %p57
      %p59 = scmp.ne.s32.totalorder %s51, %s53
      %p60 = scmp.eq.s32.totalorder %s22, 1
      %p61 = por %p59, %p60
      %p62 = scmp.ne.s32.totalorder %s53, %s54
      %p63 = scmp.eq.s32.totalorder %s22, 0
      %p64 = por %p62, %p63
      %p65 = scmp.ne.s32.totalorder %s53, %s54
      %p66 = scmp.eq.s32.totalorder %s23, 1
      %p67 = por %p65, %p66
      %p69 = scmp.ne.s32.totalorder %s54, %s68
      %p70 = scmp.eq.s32.totalorder %s23, 0
      %p71 = por %p69, %p70
      %s73 = sadd.s32 %s72, 1
      %p76 = scmp.eq.s32.totalorder %s17, 1
      %p77 = scmp.ne.s32.totalorder %s72, %s74
      %p78 = scmp.eq.s32.totalorder %s17, 0
      %p79 = por %p77, %p78
      %p80 = scmp.ne.s32.totalorder %s72, %s74
      %p81 = scmp.eq.s32.totalorder %s22, 1
      %p82 = por %p80, %p81
      %p83 = scmp.ne.s32.totalorder %s74, %s75
      %p84 = scmp.eq.s32.totalorder %s22, 0
      %p85 = por %p83, %p84
      %p86 = scmp.ne.s32.totalorder %s74, %s75
      %p87 = scmp.eq.s32.totalorder %s23, 1
      %p88 = por %p86, %p87
      %p90 = scmp.ne.s32.totalorder %s75, %s89
      %p91 = scmp.eq.s32.totalorder %s23, 0
      %p92 = por %p90, %p91
      %s94 = sadd.s32 %s93, 1
      %p97 = scmp.eq.s32.totalorder %s17, 1
      %p98 = scmp.ne.s32.totalorder %s93, %s95
      %p99 = scmp.eq.s32.totalorder %s17, 0
      %p100 = por %p98, %p99
      %p101 = scmp.ne.s32.totalorder %s93, %s95
      %p102 = scmp.eq.s32.totalorder %s22, 1
      %p103 = por %p101, %p102
      %p104 = scmp.ne.s32.totalorder %s95, %s96
      %p105 = scmp.eq.s32.totalorder %s22, 0
      %p106 = por %p104, %p105
      %p107 = scmp.ne.s32.totalorder %s95, %s96
      %p108 = scmp.eq.s32.totalorder %s23, 1
      %p109 = por %p107, %p108
      %p111 = scmp.ne.s32.totalorder %s96, %s110
      %p112 = scmp.eq.s32.totalorder %s23, 0
      %p113 = por %p111, %p112
      %s114 = ssub.s32 %s17, %s24
      %p115 = scmp.eq.s32.totalorder %s114, 0
      %s117 = sadd.s32 %s116, 1
      %s118 = scalar_select %p115, %s116, %s117
      %p121 = pneg %p115
      %p122 = scmp.eq.s32.totalorder %s17, 1
      %p123 = por %p121, %p122
      %p124 = scmp.ne.s32.totalorder %s116, %s119
      %p125 = scmp.eq.s32.totalorder %s17, 0
      %p126 = por %p124, %p125
      %p127 = scmp.ne.s32.totalorder %s116, %s119
      %p128 = scmp.eq.s32.totalorder %s22, 1
      %p129 = por %p127, %p128
      %p130 = scmp.ne.s32.totalorder %s119, %s120
      %p131 = scmp.eq.s32.totalorder %s22, 0
      %p132 = por %p130, %p131
      %p133 = scmp.ne.s32.totalorder %s119, %s120
      %p134 = scmp.eq.s32.totalorder %s23, 1
      %p135 = por %p133, %p134
      %p137 = scmp.ne.s32.totalorder %s120, %s136
      %p138 = scmp.eq.s32.totalorder %s23, 0
      %p139 = por %p137, %p138
      %p140 = scmp.le.s32.totalorder 1, %s17
      %p141 = scmp.lt.s32.totalorder %s17, 3
      %p142 = pnand %p140, %p141
      %p143 = pneg %p142
      // Predicated region
      $region9: #{pvt_attention.1} parent=5 // pred_check
        _
      $region10: #{pvt_attention.1} parent=5 // pred_check_branch
        %145 = sbr.rel (%p142) target = $region12
      $region11: #{pvt_attention.1} parent=5 // pred_region
        %s146 = ssub.s32 %s17, 1
        // Predicated region
        $region13: #{pvt_attention.1} parent=11 // pred_check
          %p147 = pneg %p64
        $region14: #{pvt_attention.1} parent=11 // pred_check_branch
          %149 = sbr.rel (%p147) target = $region16
        $region15: #{pvt_attention.1} parent=11 // pred_region
          %s151 = ssub.s32 6144, 6144
          %152 = vsyncadd [#allocation6], %s151
          %s153 = sshll.u32 [#allocation5], 4
          %s154 = int_to_ptr.vmem [resolvable:$true] %s153
          %159 = dma.hbm_to_vmem [thread:$0]  %s1, 6144, %s154, [#allocation6], 384, 384, 24
        $region16: #{pvt_attention.1} parent=11 // pred_fallthru
          _
        // Predicated region
        $region17: #{pvt_attention.1} parent=11 // pred_check
          %p160 = pneg %p85
        $region18: #{pvt_attention.1} parent=11 // pred_check_branch
          %162 = sbr.rel (%p160) target = $region20
        $region19: #{pvt_attention.1} parent=11 // pred_region
          %s164 = ssub.s32 2048, 2048
          %165 = vsyncadd [#allocation6], %s164
          %s166 = sshll.u32 [#allocation7], 4
          %s167 = int_to_ptr.vmem [resolvable:$true] %s166
          %172 = dma.hbm_to_vmem [thread:$0]  %s2, 2048, %s167, [#allocation6], 128, 128, 8
        $region20: #{pvt_attention.1} parent=11 // pred_fallthru
          _
        // Predicated region
        $region21: #{pvt_attention.1} parent=11 // pred_check
          %p173 = pneg %p106
        $region22: #{pvt_attention.1} parent=11 // pred_check_branch
          %175 = sbr.rel (%p173) target = $region24
        $region23: #{pvt_attention.1} parent=11 // pred_region
          _
        $region24: #{pvt_attention.1} parent=11 // pred_fallthru
          _
      $region12: #{pvt_attention.1} parent=5 // pred_fallthru
        _
      %p176 = scmp.lt.s32.totalorder %s17, 2
      // Predicated region
      $region25: #{pvt_attention.1} parent=5 // pred_check
        %p177 = pneg %p176
      $region26: #{pvt_attention.1} parent=5 // pred_check_branch
        %179 = sbr.rel (%p177) target = $region28
      $region27: #{pvt_attention.1} parent=5 // pred_region
        // Predicated region
        $region29: #{pvt_attention.1} parent=27 // pred_check
          %p180 = pneg %p37
        $region30: #{pvt_attention.1} parent=27 // pred_check_branch
          %182 = sbr.rel (%p180) target = $region32
        $region31: #{pvt_attention.1} parent=27 // pred_region
          %s183 = sand.u32 %s27, 1
          %s184 = scalar_lea.sflag [#allocation3], %s183
          %s185 = sand.u32 %s27, 1
          %s186 = smul.addr %s185, 64
          %s187 = scalar_lea.vmem [#allocation2], %s186
          %s189 = ssub.s32 1024, 1024
          %190 = vsyncadd %s184, %s189
          %s191 = smul.addr %s17, 8
          %s192 = smul.addr %s191, 128
          %s193 = scalar_lea.hbm %s0, %s192
          %s194 = sshll.u32 %s187, 4
          %s195 = int_to_ptr.vmem [resolvable:$true] %s194
          %200 = dma.hbm_to_vmem [thread:$0]  %s193, 1024, %s195, %s184, 128, 128, 8
        $region32: #{pvt_attention.1} parent=27 // pred_fallthru
          _
      $region28: #{pvt_attention.1} parent=5 // pred_fallthru
        _
      %p201 = scmp.le.s32.totalorder 1, %s17
      %p202 = scmp.lt.s32.totalorder %s17, 3
      %p203 = pnand %p201, %p202
      %p204 = pneg %p203
      // Predicated region
      $region33: #{pvt_attention.1} parent=5 // pred_check
        _
      $region34: #{pvt_attention.1} parent=5 // pred_check_branch
        %206 = sbr.rel (%p203) target = $region36
      $region35: #{pvt_attention.1} parent=5 // pred_region
        %s207 = ssub.s32 %s17, 1
        %s208 = sand.u32 %s30, 1
        %s209 = scalar_lea.sflag [#allocation3], %s208
        %s210 = sand.u32 %s30, 1
        %s211 = smul.addr %s210, 64
        %s212 = scalar_lea.vmem [#allocation2], %s211
        // Predicated region
        $region37: #{pvt_attention.1} parent=35 // pred_check
          %p213 = pneg %p43
        $region38: #{pvt_attention.1} parent=35 // pred_check_branch
          %215 = sbr.rel (%p213) target = $region40
        $region39: #{pvt_attention.1} parent=35 // pred_region
          %216 = dma.done %s209, 1024
        $region40: #{pvt_attention.1} parent=35 // pred_fallthru
          _
        // Predicated region
        $region41: #{pvt_attention.1} parent=35 // pred_check
          %p217 = pneg %p64
        $region42: #{pvt_attention.1} parent=35 // pred_check_branch
          %219 = sbr.rel (%p217) target = $region44
        $region43: #{pvt_attention.1} parent=35 // pred_region
          %220 = dma.done [#allocation6], 6144
        $region44: #{pvt_attention.1} parent=35 // pred_fallthru
          _
        // Predicated region
        $region45: #{pvt_attention.1} parent=35 // pred_check
          %p221 = pneg %p85
        $region46: #{pvt_attention.1} parent=35 // pred_check_branch
          %223 = sbr.rel (%p221) target = $region48
        $region47: #{pvt_attention.1} parent=35 // pred_region
          %224 = dma.done [#allocation6], 2048
        $region48: #{pvt_attention.1} parent=35 // pred_fallthru
          _
        %s225 = sand.u32 %s30, 1
        %s226 = scalar_lea.sflag [#allocation3], %s225
        %s227 = sand.u32 %s30, 1
        %s228 = smul.addr %s227, 64
        %s229 = scalar_lea.vmem [#allocation2], %s228
        %p230 = pneg %p43
        %p231 = pneg %p40
        %p232 = pneg %p64
        %p233 = pneg %p61
        %p234 = pneg %p85
        %p235 = pneg %p82
        %p236 = pneg %p106
        %p237 = pneg %p103
        %p238 = pneg %p132
        %p239 = pneg %p129
        %s240 = sand.u32 %s119, 1
        %s241 = scalar_lea.sflag [#allocation4], %s240
        %s242 = sand.u32 %s119, 1
        %s243 = smul.addr %s242, 64
        %s244 = scalar_lea.vmem [#allocation8], %s243
        %v245 = vld [vmem:[%s212] sm:$0xff]
        %v246 = vld [vmem:[%s212 + $0x8] sm:$0xff]
        %v247 = vld [vmem:[%s212 + $0x10] sm:$0xff]
        %v248 = vld [vmem:[%s212 + $0x18] sm:$0xff]
        %v249 = vld [vmem:[%s212 + $0x20] sm:$0xff]
        %v250 = vld [vmem:[%s212 + $0x28] sm:$0xff]
        %v251 = vld [vmem:[%s212 + $0x30] sm:$0xff]
        %v252 = vld [vmem:[%s212 + $0x38] sm:$0xff]
        %v253 = vld [vmem:[#allocation5] sm:$0xff]
        %v254 = vld [vmem:[#allocation5 + $0x8] sm:$0xff]
        %v255 = vld [vmem:[#allocation5 + $0x10] sm:$0xff]
        %v256 = vld [vmem:[#allocation5 + $0x18] sm:$0xff]
        %v257 = vld [vmem:[#allocation5 + $0x20] sm:$0xff]
        %v258 = vld [vmem:[#allocation5 + $0x28] sm:$0xff]
        %v259 = vld [vmem:[#allocation5 + $0x30] sm:$0xff]
        %v260 = vld [vmem:[#allocation5 + $0x38] sm:$0xff]
        %v261 = vld [vmem:[#allocation5 + $0x40] sm:$0xff]
        %v262 = vld [vmem:[#allocation5 + $0x48] sm:$0xff]
        %v263 = vld [vmem:[#allocation5 + $0x50] sm:$0xff]
        %v264 = vld [vmem:[#allocation5 + $0x58] sm:$0xff]
        %v265 = vld [vmem:[#allocation5 + $0x60] sm:$0xff]
        %v266 = vld [vmem:[#allocation5 + $0x68] sm:$0xff]
        %v267 = vld [vmem:[#allocation5 + $0x70] sm:$0xff]
        %v268 = vld [vmem:[#allocation5 + $0x78] sm:$0xff]
        %v269 = vld [vmem:[#allocation5 + $0x80] sm:$0xff]
        %v270 = vld [vmem:[#allocation5 + $0x88] sm:$0xff]
        %v271 = vld [vmem:[#allocation5 + $0x90] sm:$0xff]
        %v272 = vld [vmem:[#allocation5 + $0x98] sm:$0xff]
        %v273 = vld [vmem:[#allocation5 + $0xa0] sm:$0xff]
        %v274 = vld [vmem:[#allocation5 + $0xa8] sm:$0xff]
        %v275 = vld [vmem:[#allocation5 + $0xb0] sm:$0xff]
        %v276 = vld [vmem:[#allocation5 + $0xb8] sm:$0xff]
        %v277 = vld [vmem:[#allocation5 + $0xc0] sm:$0xff]
        %v278 = vld [vmem:[#allocation5 + $0xc8] sm:$0xff]
        %v279 = vld [vmem:[#allocation5 + $0xd0] sm:$0xff]
        %v280 = vld [vmem:[#allocation5 + $0xd8] sm:$0xff]
        %v281 = vld [vmem:[#allocation5 + $0xe0] sm:$0xff]
        %v282 = vld [vmem:[#allocation5 + $0xe8] sm:$0xff]
        %v283 = vld [vmem:[#allocation5 + $0xf0] sm:$0xff]
        %v284 = vld [vmem:[#allocation5 + $0xf8] sm:$0xff]
        %v285 = vld [vmem:[#allocation5 + $0x100] sm:$0xff]
        %v286 = vld [vmem:[#allocation5 + $0x108] sm:$0xff]
        %v287 = vld [vmem:[#allocation5 + $0x110] sm:$0xff]
        %v288 = vld [vmem:[#allocation5 + $0x118] sm:$0xff]
        %v289 = vld [vmem:[#allocation5 + $0x120] sm:$0xff]
        %v290 = vld [vmem:[#allocation5 + $0x128] sm:$0xff]
        %v291 = vld [vmem:[#allocation5 + $0x130] sm:$0xff]
        %v292 = vld [vmem:[#allocation5 + $0x138] sm:$0xff]
        %v293 = vld [vmem:[#allocation5 + $0x140] sm:$0xff]
        %v294 = vld [vmem:[#allocation5 + $0x148] sm:$0xff]
        %v295 = vld [vmem:[#allocation5 + $0x150] sm:$0xff]
        %v296 = vld [vmem:[#allocation5 + $0x158] sm:$0xff]
        %v297 = vld [vmem:[#allocation5 + $0x160] sm:$0xff]
        %v298 = vld [vmem:[#allocation5 + $0x168] sm:$0xff]
        %v299 = vld [vmem:[#allocation5 + $0x170] sm:$0xff]
        %v300 = vld [vmem:[#allocation5 + $0x178] sm:$0xff]
        %301 = vmatprep.subr.mxu0 %v299
        %302 = vmatpush1.msra.mxu0 %v298
        %303 = vmatprep.subr.mxu0 %v296
        %304 = vmatpush1.msra.mxu0 %v295
        %305 = vmatprep.subr.mxu0 %v293
        %306 = vmatpush1.msra.mxu0 %v292
        %307 = vmatprep.subr.mxu0 %v290
        %308 = vmatpush1.msra.mxu0 %v289
        %309 = vmatprep.subr.mxu0 %v287
        %310 = vmatpush1.msra.mxu0 %v286
        %311 = vmatprep.subr.mxu0 %v284
        %312 = vmatpush1.msra.mxu0 %v283
        %313 = vmatprep.subr.mxu0 %v281
        %314 = vmatpush1.msra.mxu0 %v280
        %315 = vmatprep.subr.mxu0 %v278
        %316 = vmatpush1.msra.mxu0 %v277
        %317 = vmatprep.subr.mxu0 %v275
        %318 = vmatpush1.msra.mxu0 %v274
        %319 = vmatprep.subr.mxu0 %v272
        %320 = vmatpush1.msra.mxu0 %v271
        %321 = vmatprep.subr.mxu0 %v269
        %322 = vmatpush1.msra.mxu0 %v268
        %323 = vmatprep.subr.mxu0 %v266
        %324 = vmatpush1.msra.mxu0 %v265
        %325 = vmatprep.subr.mxu0 %v263
        %326 = vmatpush1.msra.mxu0 %v262
        %327 = vmatprep.subr.mxu0 %v260
        %328 = vmatpush1.msra.mxu0 %v259
        %329 = vmatprep.subr.mxu0 %v257
        %330 = vmatpush1.msra.mxu0 %v256
        %331 = vmatprep.subr.mxu0 %v254
        %332 = vmatpush1.msra.mxu0 %v253
        %333 = vmatprep.subr.mxu0 0.0
        %334 = vmatpush2.msra.mxu0 0.0
        %335 = vmatprep.subr.mxu0 0.0
        %336 = vmatpush2.msra.mxu0 0.0
        %337 = vmatprep.subr.mxu0 0.0
        %338 = vmatpush2.msra.mxu0 0.0
        %339 = vmatprep.subr.mxu0 0.0
        %340 = vmatpush2.msra.mxu0 0.0
        %341 = vmatprep.subr.mxu0 0.0
        %342 = vmatpush2.msra.mxu0 0.0
        %343 = vmatprep.subr.mxu0 0.0
        %344 = vmatpush2.msra.mxu0 0.0
        %345 = vmatprep.subr.mxu0 0.0
        %346 = vmatpush2.msra.mxu0 0.0
        %347 = vmatprep.subr.mxu0 0.0
        %348 = vmatpush2.msra.mxu0 0.0
        %349 = vmatprep.subr.mxu0 0.0
        %350 = vmatpush2.msra.mxu0 0.0
        %351 = vmatprep.subr.mxu0 0.0
        %352 = vmatpush2.msra.mxu0 0.0
        %353 = vmatprep.subr.mxu0 0.0
        %354 = vmatpush2.msra.mxu0 0.0
        %355 = vmatprep.subr.mxu0 0.0
        %356 = vmatpush2.msra.mxu0 0.0
        %357 = vmatprep.subr.mxu0 0.0
        %358 = vmatpush2.msra.mxu0 0.0
        %359 = vmatprep.subr.mxu0 0.0
        %360 = vmatpush2.msra.mxu0 0.0
        %361 = vmatprep.subr.mxu0 0.0
        %362 = vmatpush2.msra.mxu0 0.0
        %363 = vmatprep.subr.mxu0 0.0
        %364 = vmatpush2.msra.mxu0 0.0
        %365 = vmatprep.mubr.f32.mxu0 0.0
        %366 = vmatmul.mubr.f32.gmra.mxu0 %v245
        %v367 = vpop.f32.mrf.mxu0
        %v368 = vadd.f32 0.0, %v367
        %v369 = vpop.f32.mrf.mxu0
        %v370 = vadd.f32 0.0, %v369
        %371 = vmatprep.mubr.f32.mxu0 0.0
        %372 = vmatmul.mubr.f32.gmra.mxu0 %v246
        %v373 = vpop.f32.mrf.mxu0
        %v374 = vadd.f32 0.0, %v373
        %v375 = vpop.f32.mrf.mxu0
        %v376 = vadd.f32 0.0, %v375
        %377 = vmatprep.mubr.f32.mxu0 0.0
        %378 = vmatmul.mubr.f32.gmra.mxu0 %v247
        %v379 = vpop.f32.mrf.mxu0
        %v380 = vadd.f32 0.0, %v379
        %v381 = vpop.f32.mrf.mxu0
        %v382 = vadd.f32 0.0, %v381
        %383 = vmatprep.mubr.f32.mxu0 0.0
        %384 = vmatmul.mubr.f32.gmra.mxu0 %v248
        %v385 = vpop.f32.mrf.mxu0
        %v386 = vadd.f32 0.0, %v385
        %v387 = vpop.f32.mrf.mxu0
        %v388 = vadd.f32 0.0, %v387
        %389 = vmatprep.mubr.f32.mxu0 0.0
        %390 = vmatmul.mubr.f32.gmra.mxu0 %v249
        %v391 = vpop.f32.mrf.mxu0
        %v392 = vadd.f32 0.0, %v391
        %v393 = vpop.f32.mrf.mxu0
        %v394 = vadd.f32 0.0, %v393
        %395 = vmatprep.mubr.f32.mxu0 0.0
        %396 = vmatmul.mubr.f32.gmra.mxu0 %v250
        %v397 = vpop.f32.mrf.mxu0
        %v398 = vadd.f32 0.0, %v397
        %v399 = vpop.f32.mrf.mxu0
        %v400 = vadd.f32 0.0, %v399
        %401 = vmatprep.mubr.f32.mxu0 0.0
        %402 = vmatmul.mubr.f32.gmra.mxu0 %v251
        %v403 = vpop.f32.mrf.mxu0
        %v404 = vadd.f32 0.0, %v403
        %v405 = vpop.f32.mrf.mxu0
        %v406 = vadd.f32 0.0, %v405
        %407 = vmatprep.mubr.f32.mxu0 0.0
        %408 = vmatmul.mubr.f32.gmra.mxu0 %v252
        %v409 = vpop.f32.mrf.mxu0
        %v410 = vadd.f32 0.0, %v409
        %v411 = vpop.f32.mrf.mxu0
        %v412 = vadd.f32 0.0, %v411
        %413 = vdwg.mxu0
        %414 = vmatprep.subr.mxu0 0.0
        %415 = vmatpush1.msra.mxu0 %v300
        %416 = vmatprep.subr.mxu0 0.0
        %417 = vmatpush1.msra.mxu0 %v297
        %418 = vmatprep.subr.mxu0 0.0
        %419 = vmatpush1.msra.mxu0 %v294
        %420 = vmatprep.subr.mxu0 0.0
        %421 = vmatpush1.msra.mxu0 %v291
        %422 = vmatprep.subr.mxu0 0.0
        %423 = vmatpush1.msra.mxu0 %v288
        %424 = vmatprep.subr.mxu0 0.0
        %425 = vmatpush1.msra.mxu0 %v285
        %426 = vmatprep.subr.mxu0 0.0
        %427 = vmatpush1.msra.mxu0 %v282
        %428 = vmatprep.subr.mxu0 0.0
        %429 = vmatpush1.msra.mxu0 %v279
        %430 = vmatprep.subr.mxu0 0.0
        %431 = vmatpush1.msra.mxu0 %v276
        %432 = vmatprep.subr.mxu0 0.0
        %433 = vmatpush1.msra.mxu0 %v273
        %434 = vmatprep.subr.mxu0 0.0
        %435 = vmatpush1.msra.mxu0 %v270
        %436 = vmatprep.subr.mxu0 0.0
        %437 = vmatpush1.msra.mxu0 %v267
        %438 = vmatprep.subr.mxu0 0.0
        %439 = vmatpush1.msra.mxu0 %v264
        %440 = vmatprep.subr.mxu0 0.0
        %441 = vmatpush1.msra.mxu0 %v261
        %442 = vmatprep.subr.mxu0 0.0
        %443 = vmatpush1.msra.mxu0 %v258
        %444 = vmatprep.subr.mxu0 0.0
        %445 = vmatpush1.msra.mxu0 %v255
        %446 = vmatprep.subr.mxu0 0.0
        %447 = vmatpush2.msra.mxu0 0.0
        %448 = vmatprep.subr.mxu0 0.0
        %449 = vmatpush2.msra.mxu0 0.0
        %450 = vmatprep.subr.mxu0 0.0
        %451 = vmatpush2.msra.mxu0 0.0
        %452 = vmatprep.subr.mxu0 0.0
        %453 = vmatpush2.msra.mxu0 0.0
        %454 = vmatprep.subr.mxu0 0.0
        %455 = vmatpush2.msra.mxu0 0.0
        %456 = vmatprep.subr.mxu0 0.0
        %457 = vmatpush2.msra.mxu0 0.0
        %458 = vmatprep.subr.mxu0 0.0
        %459 = vmatpush2.msra.mxu0 0.0
        %460 = vmatprep.subr.mxu0 0.0
        %461 = vmatpush2.msra.mxu0 0.0
        %462 = vmatprep.subr.mxu0 0.0
        %463 = vmatpush2.msra.mxu0 0.0
        %464 = vmatprep.subr.mxu0 0.0
        %465 = vmatpush2.msra.mxu0 0.0
        %466 = vmatprep.subr.mxu0 0.0
        %467 = vmatpush2.msra.mxu0 0.0
        %468 = vmatprep.subr.mxu0 0.0
        %469 = vmatpush2.msra.mxu0 0.0
        %470 = vmatprep.subr.mxu0 0.0
        %471 = vmatpush2.msra.mxu0 0.0
        %472 = vmatprep.subr.mxu0 0.0
        %473 = vmatpush2.msra.mxu0 0.0
        %474 = vmatprep.subr.mxu0 0.0
        %475 = vmatpush2.msra.mxu0 0.0
        %476 = vmatprep.subr.mxu0 0.0
        %477 = vmatpush2.msra.mxu0 0.0
        %478 = vmatprep.mubr.f32.mxu0 0.0
        %479 = vmatmul.mubr.f32.gmra.mxu0 %v245
        %v480 = vpop.f32.mrf.mxu0
        %v481 = vadd.f32 0.0, %v480
        %v482 = vpop.f32.mrf.mxu0
        %483 = vmatprep.mubr.f32.mxu0 0.0
        %484 = vmatmul.mubr.f32.gmra.mxu0 %v246
        %v485 = vpop.f32.mrf.mxu0
        %v486 = vadd.f32 0.0, %v485
        %v487 = vpop.f32.mrf.mxu0
        %488 = vmatprep.mubr.f32.mxu0 0.0
        %489 = vmatmul.mubr.f32.gmra.mxu0 %v247
        %v490 = vpop.f32.mrf.mxu0
        %v491 = vadd.f32 0.0, %v490
        %v492 = vpop.f32.mrf.mxu0
        %493 = vmatprep.mubr.f32.mxu0 0.0
        %494 = vmatmul.mubr.f32.gmra.mxu0 %v248
        %v495 = vpop.f32.mrf.mxu0
        %v496 = vadd.f32 0.0, %v495
        %v497 = vpop.f32.mrf.mxu0
        %498 = vmatprep.mubr.f32.mxu0 0.0
        %499 = vmatmul.mubr.f32.gmra.mxu0 %v249
        %v500 = vpop.f32.mrf.mxu0
        %v501 = vadd.f32 0.0, %v500
        %v502 = vpop.f32.mrf.mxu0
        %503 = vmatprep.mubr.f32.mxu0 0.0
        %504 = vmatmul.mubr.f32.gmra.mxu0 %v250
        %v505 = vpop.f32.mrf.mxu0
        %v506 = vadd.f32 0.0, %v505
        %v507 = vpop.f32.mrf.mxu0
        %508 = vmatprep.mubr.f32.mxu0 0.0
        %509 = vmatmul.mubr.f32.gmra.mxu0 %v251
        %v510 = vpop.f32.mrf.mxu0
        %v511 = vadd.f32 0.0, %v510
        %v512 = vpop.f32.mrf.mxu0
        %513 = vmatprep.mubr.f32.mxu0 0.0
        %514 = vmatmul.mubr.f32.gmra.mxu0 %v252
        %v515 = vpop.f32.mrf.mxu0
        %v516 = vadd.f32 0.0, %v515
        %v517 = vpop.f32.mrf.mxu0
        %518 = vdwg.mxu0
        %vm519 = vcmask 130048
        %v521 = vsel %vm519, %v368, 0
        %v524 = vsel %vm519, %v374, 0
        %v527 = vsel %vm519, %v380, 0
        %v530 = vsel %vm519, %v386, 0
        %v533 = vsel %vm519, %v392, 0
        %v536 = vsel %vm519, %v398, 0
        %v539 = vsel %vm519, %v404, 0
        %v542 = vsel %vm519, %v410, 0
        %v545 = vsel %vm519, %v370, 0
        %v548 = vsel %vm519, %v376, 0
        %v551 = vsel %vm519, %v382, 0
        %v554 = vsel %vm519, %v388, 0
        %v557 = vsel %vm519, %v394, 0
        %v560 = vsel %vm519, %v400, 0
        %v563 = vsel %vm519, %v406, 0
        %v566 = vsel %vm519, %v412, 0
        %568 = vmatprep.subr.mxu0 0.0
        %569 = vmatpush1.xpose.msra.mxu0 0.0
        %570 = vmatprep.subr.mxu0 0.0
        %571 = vmatpush1.xpose.msra.mxu0 0.0
        %572 = vmatprep.subr.mxu0 0.0
        %573 = vmatpush1.xpose.msra.mxu0 0.0
        %574 = vmatprep.subr.mxu0 0.0
        %575 = vmatpush1.xpose.msra.mxu0 0.0
        %576 = vmatprep.subr.mxu0 0.0
        %577 = vmatpush1.xpose.msra.mxu0 0.0
        %578 = vmatprep.subr.mxu0 0.0
        %579 = vmatpush1.xpose.msra.mxu0 0.0
        %580 = vmatprep.subr.mxu0 0.0
        %581 = vmatpush1.xpose.msra.mxu0 0.0
        %582 = vmatprep.subr.mxu0 0.0
        %583 = vmatpush1.xpose.msra.mxu0 0.0
        %584 = vmatprep.subr.mxu0 0.0
        %585 = vmatpush1.xpose.msra.mxu0 %v566
        %586 = vmatprep.subr.mxu0 0.0
        %587 = vmatpush1.xpose.msra.mxu0 %v563
        %588 = vmatprep.subr.mxu0 0.0
        %589 = vmatpush1.xpose.msra.mxu0 %v560
        %590 = vmatprep.subr.mxu0 0.0
        %591 = vmatpush1.xpose.msra.mxu0 %v557
        %592 = vmatprep.subr.mxu0 0.0
        %593 = vmatpush1.xpose.msra.mxu0 %v554
        %594 = vmatprep.subr.mxu0 0.0
        %595 = vmatpush1.xpose.msra.mxu0 %v551
        %596 = vmatprep.subr.mxu0 0.0
        %597 = vmatpush1.xpose.msra.mxu0 %v548
        %598 = vmatprep.subr.mxu0 0.0
        %599 = vmatpush1.xpose.msra.mxu0 %v545
        %600 = vmatprep.subr.mxu0 0.0
        %601 = vmatpush2.xpose.msra.mxu0 0.0
        %602 = vmatprep.subr.mxu0 0.0
        %603 = vmatpush2.xpose.msra.mxu0 0.0
        %604 = vmatprep.subr.mxu0 0.0
        %605 = vmatpush2.xpose.msra.mxu0 0.0
        %606 = vmatprep.subr.mxu0 0.0
        %607 = vmatpush2.xpose.msra.mxu0 0.0
        %608 = vmatprep.subr.mxu0 0.0
        %609 = vmatpush2.xpose.msra.mxu0 0.0
        %610 = vmatprep.subr.mxu0 0.0
        %611 = vmatpush2.xpose.msra.mxu0 0.0
        %612 = vmatprep.subr.mxu0 0.0
        %613 = vmatpush2.xpose.msra.mxu0 0.0
        %614 = vmatprep.subr.mxu0 0.0
        %615 = vmatpush2.xpose.msra.mxu0 0.0
        %616 = vmatprep.subr.mxu0 0.0
        %617 = vmatpush2.xpose.msra.mxu0 0.0
        %618 = vmatprep.subr.mxu0 0.0
        %619 = vmatpush2.xpose.msra.mxu0 0.0
        %620 = vmatprep.subr.mxu0 0.0
        %621 = vmatpush2.xpose.msra.mxu0 0.0
        %622 = vmatprep.subr.mxu0 0.0
        %623 = vmatpush2.xpose.msra.mxu0 0.0
        %624 = vmatprep.subr.mxu0 0.0
        %625 = vmatpush2.xpose.msra.mxu0 0.0
        %626 = vmatprep.subr.mxu0 0.0
        %627 = vmatpush2.xpose.msra.mxu0 0.0
        %628 = vmatprep.subr.mxu0 0.0
        %629 = vmatpush2.xpose.msra.mxu0 0.0
        %630 = vmatprep.subr.mxu0 0.0
        %631 = vmatpush2.xpose.msra.mxu0 0.0
        %632 = vmatprep.mubr.f32.mxu0 0.0
        %633 = vmatmul.mubr.f32.gmra.mxu0 %v521
        %v634 = vpop.f32.mrf.mxu0
        %v635 = vadd.f32 0.0, %v634
        %v636 = vpop.f32.mrf.mxu0
        %637 = vmatprep.mubr.f32.mxu0 0.0
        %638 = vmatmul.mubr.f32.gmra.mxu0 %v524
        %v639 = vpop.f32.mrf.mxu0
        %v640 = vadd.f32 0.0, %v639
        %v641 = vpop.f32.mrf.mxu0
        %642 = vmatprep.mubr.f32.mxu0 0.0
        %643 = vmatmul.mubr.f32.gmra.mxu0 %v527
        %v644 = vpop.f32.mrf.mxu0
        %v645 = vadd.f32 0.0, %v644
        %v646 = vpop.f32.mrf.mxu0
        %647 = vmatprep.mubr.f32.mxu0 0.0
        %648 = vmatmul.mubr.f32.gmra.mxu0 %v530
        %v649 = vpop.f32.mrf.mxu0
        %v650 = vadd.f32 0.0, %v649
        %v651 = vpop.f32.mrf.mxu0
        %652 = vmatprep.mubr.f32.mxu0 0.0
        %653 = vmatmul.mubr.f32.gmra.mxu0 %v533
        %v654 = vpop.f32.mrf.mxu0
        %v655 = vadd.f32 0.0, %v654
        %v656 = vpop.f32.mrf.mxu0
        %657 = vmatprep.mubr.f32.mxu0 0.0
        %658 = vmatmul.mubr.f32.gmra.mxu0 %v536
        %v659 = vpop.f32.mrf.mxu0
        %v660 = vadd.f32 0.0, %v659
        %v661 = vpop.f32.mrf.mxu0
        %662 = vmatprep.mubr.f32.mxu0 0.0
        %663 = vmatmul.mubr.f32.gmra.mxu0 %v539
        %v664 = vpop.f32.mrf.mxu0
        %v665 = vadd.f32 0.0, %v664
        %v666 = vpop.f32.mrf.mxu0
        %667 = vmatprep.mubr.f32.mxu0 0.0
        %668 = vmatmul.mubr.f32.gmra.mxu0 %v542
        %v669 = vpop.f32.mrf.mxu0
        %v670 = vadd.f32 0.0, %v669
        %v671 = vpop.f32.mrf.mxu0
        %672 = vdwg.mxu0
        %vm673 = vcmask 523264
        %v674 = vsel %vm673, %v635, -inf
        %675 = vmax.xlane.f32.xlu0 %v674
        %v676 = vpop.xlane.xlu0 %675
        %v677 = vsel %vm673, %v640, -inf
        %678 = vmax.xlane.f32.xlu0 %v677
        %v679 = vpop.xlane.xlu0 %678
        %v680 = vsel %vm673, %v645, -inf
        %681 = vmax.xlane.f32.xlu0 %v680
        %v682 = vpop.xlane.xlu0 %681
        %v683 = vsel %vm673, %v650, -inf
        %684 = vmax.xlane.f32.xlu0 %v683
        %v685 = vpop.xlane.xlu0 %684
        %v686 = vsel %vm673, %v655, -inf
        %687 = vmax.xlane.f32.xlu0 %v686
        %v688 = vpop.xlane.xlu0 %687
        %v689 = vsel %vm673, %v660, -inf
        %690 = vmax.xlane.f32.xlu0 %v689
        %v691 = vpop.xlane.xlu0 %690
        %v692 = vsel %vm673, %v665, -inf
        %693 = vmax.xlane.f32.xlu0 %v692
        %v694 = vpop.xlane.xlu0 %693
        %v695 = vsel %vm673, %v670, -inf
        %696 = vmax.xlane.f32.xlu0 %v695
        %v697 = vpop.xlane.xlu0 %696
        %v698 = vsub.f32 %v635, %v676
        %v699 = vsub.f32 %v640, %v679
        %v700 = vsub.f32 %v645, %v682
        %v701 = vsub.f32 %v650, %v685
        %v702 = vsub.f32 %v655, %v688
        %v703 = vsub.f32 %v660, %v691
        %v704 = vsub.f32 %v665, %v694
        %v705 = vsub.f32 %v670, %v697
        %v706 = vmul.f32 %v698, 1.442695
        %v707 = vpow.pop %v706
        %v708 = vmul.f32 %v699, 1.442695
        %v709 = vpow.pop %v708
        %v710 = vmul.f32 %v700, 1.442695
        %v711 = vpow.pop %v710
        %v712 = vmul.f32 %v701, 1.442695
        %v713 = vpow.pop %v712
        %v714 = vmul.f32 %v702, 1.442695
        %v715 = vpow.pop %v714
        %v716 = vmul.f32 %v703, 1.442695
        %v717 = vpow.pop %v716
        %v718 = vmul.f32 %v704, 1.442695
        %v719 = vpow.pop %v718
        %v720 = vmul.f32 %v705, 1.442695
        %v721 = vpow.pop %v720
        %v722 = vsel %vm673, %v707, 0.0
        %723 = vadd.xlane.f32.xlu0 %v722
        %v724 = vpop.xlane.xlu0 %723
        %v725 = vsel %vm673, %v709, 0.0
        %726 = vadd.xlane.f32.xlu0 %v725
        %v727 = vpop.xlane.xlu0 %726
        %v728 = vsel %vm673, %v711, 0.0
        %729 = vadd.xlane.f32.xlu0 %v728
        %v730 = vpop.xlane.xlu0 %729
        %v731 = vsel %vm673, %v713, 0.0
        %732 = vadd.xlane.f32.xlu0 %v731
        %v733 = vpop.xlane.xlu0 %732
        %v734 = vsel %vm673, %v715, 0.0
        %735 = vadd.xlane.f32.xlu0 %v734
        %v736 = vpop.xlane.xlu0 %735
        %v737 = vsel %vm673, %v717, 0.0
        %738 = vadd.xlane.f32.xlu0 %v737
        %v739 = vpop.xlane.xlu0 %738
        %v740 = vsel %vm673, %v719, 0.0
        %741 = vadd.xlane.f32.xlu0 %v740
        %v742 = vpop.xlane.xlu0 %741
        %v743 = vsel %vm673, %v721, 0.0
        %744 = vadd.xlane.f32.xlu0 %v743
        %v745 = vpop.xlane.xlu0 %744
        %v747 = vsel %vm673, %v707, 0
        %v750 = vsel %vm673, %v709, 0
        %v753 = vsel %vm673, %v711, 0
        %v756 = vsel %vm673, %v713, 0
        %v759 = vsel %vm673, %v715, 0
        %v762 = vsel %vm673, %v717, 0
        %v765 = vsel %vm673, %v719, 0
        %v768 = vsel %vm673, %v721, 0
        %770 = vmatprep.subr.mxu0 0.0
        %771 = vmatpush1.msra.mxu0 0.0
        %772 = vmatprep.subr.mxu0 0.0
        %773 = vmatpush1.msra.mxu0 0.0
        %774 = vmatprep.subr.mxu0 0.0
        %775 = vmatpush1.msra.mxu0 0.0
        %776 = vmatprep.subr.mxu0 0.0
        %777 = vmatpush1.msra.mxu0 0.0
        %778 = vmatprep.subr.mxu0 0.0
        %779 = vmatpush1.msra.mxu0 0.0
        %780 = vmatprep.subr.mxu0 0.0
        %781 = vmatpush1.msra.mxu0 0.0
        %782 = vmatprep.subr.mxu0 0.0
        %783 = vmatpush1.msra.mxu0 0.0
        %784 = vmatprep.subr.mxu0 0.0
        %785 = vmatpush1.msra.mxu0 0.0
        %786 = vmatprep.subr.mxu0 0.0
        %787 = vmatpush1.msra.mxu0 %v516
        %788 = vmatprep.subr.mxu0 0.0
        %789 = vmatpush1.msra.mxu0 %v511
        %790 = vmatprep.subr.mxu0 0.0
        %791 = vmatpush1.msra.mxu0 %v506
        %792 = vmatprep.subr.mxu0 0.0
        %793 = vmatpush1.msra.mxu0 %v501
        %794 = vmatprep.subr.mxu0 0.0
        %795 = vmatpush1.msra.mxu0 %v496
        %796 = vmatprep.subr.mxu0 0.0
        %797 = vmatpush1.msra.mxu0 %v491
        %798 = vmatprep.subr.mxu0 0.0
        %799 = vmatpush1.msra.mxu0 %v486
        %800 = vmatprep.subr.mxu0 0.0
        %801 = vmatpush1.msra.mxu0 %v481
        %802 = vmatprep.subr.mxu0 0.0
        %803 = vmatpush2.msra.mxu0 0.0
        %804 = vmatprep.subr.mxu0 0.0
        %805 = vmatpush2.msra.mxu0 0.0
        %806 = vmatprep.subr.mxu0 0.0
        %807 = vmatpush2.msra.mxu0 0.0
        %808 = vmatprep.subr.mxu0 0.0
        %809 = vmatpush2.msra.mxu0 0.0
        %810 = vmatprep.subr.mxu0 0.0
        %811 = vmatpush2.msra.mxu0 0.0
        %812 = vmatprep.subr.mxu0 0.0
        %813 = vmatpush2.msra.mxu0 0.0
        %814 = vmatprep.subr.mxu0 0.0
        %815 = vmatpush2.msra.mxu0 0.0
        %816 = vmatprep.subr.mxu0 0.0
        %817 = vmatpush2.msra.mxu0 0.0
        %818 = vmatprep.subr.mxu0 0.0
        %819 = vmatpush2.msra.mxu0 0.0
        %820 = vmatprep.subr.mxu0 0.0
        %821 = vmatpush2.msra.mxu0 0.0
        %822 = vmatprep.subr.mxu0 0.0
        %823 = vmatpush2.msra.mxu0 0.0
        %824 = vmatprep.subr.mxu0 0.0
        %825 = vmatpush2.msra.mxu0 0.0
        %826 = vmatprep.subr.mxu0 0.0
        %827 = vmatpush2.msra.mxu0 0.0
        %828 = vmatprep.subr.mxu0 0.0
        %829 = vmatpush2.msra.mxu0 0.0
        %830 = vmatprep.subr.mxu0 0.0
        %831 = vmatpush2.msra.mxu0 0.0
        %832 = vmatprep.subr.mxu0 0.0
        %833 = vmatpush2.msra.mxu0 0.0
        %834 = vmatprep.mubr.f32.mxu0 0.0
        %835 = vmatmul.mubr.f32.gmra.mxu0 %v747
        %v836 = vpop.f32.mrf.mxu0
        %v837 = vadd.f32 0.0, %v836
        %v838 = vpop.f32.mrf.mxu0
        %839 = vmatprep.mubr.f32.mxu0 0.0
        %840 = vmatmul.mubr.f32.gmra.mxu0 %v750
        %v841 = vpop.f32.mrf.mxu0
        %v842 = vadd.f32 0.0, %v841
        %v843 = vpop.f32.mrf.mxu0
        %844 = vmatprep.mubr.f32.mxu0 0.0
        %845 = vmatmul.mubr.f32.gmra.mxu0 %v753
        %v846 = vpop.f32.mrf.mxu0
        %v847 = vadd.f32 0.0, %v846
        %v848 = vpop.f32.mrf.mxu0
        %849 = vmatprep.mubr.f32.mxu0 0.0
        %850 = vmatmul.mubr.f32.gmra.mxu0 %v756
        %v851 = vpop.f32.mrf.mxu0
        %v852 = vadd.f32 0.0, %v851
        %v853 = vpop.f32.mrf.mxu0
        %854 = vmatprep.mubr.f32.mxu0 0.0
        %855 = vmatmul.mubr.f32.gmra.mxu0 %v759
        %v856 = vpop.f32.mrf.mxu0
        %v857 = vadd.f32 0.0, %v856
        %v858 = vpop.f32.mrf.mxu0
        %859 = vmatprep.mubr.f32.mxu0 0.0
        %860 = vmatmul.mubr.f32.gmra.mxu0 %v762
        %v861 = vpop.f32.mrf.mxu0
        %v862 = vadd.f32 0.0, %v861
        %v863 = vpop.f32.mrf.mxu0
        %864 = vmatprep.mubr.f32.mxu0 0.0
        %865 = vmatmul.mubr.f32.gmra.mxu0 %v765
        %v866 = vpop.f32.mrf.mxu0
        %v867 = vadd.f32 0.0, %v866
        %v868 = vpop.f32.mrf.mxu0
        %869 = vmatprep.mubr.f32.mxu0 0.0
        %870 = vmatmul.mubr.f32.gmra.mxu0 %v768
        %v871 = vpop.f32.mrf.mxu0
        %v872 = vadd.f32 0.0, %v871
        %v873 = vpop.f32.mrf.mxu0
        %874 = vdwg.mxu0
        %v875 = vrcp.pop %v724
        %v876 = vrcp.pop %v727
        %v877 = vrcp.pop %v730
        %v878 = vrcp.pop %v733
        %v879 = vrcp.pop %v736
        %v880 = vrcp.pop %v739
        %v881 = vrcp.pop %v742
        %v882 = vrcp.pop %v745
        %v883 = vmul.f32 %v837, %v875
        %v884 = vmul.f32 %v842, %v876
        %v885 = vmul.f32 %v847, %v877
        %v886 = vmul.f32 %v852, %v878
        %v887 = vmul.f32 %v857, %v879
        %v888 = vmul.f32 %v862, %v880
        %v889 = vmul.f32 %v867, %v881
        %v890 = vmul.f32 %v872, %v882
        %891 = vrot.lane.b32.xlu0 %v368, 112
        %v892 = vpop.permute.xlu0 %891
        %893 = vrot.lane.b32.xlu0 %v374, 112
        %v894 = vpop.permute.xlu0 %893
        %895 = vrot.lane.b32.xlu0 %v380, 112
        %v896 = vpop.permute.xlu0 %895
        %897 = vrot.lane.b32.xlu0 %v386, 112
        %v898 = vpop.permute.xlu0 %897
        %899 = vrot.lane.b32.xlu0 %v392, 112
        %v900 = vpop.permute.xlu0 %899
        %901 = vrot.lane.b32.xlu0 %v398, 112
        %v902 = vpop.permute.xlu0 %901
        %903 = vrot.lane.b32.xlu0 %v404, 112
        %v904 = vpop.permute.xlu0 %903
        %905 = vrot.lane.b32.xlu0 %v410, 112
        %v906 = vpop.permute.xlu0 %905
        %907 = vrot.lane.b32.xlu0 %v370, 112
        %v908 = vpop.permute.xlu0 %907
        %909 = vrot.lane.b32.xlu0 %v376, 112
        %v910 = vpop.permute.xlu0 %909
        %911 = vrot.lane.b32.xlu0 %v382, 112
        %v912 = vpop.permute.xlu0 %911
        %913 = vrot.lane.b32.xlu0 %v388, 112
        %v914 = vpop.permute.xlu0 %913
        %915 = vrot.lane.b32.xlu0 %v394, 112
        %v916 = vpop.permute.xlu0 %915
        %917 = vrot.lane.b32.xlu0 %v400, 112
        %v918 = vpop.permute.xlu0 %917
        %919 = vrot.lane.b32.xlu0 %v406, 112
        %v920 = vpop.permute.xlu0 %919
        %921 = vrot.lane.b32.xlu0 %v412, 112
        %v922 = vpop.permute.xlu0 %921
        %v923 = vsel %vm519, %v892, 0
        %v925 = vsel %vm519, %v894, 0
        %v927 = vsel %vm519, %v896, 0
        %v929 = vsel %vm519, %v898, 0
        %v931 = vsel %vm519, %v900, 0
        %v933 = vsel %vm519, %v902, 0
        %v935 = vsel %vm519, %v904, 0
        %v937 = vsel %vm519, %v906, 0
        %v939 = vsel %vm519, %v908, 0
        %v941 = vsel %vm519, %v910, 0
        %v943 = vsel %vm519, %v912, 0
        %v945 = vsel %vm519, %v914, 0
        %v947 = vsel %vm519, %v916, 0
        %v949 = vsel %vm519, %v918, 0
        %v951 = vsel %vm519, %v920, 0
        %v953 = vsel %vm519, %v922, 0
        %955 = vmatprep.subr.mxu0 0.0
        %956 = vmatpush1.xpose.msra.mxu0 0.0
        %957 = vmatprep.subr.mxu0 0.0
        %958 = vmatpush1.xpose.msra.mxu0 0.0
        %959 = vmatprep.subr.mxu0 0.0
        %960 = vmatpush1.xpose.msra.mxu0 0.0
        %961 = vmatprep.subr.mxu0 0.0
        %962 = vmatpush1.xpose.msra.mxu0 0.0
        %963 = vmatprep.subr.mxu0 0.0
        %964 = vmatpush1.xpose.msra.mxu0 0.0
        %965 = vmatprep.subr.mxu0 0.0
        %966 = vmatpush1.xpose.msra.mxu0 0.0
        %967 = vmatprep.subr.mxu0 0.0
        %968 = vmatpush1.xpose.msra.mxu0 0.0
        %969 = vmatprep.subr.mxu0 0.0
        %970 = vmatpush1.xpose.msra.mxu0 0.0
        %971 = vmatprep.subr.mxu0 0.0
        %972 = vmatpush1.xpose.msra.mxu0 %v953
        %973 = vmatprep.subr.mxu0 0.0
        %974 = vmatpush1.xpose.msra.mxu0 %v951
        %975 = vmatprep.subr.mxu0 0.0
        %976 = vmatpush1.xpose.msra.mxu0 %v949
        %977 = vmatprep.subr.mxu0 0.0
        %978 = vmatpush1.xpose.msra.mxu0 %v947
        %979 = vmatprep.subr.mxu0 0.0
        %980 = vmatpush1.xpose.msra.mxu0 %v945
        %981 = vmatprep.subr.mxu0 0.0
        %982 = vmatpush1.xpose.msra.mxu0 %v943
        %983 = vmatprep.subr.mxu0 0.0
        %984 = vmatpush1.xpose.msra.mxu0 %v941
        %985 = vmatprep.subr.mxu0 0.0
        %986 = vmatpush1.xpose.msra.mxu0 %v939
        %987 = vmatprep.subr.mxu0 0.0
        %988 = vmatpush2.xpose.msra.mxu0 0.0
        %989 = vmatprep.subr.mxu0 0.0
        %990 = vmatpush2.xpose.msra.mxu0 0.0
        %991 = vmatprep.subr.mxu0 0.0
        %992 = vmatpush2.xpose.msra.mxu0 0.0
        %993 = vmatprep.subr.mxu0 0.0
        %994 = vmatpush2.xpose.msra.mxu0 0.0
        %995 = vmatprep.subr.mxu0 0.0
        %996 = vmatpush2.xpose.msra.mxu0 0.0
        %997 = vmatprep.subr.mxu0 0.0
        %998 = vmatpush2.xpose.msra.mxu0 0.0
        %999 = vmatprep.subr.mxu0 0.0
        %1000 = vmatpush2.xpose.msra.mxu0 0.0
        %1001 = vmatprep.subr.mxu0 0.0
        %1002 = vmatpush2.xpose.msra.mxu0 0.0
        %1003 = vmatprep.subr.mxu0 0.0
        %1004 = vmatpush2.xpose.msra.mxu0 0.0
        %1005 = vmatprep.subr.mxu0 0.0
        %1006 = vmatpush2.xpose.msra.mxu0 0.0
        %1007 = vmatprep.subr.mxu0 0.0
        %1008 = vmatpush2.xpose.msra.mxu0 0.0
        %1009 = vmatprep.subr.mxu0 0.0
        %1010 = vmatpush2.xpose.msra.mxu0 0.0
        %1011 = vmatprep.subr.mxu0 0.0
        %1012 = vmatpush2.xpose.msra.mxu0 0.0
        %1013 = vmatprep.subr.mxu0 0.0
        %1014 = vmatpush2.xpose.msra.mxu0 0.0
        %1015 = vmatprep.subr.mxu0 0.0
        %1016 = vmatpush2.xpose.msra.mxu0 0.0
        %1017 = vmatprep.subr.mxu0 0.0
        %1018 = vmatpush2.xpose.msra.mxu0 0.0
        %1019 = vmatprep.mubr.f32.mxu0 0.0
        %1020 = vmatmul.mubr.f32.gmra.mxu0 %v923
        %v1021 = vpop.f32.mrf.mxu0
        %v1022 = vadd.f32 0.0, %v1021
        %v1023 = vpop.f32.mrf.mxu0
        %1024 = vmatprep.mubr.f32.mxu0 0.0
        %1025 = vmatmul.mubr.f32.gmra.mxu0 %v925
        %v1026 = vpop.f32.mrf.mxu0
        %v1027 = vadd.f32 0.0, %v1026
        %v1028 = vpop.f32.mrf.mxu0
        %1029 = vmatprep.mubr.f32.mxu0 0.0
        %1030 = vmatmul.mubr.f32.gmra.mxu0 %v927
        %v1031 = vpop.f32.mrf.mxu0
        %v1032 = vadd.f32 0.0, %v1031
        %v1033 = vpop.f32.mrf.mxu0
        %1034 = vmatprep.mubr.f32.mxu0 0.0
        %1035 = vmatmul.mubr.f32.gmra.mxu0 %v929
        %v1036 = vpop.f32.mrf.mxu0
        %v1037 = vadd.f32 0.0, %v1036
        %v1038 = vpop.f32.mrf.mxu0
        %1039 = vmatprep.mubr.f32.mxu0 0.0
        %1040 = vmatmul.mubr.f32.gmra.mxu0 %v931
        %v1041 = vpop.f32.mrf.mxu0
        %v1042 = vadd.f32 0.0, %v1041
        %v1043 = vpop.f32.mrf.mxu0
        %1044 = vmatprep.mubr.f32.mxu0 0.0
        %1045 = vmatmul.mubr.f32.gmra.mxu0 %v933
        %v1046 = vpop.f32.mrf.mxu0
        %v1047 = vadd.f32 0.0, %v1046
        %v1048 = vpop.f32.mrf.mxu0
        %1049 = vmatprep.mubr.f32.mxu0 0.0
        %1050 = vmatmul.mubr.f32.gmra.mxu0 %v935
        %v1051 = vpop.f32.mrf.mxu0
        %v1052 = vadd.f32 0.0, %v1051
        %v1053 = vpop.f32.mrf.mxu0
        %1054 = vmatprep.mubr.f32.mxu0 0.0
        %1055 = vmatmul.mubr.f32.gmra.mxu0 %v937
        %v1056 = vpop.f32.mrf.mxu0
        %v1057 = vadd.f32 0.0, %v1056
        %v1058 = vpop.f32.mrf.mxu0
        %1059 = vdwg.mxu0
        %v1060 = vsel %vm673, %v1022, -inf
        %1061 = vmax.xlane.f32.xlu0 %v1060
        %v1062 = vpop.xlane.xlu0 %1061
        %v1063 = vsel %vm673, %v1027, -inf
        %1064 = vmax.xlane.f32.xlu0 %v1063
        %v1065 = vpop.xlane.xlu0 %1064
        %v1066 = vsel %vm673, %v1032, -inf
        %1067 = vmax.xlane.f32.xlu0 %v1066
        %v1068 = vpop.xlane.xlu0 %1067
        %v1069 = vsel %vm673, %v1037, -inf
        %1070 = vmax.xlane.f32.xlu0 %v1069
        %v1071 = vpop.xlane.xlu0 %1070
        %v1072 = vsel %vm673, %v1042, -inf
        %1073 = vmax.xlane.f32.xlu0 %v1072
        %v1074 = vpop.xlane.xlu0 %1073
        %v1075 = vsel %vm673, %v1047, -inf
        %1076 = vmax.xlane.f32.xlu0 %v1075
        %v1077 = vpop.xlane.xlu0 %1076
        %v1078 = vsel %vm673, %v1052, -inf
        %1079 = vmax.xlane.f32.xlu0 %v1078
        %v1080 = vpop.xlane.xlu0 %1079
        %v1081 = vsel %vm673, %v1057, -inf
        %1082 = vmax.xlane.f32.xlu0 %v1081
        %v1083 = vpop.xlane.xlu0 %1082
        %v1084 = vsub.f32 %v1022, %v1062
        %v1085 = vsub.f32 %v1027, %v1065
        %v1086 = vsub.f32 %v1032, %v1068
        %v1087 = vsub.f32 %v1037, %v1071
        %v1088 = vsub.f32 %v1042, %v1074
        %v1089 = vsub.f32 %v1047, %v1077
        %v1090 = vsub.f32 %v1052, %v1080
        %v1091 = vsub.f32 %v1057, %v1083
        %v1092 = vmul.f32 %v1084, 1.442695
        %v1093 = vpow.pop %v1092
        %v1094 = vmul.f32 %v1085, 1.442695
        %v1095 = vpow.pop %v1094
        %v1096 = vmul.f32 %v1086, 1.442695
        %v1097 = vpow.pop %v1096
        %v1098 = vmul.f32 %v1087, 1.442695
        %v1099 = vpow.pop %v1098
        %v1100 = vmul.f32 %v1088, 1.442695
        %v1101 = vpow.pop %v1100
        %v1102 = vmul.f32 %v1089, 1.442695
        %v1103 = vpow.pop %v1102
        %v1104 = vmul.f32 %v1090, 1.442695
        %v1105 = vpow.pop %v1104
        %v1106 = vmul.f32 %v1091, 1.442695
        %v1107 = vpow.pop %v1106
        %v1108 = vsel %vm673, %v1093, 0.0
        %1109 = vadd.xlane.f32.xlu0 %v1108
        %v1110 = vpop.xlane.xlu0 %1109
        %v1111 = vsel %vm673, %v1095, 0.0
        %1112 = vadd.xlane.f32.xlu0 %v1111
        %v1113 = vpop.xlane.xlu0 %1112
        %v1114 = vsel %vm673, %v1097, 0.0
        %1115 = vadd.xlane.f32.xlu0 %v1114
        %v1116 = vpop.xlane.xlu0 %1115
        %v1117 = vsel %vm673, %v1099, 0.0
        %1118 = vadd.xlane.f32.xlu0 %v1117
        %v1119 = vpop.xlane.xlu0 %1118
        %v1120 = vsel %vm673, %v1101, 0.0
        %1121 = vadd.xlane.f32.xlu0 %v1120
        %v1122 = vpop.xlane.xlu0 %1121
        %v1123 = vsel %vm673, %v1103, 0.0
        %1124 = vadd.xlane.f32.xlu0 %v1123
        %v1125 = vpop.xlane.xlu0 %1124
        %v1126 = vsel %vm673, %v1105, 0.0
        %1127 = vadd.xlane.f32.xlu0 %v1126
        %v1128 = vpop.xlane.xlu0 %1127
        %v1129 = vsel %vm673, %v1107, 0.0
        %1130 = vadd.xlane.f32.xlu0 %v1129
        %v1131 = vpop.xlane.xlu0 %1130
        %1140 = vrot.lane.b32.xlu0 %v481, 112
        %v1141 = vpop.permute.xlu0 %1140
        %1142 = vrot.lane.b32.xlu0 %v486, 112
        %v1143 = vpop.permute.xlu0 %1142
        %1144 = vrot.lane.b32.xlu0 %v491, 112
        %v1145 = vpop.permute.xlu0 %1144
        %1146 = vrot.lane.b32.xlu0 %v496, 112
        %v1147 = vpop.permute.xlu0 %1146
        %1148 = vrot.lane.b32.xlu0 %v501, 112
        %v1149 = vpop.permute.xlu0 %1148
        %1150 = vrot.lane.b32.xlu0 %v506, 112
        %v1151 = vpop.permute.xlu0 %1150
        %1152 = vrot.lane.b32.xlu0 %v511, 112
        %v1153 = vpop.permute.xlu0 %1152
        %1154 = vrot.lane.b32.xlu0 %v516, 112
        %v1155 = vpop.permute.xlu0 %1154
        %v1165 = vsel %vm673, %v1093, 0
        %v1168 = vsel %vm673, %v1095, 0
        %v1171 = vsel %vm673, %v1097, 0
        %v1174 = vsel %vm673, %v1099, 0
        %v1177 = vsel %vm673, %v1101, 0
        %v1180 = vsel %vm673, %v1103, 0
        %v1183 = vsel %vm673, %v1105, 0
        %v1186 = vsel %vm673, %v1107, 0
        %1188 = vmatprep.subr.mxu0 0.0
        %1189 = vmatpush1.msra.mxu0 0.0
        %1190 = vmatprep.subr.mxu0 0.0
        %1191 = vmatpush1.msra.mxu0 0.0
        %1192 = vmatprep.subr.mxu0 0.0
        %1193 = vmatpush1.msra.mxu0 0.0
        %1194 = vmatprep.subr.mxu0 0.0
        %1195 = vmatpush1.msra.mxu0 0.0
        %1196 = vmatprep.subr.mxu0 0.0
        %1197 = vmatpush1.msra.mxu0 0.0
        %1198 = vmatprep.subr.mxu0 0.0
        %1199 = vmatpush1.msra.mxu0 0.0
        %1200 = vmatprep.subr.mxu0 0.0
        %1201 = vmatpush1.msra.mxu0 0.0
        %1202 = vmatprep.subr.mxu0 0.0
        %1203 = vmatpush1.msra.mxu0 0.0
        %1204 = vmatprep.subr.mxu0 0.0
        %1205 = vmatpush1.msra.mxu0 %v1155
        %1206 = vmatprep.subr.mxu0 0.0
        %1207 = vmatpush1.msra.mxu0 %v1153
        %1208 = vmatprep.subr.mxu0 0.0
        %1209 = vmatpush1.msra.mxu0 %v1151
        %1210 = vmatprep.subr.mxu0 0.0
        %1211 = vmatpush1.msra.mxu0 %v1149
        %1212 = vmatprep.subr.mxu0 0.0
        %1213 = vmatpush1.msra.mxu0 %v1147
        %1214 = vmatprep.subr.mxu0 0.0
        %1215 = vmatpush1.msra.mxu0 %v1145
        %1216 = vmatprep.subr.mxu0 0.0
        %1217 = vmatpush1.msra.mxu0 %v1143
        %1218 = vmatprep.subr.mxu0 0.0
        %1219 = vmatpush1.msra.mxu0 %v1141
        %1220 = vmatprep.subr.mxu0 0.0
        %1221 = vmatpush2.msra.mxu0 0.0
        %1222 = vmatprep.subr.mxu0 0.0
        %1223 = vmatpush2.msra.mxu0 0.0
        %1224 = vmatprep.subr.mxu0 0.0
        %1225 = vmatpush2.msra.mxu0 0.0
        %1226 = vmatprep.subr.mxu0 0.0
        %1227 = vmatpush2.msra.mxu0 0.0
        %1228 = vmatprep.subr.mxu0 0.0
        %1229 = vmatpush2.msra.mxu0 0.0
        %1230 = vmatprep.subr.mxu0 0.0
        %1231 = vmatpush2.msra.mxu0 0.0
        %1232 = vmatprep.subr.mxu0 0.0
        %1233 = vmatpush2.msra.mxu0 0.0
        %1234 = vmatprep.subr.mxu0 0.0
        %1235 = vmatpush2.msra.mxu0 0.0
        %1236 = vmatprep.subr.mxu0 0.0
        %1237 = vmatpush2.msra.mxu0 0.0
        %1238 = vmatprep.subr.mxu0 0.0
        %1239 = vmatpush2.msra.mxu0 0.0
        %1240 = vmatprep.subr.mxu0 0.0
        %1241 = vmatpush2.msra.mxu0 0.0
        %1242 = vmatprep.subr.mxu0 0.0
        %1243 = vmatpush2.msra.mxu0 0.0
        %1244 = vmatprep.subr.mxu0 0.0
        %1245 = vmatpush2.msra.mxu0 0.0
        %1246 = vmatprep.subr.mxu0 0.0
        %1247 = vmatpush2.msra.mxu0 0.0
        %1248 = vmatprep.subr.mxu0 0.0
        %1249 = vmatpush2.msra.mxu0 0.0
        %1250 = vmatprep.subr.mxu0 0.0
        %1251 = vmatpush2.msra.mxu0 0.0
        %1252 = vmatprep.mubr.f32.mxu0 0.0
        %1253 = vmatmul.mubr.f32.gmra.mxu0 %v1165
        %v1254 = vpop.f32.mrf.mxu0
        %v1255 = vadd.f32 0.0, %v1254
        %v1256 = vpop.f32.mrf.mxu0
        %1257 = vmatprep.mubr.f32.mxu0 0.0
        %1258 = vmatmul.mubr.f32.gmra.mxu0 %v1168
        %v1259 = vpop.f32.mrf.mxu0
        %v1260 = vadd.f32 0.0, %v1259
        %v1261 = vpop.f32.mrf.mxu0
        %1262 = vmatprep.mubr.f32.mxu0 0.0
        %1263 = vmatmul.mubr.f32.gmra.mxu0 %v1171
        %v1264 = vpop.f32.mrf.mxu0
        %v1265 = vadd.f32 0.0, %v1264
        %v1266 = vpop.f32.mrf.mxu0
        %1267 = vmatprep.mubr.f32.mxu0 0.0
        %1268 = vmatmul.mubr.f32.gmra.mxu0 %v1174
        %v1269 = vpop.f32.mrf.mxu0
        %v1270 = vadd.f32 0.0, %v1269
        %v1271 = vpop.f32.mrf.mxu0
        %1272 = vmatprep.mubr.f32.mxu0 0.0
        %1273 = vmatmul.mubr.f32.gmra.mxu0 %v1177
        %v1274 = vpop.f32.mrf.mxu0
        %v1275 = vadd.f32 0.0, %v1274
        %v1276 = vpop.f32.mrf.mxu0
        %1277 = vmatprep.mubr.f32.mxu0 0.0
        %1278 = vmatmul.mubr.f32.gmra.mxu0 %v1180
        %v1279 = vpop.f32.mrf.mxu0
        %v1280 = vadd.f32 0.0, %v1279
        %v1281 = vpop.f32.mrf.mxu0
        %1282 = vmatprep.mubr.f32.mxu0 0.0
        %1283 = vmatmul.mubr.f32.gmra.mxu0 %v1183
        %v1284 = vpop.f32.mrf.mxu0
        %v1285 = vadd.f32 0.0, %v1284
        %v1286 = vpop.f32.mrf.mxu0
        %1287 = vmatprep.mubr.f32.mxu0 0.0
        %1288 = vmatmul.mubr.f32.gmra.mxu0 %v1186
        %v1289 = vpop.f32.mrf.mxu0
        %v1290 = vadd.f32 0.0, %v1289
        %v1291 = vpop.f32.mrf.mxu0
        %1292 = vdwg.mxu0
        %v1293 = vrcp.pop %v1110
        %v1294 = vrcp.pop %v1113
        %v1295 = vrcp.pop %v1116
        %v1296 = vrcp.pop %v1119
        %v1297 = vrcp.pop %v1122
        %v1298 = vrcp.pop %v1125
        %v1299 = vrcp.pop %v1128
        %v1300 = vrcp.pop %v1131
        %v1301 = vmul.f32 %v1255, %v1293
        %v1302 = vmul.f32 %v1260, %v1294
        %v1303 = vmul.f32 %v1265, %v1295
        %v1304 = vmul.f32 %v1270, %v1296
        %v1305 = vmul.f32 %v1275, %v1297
        %v1306 = vmul.f32 %v1280, %v1298
        %v1307 = vmul.f32 %v1285, %v1299
        %v1308 = vmul.f32 %v1290, %v1300
        %1309 = vrot.lane.b32.xlu0 %v368, 96
        %v1310 = vpop.permute.xlu0 %1309
        %1311 = vrot.lane.b32.xlu0 %v374, 96
        %v1312 = vpop.permute.xlu0 %1311
        %1313 = vrot.lane.b32.xlu0 %v380, 96
        %v1314 = vpop.permute.xlu0 %1313
        %1315 = vrot.lane.b32.xlu0 %v386, 96
        %v1316 = vpop.permute.xlu0 %1315
        %1317 = vrot.lane.b32.xlu0 %v392, 96
        %v1318 = vpop.permute.xlu0 %1317
        %1319 = vrot.lane.b32.xlu0 %v398, 96
        %v1320 = vpop.permute.xlu0 %1319
        %1321 = vrot.lane.b32.xlu0 %v404, 96
        %v1322 = vpop.permute.xlu0 %1321
        %1323 = vrot.lane.b32.xlu0 %v410, 96
        %v1324 = vpop.permute.xlu0 %1323
        %1325 = vrot.lane.b32.xlu0 %v370, 96
        %v1326 = vpop.permute.xlu0 %1325
        %1327 = vrot.lane.b32.xlu0 %v376, 96
        %v1328 = vpop.permute.xlu0 %1327
        %1329 = vrot.lane.b32.xlu0 %v382, 96
        %v1330 = vpop.permute.xlu0 %1329
        %1331 = vrot.lane.b32.xlu0 %v388, 96
        %v1332 = vpop.permute.xlu0 %1331
        %1333 = vrot.lane.b32.xlu0 %v394, 96
        %v1334 = vpop.permute.xlu0 %1333
        %1335 = vrot.lane.b32.xlu0 %v400, 96
        %v1336 = vpop.permute.xlu0 %1335
        %1337 = vrot.lane.b32.xlu0 %v406, 96
        %v1338 = vpop.permute.xlu0 %1337
        %1339 = vrot.lane.b32.xlu0 %v412, 96
        %v1340 = vpop.permute.xlu0 %1339
        %v1341 = vsel %vm519, %v1310, 0
        %v1343 = vsel %vm519, %v1312, 0
        %v1345 = vsel %vm519, %v1314, 0
        %v1347 = vsel %vm519, %v1316, 0
        %v1349 = vsel %vm519, %v1318, 0
        %v1351 = vsel %vm519, %v1320, 0
        %v1353 = vsel %vm519, %v1322, 0
        %v1355 = vsel %vm519, %v1324, 0
        %v1357 = vsel %vm519, %v1326, 0
        %v1359 = vsel %vm519, %v1328, 0
        %v1361 = vsel %vm519, %v1330, 0
        %v1363 = vsel %vm519, %v1332, 0
        %v1365 = vsel %vm519, %v1334, 0
        %v1367 = vsel %vm519, %v1336, 0
        %v1369 = vsel %vm519, %v1338, 0
        %v1371 = vsel %vm519, %v1340, 0
        %1373 = vmatprep.subr.mxu0 0.0
        %1374 = vmatpush1.xpose.msra.mxu0 0.0
        %1375 = vmatprep.subr.mxu0 0.0
        %1376 = vmatpush1.xpose.msra.mxu0 0.0
        %1377 = vmatprep.subr.mxu0 0.0
        %1378 = vmatpush1.xpose.msra.mxu0 0.0
        %1379 = vmatprep.subr.mxu0 0.0
        %1380 = vmatpush1.xpose.msra.mxu0 0.0
        %1381 = vmatprep.subr.mxu0 0.0
        %1382 = vmatpush1.xpose.msra.mxu0 0.0
        %1383 = vmatprep.subr.mxu0 0.0
        %1384 = vmatpush1.xpose.msra.mxu0 0.0
        %1385 = vmatprep.subr.mxu0 0.0
        %1386 = vmatpush1.xpose.msra.mxu0 0.0
        %1387 = vmatprep.subr.mxu0 0.0
        %1388 = vmatpush1.xpose.msra.mxu0 0.0
        %1389 = vmatprep.subr.mxu0 0.0
        %1390 = vmatpush1.xpose.msra.mxu0 %v1371
        %1391 = vmatprep.subr.mxu0 0.0
        %1392 = vmatpush1.xpose.msra.mxu0 %v1369
        %1393 = vmatprep.subr.mxu0 0.0
        %1394 = vmatpush1.xpose.msra.mxu0 %v1367
        %1395 = vmatprep.subr.mxu0 0.0
        %1396 = vmatpush1.xpose.msra.mxu0 %v1365
        %1397 = vmatprep.subr.mxu0 0.0
        %1398 = vmatpush1.xpose.msra.mxu0 %v1363
        %1399 = vmatprep.subr.mxu0 0.0
        %1400 = vmatpush1.xpose.msra.mxu0 %v1361
        %1401 = vmatprep.subr.mxu0 0.0
        %1402 = vmatpush1.xpose.msra.mxu0 %v1359
        %1403 = vmatprep.subr.mxu0 0.0
        %1404 = vmatpush1.xpose.msra.mxu0 %v1357
        %1405 = vmatprep.subr.mxu0 0.0
        %1406 = vmatpush2.xpose.msra.mxu0 0.0
        %1407 = vmatprep.subr.mxu0 0.0
        %1408 = vmatpush2.xpose.msra.mxu0 0.0
        %1409 = vmatprep.subr.mxu0 0.0
        %1410 = vmatpush2.xpose.msra.mxu0 0.0
        %1411 = vmatprep.subr.mxu0 0.0
        %1412 = vmatpush2.xpose.msra.mxu0 0.0
        %1413 = vmatprep.subr.mxu0 0.0
        %1414 = vmatpush2.xpose.msra.mxu0 0.0
        %1415 = vmatprep.subr.mxu0 0.0
        %1416 = vmatpush2.xpose.msra.mxu0 0.0
        %1417 = vmatprep.subr.mxu0 0.0
        %1418 = vmatpush2.xpose.msra.mxu0 0.0
        %1419 = vmatprep.subr.mxu0 0.0
        %1420 = vmatpush2.xpose.msra.mxu0 0.0
        %1421 = vmatprep.subr.mxu0 0.0
        %1422 = vmatpush2.xpose.msra.mxu0 0.0
        %1423 = vmatprep.subr.mxu0 0.0
        %1424 = vmatpush2.xpose.msra.mxu0 0.0
        %1425 = vmatprep.subr.mxu0 0.0
        %1426 = vmatpush2.xpose.msra.mxu0 0.0
        %1427 = vmatprep.subr.mxu0 0.0
        %1428 = vmatpush2.xpose.msra.mxu0 0.0
        %1429 = vmatprep.subr.mxu0 0.0
        %1430 = vmatpush2.xpose.msra.mxu0 0.0
        %1431 = vmatprep.subr.mxu0 0.0
        %1432 = vmatpush2.xpose.msra.mxu0 0.0
        %1433 = vmatprep.subr.mxu0 0.0
        %1434 = vmatpush2.xpose.msra.mxu0 0.0
        %1435 = vmatprep.subr.mxu0 0.0
        %1436 = vmatpush2.xpose.msra.mxu0 0.0
        %1437 = vmatprep.mubr.f32.mxu0 0.0
        %1438 = vmatmul.mubr.f32.gmra.mxu0 %v1341
        %v1439 = vpop.f32.mrf.mxu0
        %v1440 = vadd.f32 0.0, %v1439
        %v1441 = vpop.f32.mrf.mxu0
        %1442 = vmatprep.mubr.f32.mxu0 0.0
        %1443 = vmatmul.mubr.f32.gmra.mxu0 %v1343
        %v1444 = vpop.f32.mrf.mxu0
        %v1445 = vadd.f32 0.0, %v1444
        %v1446 = vpop.f32.mrf.mxu0
        %1447 = vmatprep.mubr.f32.mxu0 0.0
        %1448 = vmatmul.mubr.f32.gmra.mxu0 %v1345
        %v1449 = vpop.f32.mrf.mxu0
        %v1450 = vadd.f32 0.0, %v1449
        %v1451 = vpop.f32.mrf.mxu0
        %1452 = vmatprep.mubr.f32.mxu0 0.0
        %1453 = vmatmul.mubr.f32.gmra.mxu0 %v1347
        %v1454 = vpop.f32.mrf.mxu0
        %v1455 = vadd.f32 0.0, %v1454
        %v1456 = vpop.f32.mrf.mxu0
        %1457 = vmatprep.mubr.f32.mxu0 0.0
        %1458 = vmatmul.mubr.f32.gmra.mxu0 %v1349
        %v1459 = vpop.f32.mrf.mxu0
        %v1460 = vadd.f32 0.0, %v1459
        %v1461 = vpop.f32.mrf.mxu0
        %1462 = vmatprep.mubr.f32.mxu0 0.0
        %1463 = vmatmul.mubr.f32.gmra.mxu0 %v1351
        %v1464 = vpop.f32.mrf.mxu0
        %v1465 = vadd.f32 0.0, %v1464
        %v1466 = vpop.f32.mrf.mxu0
        %1467 = vmatprep.mubr.f32.mxu0 0.0
        %1468 = vmatmul.mubr.f32.gmra.mxu0 %v1353
        %v1469 = vpop.f32.mrf.mxu0
        %v1470 = vadd.f32 0.0, %v1469
        %v1471 = vpop.f32.mrf.mxu0
        %1472 = vmatprep.mubr.f32.mxu0 0.0
        %1473 = vmatmul.mubr.f32.gmra.mxu0 %v1355
        %v1474 = vpop.f32.mrf.mxu0
        %v1475 = vadd.f32 0.0, %v1474
        %v1476 = vpop.f32.mrf.mxu0
        %1477 = vdwg.mxu0
        %v1478 = vsel %vm673, %v1440, -inf
        %1479 = vmax.xlane.f32.xlu0 %v1478
        %v1480 = vpop.xlane.xlu0 %1479
        %v1481 = vsel %vm673, %v1445, -inf
        %1482 = vmax.xlane.f32.xlu0 %v1481
        %v1483 = vpop.xlane.xlu0 %1482
        %v1484 = vsel %vm673, %v1450, -inf
        %1485 = vmax.xlane.f32.xlu0 %v1484
        %v1486 = vpop.xlane.xlu0 %1485
        %v1487 = vsel %vm673, %v1455, -inf
        %1488 = vmax.xlane.f32.xlu0 %v1487
        %v1489 = vpop.xlane.xlu0 %1488
        %v1490 = vsel %vm673, %v1460, -inf
        %1491 = vmax.xlane.f32.xlu0 %v1490
        %v1492 = vpop.xlane.xlu0 %1491
        %v1493 = vsel %vm673, %v1465, -inf
        %1494 = vmax.xlane.f32.xlu0 %v1493
        %v1495 = vpop.xlane.xlu0 %1494
        %v1496 = vsel %vm673, %v1470, -inf
        %1497 = vmax.xlane.f32.xlu0 %v1496
        %v1498 = vpop.xlane.xlu0 %1497
        %v1499 = vsel %vm673, %v1475, -inf
        %1500 = vmax.xlane.f32.xlu0 %v1499
        %v1501 = vpop.xlane.xlu0 %1500
        %v1502 = vsub.f32 %v1440, %v1480
        %v1503 = vsub.f32 %v1445, %v1483
        %v1504 = vsub.f32 %v1450, %v1486
        %v1505 = vsub.f32 %v1455, %v1489
        %v1506 = vsub.f32 %v1460, %v1492
        %v1507 = vsub.f32 %v1465, %v1495
        %v1508 = vsub.f32 %v1470, %v1498
        %v1509 = vsub.f32 %v1475, %v1501
        %v1510 = vmul.f32 %v1502, 1.442695
        %v1511 = vpow.pop %v1510
        %v1512 = vmul.f32 %v1503, 1.442695
        %v1513 = vpow.pop %v1512
        %v1514 = vmul.f32 %v1504, 1.442695
        %v1515 = vpow.pop %v1514
        %v1516 = vmul.f32 %v1505, 1.442695
        %v1517 = vpow.pop %v1516
        %v1518 = vmul.f32 %v1506, 1.442695
        %v1519 = vpow.pop %v1518
        %v1520 = vmul.f32 %v1507, 1.442695
        %v1521 = vpow.pop %v1520
        %v1522 = vmul.f32 %v1508, 1.442695
        %v1523 = vpow.pop %v1522
        %v1524 = vmul.f32 %v1509, 1.442695
        %v1525 = vpow.pop %v1524
        %v1526 = vsel %vm673, %v1511, 0.0
        %1527 = vadd.xlane.f32.xlu0 %v1526
        %v1528 = vpop.xlane.xlu0 %1527
        %v1529 = vsel %vm673, %v1513, 0.0
        %1530 = vadd.xlane.f32.xlu0 %v1529
        %v1531 = vpop.xlane.xlu0 %1530
        %v1532 = vsel %vm673, %v1515, 0.0
        %1533 = vadd.xlane.f32.xlu0 %v1532
        %v1534 = vpop.xlane.xlu0 %1533
        %v1535 = vsel %vm673, %v1517, 0.0
        %1536 = vadd.xlane.f32.xlu0 %v1535
        %v1537 = vpop.xlane.xlu0 %1536
        %v1538 = vsel %vm673, %v1519, 0.0
        %1539 = vadd.xlane.f32.xlu0 %v1538
        %v1540 = vpop.xlane.xlu0 %1539
        %v1541 = vsel %vm673, %v1521, 0.0
        %1542 = vadd.xlane.f32.xlu0 %v1541
        %v1543 = vpop.xlane.xlu0 %1542
        %v1544 = vsel %vm673, %v1523, 0.0
        %1545 = vadd.xlane.f32.xlu0 %v1544
        %v1546 = vpop.xlane.xlu0 %1545
        %v1547 = vsel %vm673, %v1525, 0.0
        %1548 = vadd.xlane.f32.xlu0 %v1547
        %v1549 = vpop.xlane.xlu0 %1548
        %1550 = vrot.lane.b32.xlu0 %v481, 96
        %v1551 = vpop.permute.xlu0 %1550
        %1552 = vrot.lane.b32.xlu0 %v486, 96
        %v1553 = vpop.permute.xlu0 %1552
        %1554 = vrot.lane.b32.xlu0 %v491, 96
        %v1555 = vpop.permute.xlu0 %1554
        %1556 = vrot.lane.b32.xlu0 %v496, 96
        %v1557 = vpop.permute.xlu0 %1556
        %1558 = vrot.lane.b32.xlu0 %v501, 96
        %v1559 = vpop.permute.xlu0 %1558
        %1560 = vrot.lane.b32.xlu0 %v506, 96
        %v1561 = vpop.permute.xlu0 %1560
        %1562 = vrot.lane.b32.xlu0 %v511, 96
        %v1563 = vpop.permute.xlu0 %1562
        %1564 = vrot.lane.b32.xlu0 %v516, 96
        %v1565 = vpop.permute.xlu0 %1564
        %v1575 = vsel %vm673, %v1511, 0
        %v1578 = vsel %vm673, %v1513, 0
        %v1581 = vsel %vm673, %v1515, 0
        %v1584 = vsel %vm673, %v1517, 0
        %v1587 = vsel %vm673, %v1519, 0
        %v1590 = vsel %vm673, %v1521, 0
        %v1593 = vsel %vm673, %v1523, 0
        %v1596 = vsel %vm673, %v1525, 0
        %1598 = vmatprep.subr.mxu0 0.0
        %1599 = vmatpush1.msra.mxu0 0.0
        %1600 = vmatprep.subr.mxu0 0.0
        %1601 = vmatpush1.msra.mxu0 0.0
        %1602 = vmatprep.subr.mxu0 0.0
        %1603 = vmatpush1.msra.mxu0 0.0
        %1604 = vmatprep.subr.mxu0 0.0
        %1605 = vmatpush1.msra.mxu0 0.0
        %1606 = vmatprep.subr.mxu0 0.0
        %1607 = vmatpush1.msra.mxu0 0.0
        %1608 = vmatprep.subr.mxu0 0.0
        %1609 = vmatpush1.msra.mxu0 0.0
        %1610 = vmatprep.subr.mxu0 0.0
        %1611 = vmatpush1.msra.mxu0 0.0
        %1612 = vmatprep.subr.mxu0 0.0
        %1613 = vmatpush1.msra.mxu0 0.0
        %1614 = vmatprep.subr.mxu0 0.0
        %1615 = vmatpush1.msra.mxu0 %v1565
        %1616 = vmatprep.subr.mxu0 0.0
        %1617 = vmatpush1.msra.mxu0 %v1563
        %1618 = vmatprep.subr.mxu0 0.0
        %1619 = vmatpush1.msra.mxu0 %v1561
        %1620 = vmatprep.subr.mxu0 0.0
        %1621 = vmatpush1.msra.mxu0 %v1559
        %1622 = vmatprep.subr.mxu0 0.0
        %1623 = vmatpush1.msra.mxu0 %v1557
        %1624 = vmatprep.subr.mxu0 0.0
        %1625 = vmatpush1.msra.mxu0 %v1555
        %1626 = vmatprep.subr.mxu0 0.0
        %1627 = vmatpush1.msra.mxu0 %v1553
        %1628 = vmatprep.subr.mxu0 0.0
        %1629 = vmatpush1.msra.mxu0 %v1551
        %1630 = vmatprep.subr.mxu0 0.0
        %1631 = vmatpush2.msra.mxu0 0.0
        %1632 = vmatprep.subr.mxu0 0.0
        %1633 = vmatpush2.msra.mxu0 0.0
        %1634 = vmatprep.subr.mxu0 0.0
        %1635 = vmatpush2.msra.mxu0 0.0
        %1636 = vmatprep.subr.mxu0 0.0
        %1637 = vmatpush2.msra.mxu0 0.0
        %1638 = vmatprep.subr.mxu0 0.0
        %1639 = vmatpush2.msra.mxu0 0.0
        %1640 = vmatprep.subr.mxu0 0.0
        %1641 = vmatpush2.msra.mxu0 0.0
        %1642 = vmatprep.subr.mxu0 0.0
        %1643 = vmatpush2.msra.mxu0 0.0
        %1644 = vmatprep.subr.mxu0 0.0
        %1645 = vmatpush2.msra.mxu0 0.0
        %1646 = vmatprep.subr.mxu0 0.0
        %1647 = vmatpush2.msra.mxu0 0.0
        %1648 = vmatprep.subr.mxu0 0.0
        %1649 = vmatpush2.msra.mxu0 0.0
        %1650 = vmatprep.subr.mxu0 0.0
        %1651 = vmatpush2.msra.mxu0 0.0
        %1652 = vmatprep.subr.mxu0 0.0
        %1653 = vmatpush2.msra.mxu0 0.0
        %1654 = vmatprep.subr.mxu0 0.0
        %1655 = vmatpush2.msra.mxu0 0.0
        %1656 = vmatprep.subr.mxu0 0.0
        %1657 = vmatpush2.msra.mxu0 0.0
        %1658 = vmatprep.subr.mxu0 0.0
        %1659 = vmatpush2.msra.mxu0 0.0
        %1660 = vmatprep.subr.mxu0 0.0
        %1661 = vmatpush2.msra.mxu0 0.0
        %1662 = vmatprep.mubr.f32.mxu0 0.0
        %1663 = vmatmul.mubr.f32.gmra.mxu0 %v1575
        %v1664 = vpop.f32.mrf.mxu0
        %v1665 = vadd.f32 0.0, %v1664
        %v1666 = vpop.f32.mrf.mxu0
        %1667 = vmatprep.mubr.f32.mxu0 0.0
        %1668 = vmatmul.mubr.f32.gmra.mxu0 %v1578
        %v1669 = vpop.f32.mrf.mxu0
        %v1670 = vadd.f32 0.0, %v1669
        %v1671 = vpop.f32.mrf.mxu0
        %1672 = vmatprep.mubr.f32.mxu0 0.0
        %1673 = vmatmul.mubr.f32.gmra.mxu0 %v1581
        %v1674 = vpop.f32.mrf.mxu0
        %v1675 = vadd.f32 0.0, %v1674
        %v1676 = vpop.f32.mrf.mxu0
        %1677 = vmatprep.mubr.f32.mxu0 0.0
        %1678 = vmatmul.mubr.f32.gmra.mxu0 %v1584
        %v1679 = vpop.f32.mrf.mxu0
        %v1680 = vadd.f32 0.0, %v1679
        %v1681 = vpop.f32.mrf.mxu0
        %1682 = vmatprep.mubr.f32.mxu0 0.0
        %1683 = vmatmul.mubr.f32.gmra.mxu0 %v1587
        %v1684 = vpop.f32.mrf.mxu0
        %v1685 = vadd.f32 0.0, %v1684
        %v1686 = vpop.f32.mrf.mxu0
        %1687 = vmatprep.mubr.f32.mxu0 0.0
        %1688 = vmatmul.mubr.f32.gmra.mxu0 %v1590
        %v1689 = vpop.f32.mrf.mxu0
        %v1690 = vadd.f32 0.0, %v1689
        %v1691 = vpop.f32.mrf.mxu0
        %1692 = vmatprep.mubr.f32.mxu0 0.0
        %1693 = vmatmul.mubr.f32.gmra.mxu0 %v1593
        %v1694 = vpop.f32.mrf.mxu0
        %v1695 = vadd.f32 0.0, %v1694
        %v1696 = vpop.f32.mrf.mxu0
        %1697 = vmatprep.mubr.f32.mxu0 0.0
        %1698 = vmatmul.mubr.f32.gmra.mxu0 %v1596
        %v1699 = vpop.f32.mrf.mxu0
        %v1700 = vadd.f32 0.0, %v1699
        %v1701 = vpop.f32.mrf.mxu0
        %1702 = vdwg.mxu0
        %v1703 = vrcp.pop %v1528
        %v1704 = vrcp.pop %v1531
        %v1705 = vrcp.pop %v1534
        %v1706 = vrcp.pop %v1537
        %v1707 = vrcp.pop %v1540
        %v1708 = vrcp.pop %v1543
        %v1709 = vrcp.pop %v1546
        %v1710 = vrcp.pop %v1549
        %v1711 = vmul.f32 %v1665, %v1703
        %v1712 = vmul.f32 %v1670, %v1704
        %v1713 = vmul.f32 %v1675, %v1705
        %v1714 = vmul.f32 %v1680, %v1706
        %v1715 = vmul.f32 %v1685, %v1707
        %v1716 = vmul.f32 %v1690, %v1708
        %v1717 = vmul.f32 %v1695, %v1709
        %v1718 = vmul.f32 %v1700, %v1710
        %1719 = vrot.lane.b32.xlu0 %v368, 80
        %v1720 = vpop.permute.xlu0 %1719
        %1721 = vrot.lane.b32.xlu0 %v374, 80
        %v1722 = vpop.permute.xlu0 %1721
        %1723 = vrot.lane.b32.xlu0 %v380, 80
        %v1724 = vpop.permute.xlu0 %1723
        %1725 = vrot.lane.b32.xlu0 %v386, 80
        %v1726 = vpop.permute.xlu0 %1725
        %1727 = vrot.lane.b32.xlu0 %v392, 80
        %v1728 = vpop.permute.xlu0 %1727
        %1729 = vrot.lane.b32.xlu0 %v398, 80
        %v1730 = vpop.permute.xlu0 %1729
        %1731 = vrot.lane.b32.xlu0 %v404, 80
        %v1732 = vpop.permute.xlu0 %1731
        %1733 = vrot.lane.b32.xlu0 %v410, 80
        %v1734 = vpop.permute.xlu0 %1733
        %1735 = vrot.lane.b32.xlu0 %v370, 80
        %v1736 = vpop.permute.xlu0 %1735
        %1737 = vrot.lane.b32.xlu0 %v376, 80
        %v1738 = vpop.permute.xlu0 %1737
        %1739 = vrot.lane.b32.xlu0 %v382, 80
        %v1740 = vpop.permute.xlu0 %1739
        %1741 = vrot.lane.b32.xlu0 %v388, 80
        %v1742 = vpop.permute.xlu0 %1741
        %1743 = vrot.lane.b32.xlu0 %v394, 80
        %v1744 = vpop.permute.xlu0 %1743
        %1745 = vrot.lane.b32.xlu0 %v400, 80
        %v1746 = vpop.permute.xlu0 %1745
        %1747 = vrot.lane.b32.xlu0 %v406, 80
        %v1748 = vpop.permute.xlu0 %1747
        %1749 = vrot.lane.b32.xlu0 %v412, 80
        %v1750 = vpop.permute.xlu0 %1749
        %v1751 = vsel %vm519, %v1720, 0
        %v1753 = vsel %vm519, %v1722, 0
        %v1755 = vsel %vm519, %v1724, 0
        %v1757 = vsel %vm519, %v1726, 0
        %v1759 = vsel %vm519, %v1728, 0
        %v1761 = vsel %vm519, %v1730, 0
        %v1763 = vsel %vm519, %v1732, 0
        %v1765 = vsel %vm519, %v1734, 0
        %v1767 = vsel %vm519, %v1736, 0
        %v1769 = vsel %vm519, %v1738, 0
        %v1771 = vsel %vm519, %v1740, 0
        %v1773 = vsel %vm519, %v1742, 0
        %v1775 = vsel %vm519, %v1744, 0
        %v1777 = vsel %vm519, %v1746, 0
        %v1779 = vsel %vm519, %v1748, 0
        %v1781 = vsel %vm519, %v1750, 0
        %1783 = vmatprep.subr.mxu0 0.0
        %1784 = vmatpush1.xpose.msra.mxu0 0.0
        %1785 = vmatprep.subr.mxu0 0.0
        %1786 = vmatpush1.xpose.msra.mxu0 0.0
        %1787 = vmatprep.subr.mxu0 0.0
        %1788 = vmatpush1.xpose.msra.mxu0 0.0
        %1789 = vmatprep.subr.mxu0 0.0
        %1790 = vmatpush1.xpose.msra.mxu0 0.0
        %1791 = vmatprep.subr.mxu0 0.0
        %1792 = vmatpush1.xpose.msra.mxu0 0.0
        %1793 = vmatprep.subr.mxu0 0.0
        %1794 = vmatpush1.xpose.msra.mxu0 0.0
        %1795 = vmatprep.subr.mxu0 0.0
        %1796 = vmatpush1.xpose.msra.mxu0 0.0
        %1797 = vmatprep.subr.mxu0 0.0
        %1798 = vmatpush1.xpose.msra.mxu0 0.0
        %1799 = vmatprep.subr.mxu0 0.0
        %1800 = vmatpush1.xpose.msra.mxu0 %v1781
        %1801 = vmatprep.subr.mxu0 0.0
        %1802 = vmatpush1.xpose.msra.mxu0 %v1779
        %1803 = vmatprep.subr.mxu0 0.0
        %1804 = vmatpush1.xpose.msra.mxu0 %v1777
        %1805 = vmatprep.subr.mxu0 0.0
        %1806 = vmatpush1.xpose.msra.mxu0 %v1775
        %1807 = vmatprep.subr.mxu0 0.0
        %1808 = vmatpush1.xpose.msra.mxu0 %v1773
        %1809 = vmatprep.subr.mxu0 0.0
        %1810 = vmatpush1.xpose.msra.mxu0 %v1771
        %1811 = vmatprep.subr.mxu0 0.0
        %1812 = vmatpush1.xpose.msra.mxu0 %v1769
        %1813 = vmatprep.subr.mxu0 0.0
        %1814 = vmatpush1.xpose.msra.mxu0 %v1767
        %1815 = vmatprep.subr.mxu0 0.0
        %1816 = vmatpush2.xpose.msra.mxu0 0.0
        %1817 = vmatprep.subr.mxu0 0.0
        %1818 = vmatpush2.xpose.msra.mxu0 0.0
        %1819 = vmatprep.subr.mxu0 0.0
        %1820 = vmatpush2.xpose.msra.mxu0 0.0
        %1821 = vmatprep.subr.mxu0 0.0
        %1822 = vmatpush2.xpose.msra.mxu0 0.0
        %1823 = vmatprep.subr.mxu0 0.0
        %1824 = vmatpush2.xpose.msra.mxu0 0.0
        %1825 = vmatprep.subr.mxu0 0.0
        %1826 = vmatpush2.xpose.msra.mxu0 0.0
        %1827 = vmatprep.subr.mxu0 0.0
        %1828 = vmatpush2.xpose.msra.mxu0 0.0
        %1829 = vmatprep.subr.mxu0 0.0
        %1830 = vmatpush2.xpose.msra.mxu0 0.0
        %1831 = vmatprep.subr.mxu0 0.0
        %1832 = vmatpush2.xpose.msra.mxu0 0.0
        %1833 = vmatprep.subr.mxu0 0.0
        %1834 = vmatpush2.xpose.msra.mxu0 0.0
        %1835 = vmatprep.subr.mxu0 0.0
        %1836 = vmatpush2.xpose.msra.mxu0 0.0
        %1837 = vmatprep.subr.mxu0 0.0
        %1838 = vmatpush2.xpose.msra.mxu0 0.0
        %1839 = vmatprep.subr.mxu0 0.0
        %1840 = vmatpush2.xpose.msra.mxu0 0.0
        %1841 = vmatprep.subr.mxu0 0.0
        %1842 = vmatpush2.xpose.msra.mxu0 0.0
        %1843 = vmatprep.subr.mxu0 0.0
        %1844 = vmatpush2.xpose.msra.mxu0 0.0
        %1845 = vmatprep.subr.mxu0 0.0
        %1846 = vmatpush2.xpose.msra.mxu0 0.0
        %1847 = vmatprep.mubr.f32.mxu0 0.0
        %1848 = vmatmul.mubr.f32.gmra.mxu0 %v1751
        %v1849 = vpop.f32.mrf.mxu0
        %v1850 = vadd.f32 0.0, %v1849
        %v1851 = vpop.f32.mrf.mxu0
        %1852 = vmatprep.mubr.f32.mxu0 0.0
        %1853 = vmatmul.mubr.f32.gmra.mxu0 %v1753
        %v1854 = vpop.f32.mrf.mxu0
        %v1855 = vadd.f32 0.0, %v1854
        %v1856 = vpop.f32.mrf.mxu0
        %1857 = vmatprep.mubr.f32.mxu0 0.0
        %1858 = vmatmul.mubr.f32.gmra.mxu0 %v1755
        %v1859 = vpop.f32.mrf.mxu0
        %v1860 = vadd.f32 0.0, %v1859
        %v1861 = vpop.f32.mrf.mxu0
        %1862 = vmatprep.mubr.f32.mxu0 0.0
        %1863 = vmatmul.mubr.f32.gmra.mxu0 %v1757
        %v1864 = vpop.f32.mrf.mxu0
        %v1865 = vadd.f32 0.0, %v1864
        %v1866 = vpop.f32.mrf.mxu0
        %1867 = vmatprep.mubr.f32.mxu0 0.0
        %1868 = vmatmul.mubr.f32.gmra.mxu0 %v1759
        %v1869 = vpop.f32.mrf.mxu0
        %v1870 = vadd.f32 0.0, %v1869
        %v1871 = vpop.f32.mrf.mxu0
        %1872 = vmatprep.mubr.f32.mxu0 0.0
        %1873 = vmatmul.mubr.f32.gmra.mxu0 %v1761
        %v1874 = vpop.f32.mrf.mxu0
        %v1875 = vadd.f32 0.0, %v1874
        %v1876 = vpop.f32.mrf.mxu0
        %1877 = vmatprep.mubr.f32.mxu0 0.0
        %1878 = vmatmul.mubr.f32.gmra.mxu0 %v1763
        %v1879 = vpop.f32.mrf.mxu0
        %v1880 = vadd.f32 0.0, %v1879
        %v1881 = vpop.f32.mrf.mxu0
        %1882 = vmatprep.mubr.f32.mxu0 0.0
        %1883 = vmatmul.mubr.f32.gmra.mxu0 %v1765
        %v1884 = vpop.f32.mrf.mxu0
        %v1885 = vadd.f32 0.0, %v1884
        %v1886 = vpop.f32.mrf.mxu0
        %1887 = vdwg.mxu0
        %v1888 = vsel %vm673, %v1850, -inf
        %1889 = vmax.xlane.f32.xlu0 %v1888
        %v1890 = vpop.xlane.xlu0 %1889
        %v1891 = vsel %vm673, %v1855, -inf
        %1892 = vmax.xlane.f32.xlu0 %v1891
        %v1893 = vpop.xlane.xlu0 %1892
        %v1894 = vsel %vm673, %v1860, -inf
        %1895 = vmax.xlane.f32.xlu0 %v1894
        %v1896 = vpop.xlane.xlu0 %1895
        %v1897 = vsel %vm673, %v1865, -inf
        %1898 = vmax.xlane.f32.xlu0 %v1897
        %v1899 = vpop.xlane.xlu0 %1898
        %v1900 = vsel %vm673, %v1870, -inf
        %1901 = vmax.xlane.f32.xlu0 %v1900
        %v1902 = vpop.xlane.xlu0 %1901
        %v1903 = vsel %vm673, %v1875, -inf
        %1904 = vmax.xlane.f32.xlu0 %v1903
        %v1905 = vpop.xlane.xlu0 %1904
        %v1906 = vsel %vm673, %v1880, -inf
        %1907 = vmax.xlane.f32.xlu0 %v1906
        %v1908 = vpop.xlane.xlu0 %1907
        %v1909 = vsel %vm673, %v1885, -inf
        %1910 = vmax.xlane.f32.xlu0 %v1909
        %v1911 = vpop.xlane.xlu0 %1910
        %v1912 = vsub.f32 %v1850, %v1890
        %v1913 = vsub.f32 %v1855, %v1893
        %v1914 = vsub.f32 %v1860, %v1896
        %v1915 = vsub.f32 %v1865, %v1899
        %v1916 = vsub.f32 %v1870, %v1902
        %v1917 = vsub.f32 %v1875, %v1905
        %v1918 = vsub.f32 %v1880, %v1908
        %v1919 = vsub.f32 %v1885, %v1911
        %v1920 = vmul.f32 %v1912, 1.442695
        %v1921 = vpow.pop %v1920
        %v1922 = vmul.f32 %v1913, 1.442695
        %v1923 = vpow.pop %v1922
        %v1924 = vmul.f32 %v1914, 1.442695
        %v1925 = vpow.pop %v1924
        %v1926 = vmul.f32 %v1915, 1.442695
        %v1927 = vpow.pop %v1926
        %v1928 = vmul.f32 %v1916, 1.442695
        %v1929 = vpow.pop %v1928
        %v1930 = vmul.f32 %v1917, 1.442695
        %v1931 = vpow.pop %v1930
        %v1932 = vmul.f32 %v1918, 1.442695
        %v1933 = vpow.pop %v1932
        %v1934 = vmul.f32 %v1919, 1.442695
        %v1935 = vpow.pop %v1934
        %v1936 = vsel %vm673, %v1921, 0.0
        %1937 = vadd.xlane.f32.xlu0 %v1936
        %v1938 = vpop.xlane.xlu0 %1937
        %v1939 = vsel %vm673, %v1923, 0.0
        %1940 = vadd.xlane.f32.xlu0 %v1939
        %v1941 = vpop.xlane.xlu0 %1940
        %v1942 = vsel %vm673, %v1925, 0.0
        %1943 = vadd.xlane.f32.xlu0 %v1942
        %v1944 = vpop.xlane.xlu0 %1943
        %v1945 = vsel %vm673, %v1927, 0.0
        %1946 = vadd.xlane.f32.xlu0 %v1945
        %v1947 = vpop.xlane.xlu0 %1946
        %v1948 = vsel %vm673, %v1929, 0.0
        %1949 = vadd.xlane.f32.xlu0 %v1948
        %v1950 = vpop.xlane.xlu0 %1949
        %v1951 = vsel %vm673, %v1931, 0.0
        %1952 = vadd.xlane.f32.xlu0 %v1951
        %v1953 = vpop.xlane.xlu0 %1952
        %v1954 = vsel %vm673, %v1933, 0.0
        %1955 = vadd.xlane.f32.xlu0 %v1954
        %v1956 = vpop.xlane.xlu0 %1955
        %v1957 = vsel %vm673, %v1935, 0.0
        %1958 = vadd.xlane.f32.xlu0 %v1957
        %v1959 = vpop.xlane.xlu0 %1958
        %1960 = vrot.lane.b32.xlu0 %v481, 80
        %v1961 = vpop.permute.xlu0 %1960
        %1962 = vrot.lane.b32.xlu0 %v486, 80
        %v1963 = vpop.permute.xlu0 %1962
        %1964 = vrot.lane.b32.xlu0 %v491, 80
        %v1965 = vpop.permute.xlu0 %1964
        %1966 = vrot.lane.b32.xlu0 %v496, 80
        %v1967 = vpop.permute.xlu0 %1966
        %1968 = vrot.lane.b32.xlu0 %v501, 80
        %v1969 = vpop.permute.xlu0 %1968
        %1970 = vrot.lane.b32.xlu0 %v506, 80
        %v1971 = vpop.permute.xlu0 %1970
        %1972 = vrot.lane.b32.xlu0 %v511, 80
        %v1973 = vpop.permute.xlu0 %1972
        %1974 = vrot.lane.b32.xlu0 %v516, 80
        %v1975 = vpop.permute.xlu0 %1974
        %v1985 = vsel %vm673, %v1921, 0
        %v1988 = vsel %vm673, %v1923, 0
        %v1991 = vsel %vm673, %v1925, 0
        %v1994 = vsel %vm673, %v1927, 0
        %v1997 = vsel %vm673, %v1929, 0
        %v2000 = vsel %vm673, %v1931, 0
        %v2003 = vsel %vm673, %v1933, 0
        %v2006 = vsel %vm673, %v1935, 0
        %2008 = vmatprep.subr.mxu0 0.0
        %2009 = vmatpush1.msra.mxu0 0.0
        %2010 = vmatprep.subr.mxu0 0.0
        %2011 = vmatpush1.msra.mxu0 0.0
        %2012 = vmatprep.subr.mxu0 0.0
        %2013 = vmatpush1.msra.mxu0 0.0
        %2014 = vmatprep.subr.mxu0 0.0
        %2015 = vmatpush1.msra.mxu0 0.0
        %2016 = vmatprep.subr.mxu0 0.0
        %2017 = vmatpush1.msra.mxu0 0.0
        %2018 = vmatprep.subr.mxu0 0.0
        %2019 = vmatpush1.msra.mxu0 0.0
        %2020 = vmatprep.subr.mxu0 0.0
        %2021 = vmatpush1.msra.mxu0 0.0
        %2022 = vmatprep.subr.mxu0 0.0
        %2023 = vmatpush1.msra.mxu0 0.0
        %2024 = vmatprep.subr.mxu0 0.0
        %2025 = vmatpush1.msra.mxu0 %v1975
        %2026 = vmatprep.subr.mxu0 0.0
        %2027 = vmatpush1.msra.mxu0 %v1973
        %2028 = vmatprep.subr.mxu0 0.0
        %2029 = vmatpush1.msra.mxu0 %v1971
        %2030 = vmatprep.subr.mxu0 0.0
        %2031 = vmatpush1.msra.mxu0 %v1969
        %2032 = vmatprep.subr.mxu0 0.0
        %2033 = vmatpush1.msra.mxu0 %v1967
        %2034 = vmatprep.subr.mxu0 0.0
        %2035 = vmatpush1.msra.mxu0 %v1965
        %2036 = vmatprep.subr.mxu0 0.0
        %2037 = vmatpush1.msra.mxu0 %v1963
        %2038 = vmatprep.subr.mxu0 0.0
        %2039 = vmatpush1.msra.mxu0 %v1961
        %2040 = vmatprep.subr.mxu0 0.0
        %2041 = vmatpush2.msra.mxu0 0.0
        %2042 = vmatprep.subr.mxu0 0.0
        %2043 = vmatpush2.msra.mxu0 0.0
        %2044 = vmatprep.subr.mxu0 0.0
        %2045 = vmatpush2.msra.mxu0 0.0
        %2046 = vmatprep.subr.mxu0 0.0
        %2047 = vmatpush2.msra.mxu0 0.0
        %2048 = vmatprep.subr.mxu0 0.0
        %2049 = vmatpush2.msra.mxu0 0.0
        %2050 = vmatprep.subr.mxu0 0.0
        %2051 = vmatpush2.msra.mxu0 0.0
        %2052 = vmatprep.subr.mxu0 0.0
        %2053 = vmatpush2.msra.mxu0 0.0
        %2054 = vmatprep.subr.mxu0 0.0
        %2055 = vmatpush2.msra.mxu0 0.0
        %2056 = vmatprep.subr.mxu0 0.0
        %2057 = vmatpush2.msra.mxu0 0.0
        %2058 = vmatprep.subr.mxu0 0.0
        %2059 = vmatpush2.msra.mxu0 0.0
        %2060 = vmatprep.subr.mxu0 0.0
        %2061 = vmatpush2.msra.mxu0 0.0
        %2062 = vmatprep.subr.mxu0 0.0
        %2063 = vmatpush2.msra.mxu0 0.0
        %2064 = vmatprep.subr.mxu0 0.0
        %2065 = vmatpush2.msra.mxu0 0.0
        %2066 = vmatprep.subr.mxu0 0.0
        %2067 = vmatpush2.msra.mxu0 0.0
        %2068 = vmatprep.subr.mxu0 0.0
        %2069 = vmatpush2.msra.mxu0 0.0
        %2070 = vmatprep.subr.mxu0 0.0
        %2071 = vmatpush2.msra.mxu0 0.0
        %2072 = vmatprep.mubr.f32.mxu0 0.0
        %2073 = vmatmul.mubr.f32.gmra.mxu0 %v1985
        %v2074 = vpop.f32.mrf.mxu0
        %v2075 = vadd.f32 0.0, %v2074
        %v2076 = vpop.f32.mrf.mxu0
        %2077 = vmatprep.mubr.f32.mxu0 0.0
        %2078 = vmatmul.mubr.f32.gmra.mxu0 %v1988
        %v2079 = vpop.f32.mrf.mxu0
        %v2080 = vadd.f32 0.0, %v2079
        %v2081 = vpop.f32.mrf.mxu0
        %2082 = vmatprep.mubr.f32.mxu0 0.0
        %2083 = vmatmul.mubr.f32.gmra.mxu0 %v1991
        %v2084 = vpop.f32.mrf.mxu0
        %v2085 = vadd.f32 0.0, %v2084
        %v2086 = vpop.f32.mrf.mxu0
        %2087 = vmatprep.mubr.f32.mxu0 0.0
        %2088 = vmatmul.mubr.f32.gmra.mxu0 %v1994
        %v2089 = vpop.f32.mrf.mxu0
        %v2090 = vadd.f32 0.0, %v2089
        %v2091 = vpop.f32.mrf.mxu0
        %2092 = vmatprep.mubr.f32.mxu0 0.0
        %2093 = vmatmul.mubr.f32.gmra.mxu0 %v1997
        %v2094 = vpop.f32.mrf.mxu0
        %v2095 = vadd.f32 0.0, %v2094
        %v2096 = vpop.f32.mrf.mxu0
        %2097 = vmatprep.mubr.f32.mxu0 0.0
        %2098 = vmatmul.mubr.f32.gmra.mxu0 %v2000
        %v2099 = vpop.f32.mrf.mxu0
        %v2100 = vadd.f32 0.0, %v2099
        %v2101 = vpop.f32.mrf.mxu0
        %2102 = vmatprep.mubr.f32.mxu0 0.0
        %2103 = vmatmul.mubr.f32.gmra.mxu0 %v2003
        %v2104 = vpop.f32.mrf.mxu0
        %v2105 = vadd.f32 0.0, %v2104
        %v2106 = vpop.f32.mrf.mxu0
        %2107 = vmatprep.mubr.f32.mxu0 0.0
        %2108 = vmatmul.mubr.f32.gmra.mxu0 %v2006
        %v2109 = vpop.f32.mrf.mxu0
        %v2110 = vadd.f32 0.0, %v2109
        %v2111 = vpop.f32.mrf.mxu0
        %2112 = vdwg.mxu0
        %v2113 = vrcp.pop %v1938
        %v2114 = vrcp.pop %v1941
        %v2115 = vrcp.pop %v1944
        %v2116 = vrcp.pop %v1947
        %v2117 = vrcp.pop %v1950
        %v2118 = vrcp.pop %v1953
        %v2119 = vrcp.pop %v1956
        %v2120 = vrcp.pop %v1959
        %v2121 = vmul.f32 %v2075, %v2113
        %v2122 = vmul.f32 %v2080, %v2114
        %v2123 = vmul.f32 %v2085, %v2115
        %v2124 = vmul.f32 %v2090, %v2116
        %v2125 = vmul.f32 %v2095, %v2117
        %v2126 = vmul.f32 %v2100, %v2118
        %v2127 = vmul.f32 %v2105, %v2119
        %v2128 = vmul.f32 %v2110, %v2120
        %2129 = vrot.lane.b32.xlu0 %v368, 64
        %v2130 = vpop.permute.xlu0 %2129
        %2131 = vrot.lane.b32.xlu0 %v374, 64
        %v2132 = vpop.permute.xlu0 %2131
        %2133 = vrot.lane.b32.xlu0 %v380, 64
        %v2134 = vpop.permute.xlu0 %2133
        %2135 = vrot.lane.b32.xlu0 %v386, 64
        %v2136 = vpop.permute.xlu0 %2135
        %2137 = vrot.lane.b32.xlu0 %v392, 64
        %v2138 = vpop.permute.xlu0 %2137
        %2139 = vrot.lane.b32.xlu0 %v398, 64
        %v2140 = vpop.permute.xlu0 %2139
        %2141 = vrot.lane.b32.xlu0 %v404, 64
        %v2142 = vpop.permute.xlu0 %2141
        %2143 = vrot.lane.b32.xlu0 %v410, 64
        %v2144 = vpop.permute.xlu0 %2143
        %2145 = vrot.lane.b32.xlu0 %v370, 64
        %v2146 = vpop.permute.xlu0 %2145
        %2147 = vrot.lane.b32.xlu0 %v376, 64
        %v2148 = vpop.permute.xlu0 %2147
        %2149 = vrot.lane.b32.xlu0 %v382, 64
        %v2150 = vpop.permute.xlu0 %2149
        %2151 = vrot.lane.b32.xlu0 %v388, 64
        %v2152 = vpop.permute.xlu0 %2151
        %2153 = vrot.lane.b32.xlu0 %v394, 64
        %v2154 = vpop.permute.xlu0 %2153
        %2155 = vrot.lane.b32.xlu0 %v400, 64
        %v2156 = vpop.permute.xlu0 %2155
        %2157 = vrot.lane.b32.xlu0 %v406, 64
        %v2158 = vpop.permute.xlu0 %2157
        %2159 = vrot.lane.b32.xlu0 %v412, 64
        %v2160 = vpop.permute.xlu0 %2159
        %v2161 = vsel %vm519, %v2130, 0
        %v2163 = vsel %vm519, %v2132, 0
        %v2165 = vsel %vm519, %v2134, 0
        %v2167 = vsel %vm519, %v2136, 0
        %v2169 = vsel %vm519, %v2138, 0
        %v2171 = vsel %vm519, %v2140, 0
        %v2173 = vsel %vm519, %v2142, 0
        %v2175 = vsel %vm519, %v2144, 0
        %v2177 = vsel %vm519, %v2146, 0
        %v2179 = vsel %vm519, %v2148, 0
        %v2181 = vsel %vm519, %v2150, 0
        %v2183 = vsel %vm519, %v2152, 0
        %v2185 = vsel %vm519, %v2154, 0
        %v2187 = vsel %vm519, %v2156, 0
        %v2189 = vsel %vm519, %v2158, 0
        %v2191 = vsel %vm519, %v2160, 0
        %2193 = vmatprep.subr.mxu0 0.0
        %2194 = vmatpush1.xpose.msra.mxu0 0.0
        %2195 = vmatprep.subr.mxu0 0.0
        %2196 = vmatpush1.xpose.msra.mxu0 0.0
        %2197 = vmatprep.subr.mxu0 0.0
        %2198 = vmatpush1.xpose.msra.mxu0 0.0
        %2199 = vmatprep.subr.mxu0 0.0
        %2200 = vmatpush1.xpose.msra.mxu0 0.0
        %2201 = vmatprep.subr.mxu0 0.0
        %2202 = vmatpush1.xpose.msra.mxu0 0.0
        %2203 = vmatprep.subr.mxu0 0.0
        %2204 = vmatpush1.xpose.msra.mxu0 0.0
        %2205 = vmatprep.subr.mxu0 0.0
        %2206 = vmatpush1.xpose.msra.mxu0 0.0
        %2207 = vmatprep.subr.mxu0 0.0
        %2208 = vmatpush1.xpose.msra.mxu0 0.0
        %2209 = vmatprep.subr.mxu0 0.0
        %2210 = vmatpush1.xpose.msra.mxu0 %v2191
        %2211 = vmatprep.subr.mxu0 0.0
        %2212 = vmatpush1.xpose.msra.mxu0 %v2189
        %2213 = vmatprep.subr.mxu0 0.0
        %2214 = vmatpush1.xpose.msra.mxu0 %v2187
        %2215 = vmatprep.subr.mxu0 0.0
        %2216 = vmatpush1.xpose.msra.mxu0 %v2185
        %2217 = vmatprep.subr.mxu0 0.0
        %2218 = vmatpush1.xpose.msra.mxu0 %v2183
        %2219 = vmatprep.subr.mxu0 0.0
        %2220 = vmatpush1.xpose.msra.mxu0 %v2181
        %2221 = vmatprep.subr.mxu0 0.0
        %2222 = vmatpush1.xpose.msra.mxu0 %v2179
        %2223 = vmatprep.subr.mxu0 0.0
        %2224 = vmatpush1.xpose.msra.mxu0 %v2177
        %2225 = vmatprep.subr.mxu0 0.0
        %2226 = vmatpush2.xpose.msra.mxu0 0.0
        %2227 = vmatprep.subr.mxu0 0.0
        %2228 = vmatpush2.xpose.msra.mxu0 0.0
        %2229 = vmatprep.subr.mxu0 0.0
        %2230 = vmatpush2.xpose.msra.mxu0 0.0
        %2231 = vmatprep.subr.mxu0 0.0
        %2232 = vmatpush2.xpose.msra.mxu0 0.0
        %2233 = vmatprep.subr.mxu0 0.0
        %2234 = vmatpush2.xpose.msra.mxu0 0.0
        %2235 = vmatprep.subr.mxu0 0.0
        %2236 = vmatpush2.xpose.msra.mxu0 0.0
        %2237 = vmatprep.subr.mxu0 0.0
        %2238 = vmatpush2.xpose.msra.mxu0 0.0
        %2239 = vmatprep.subr.mxu0 0.0
        %2240 = vmatpush2.xpose.msra.mxu0 0.0
        %2241 = vmatprep.subr.mxu0 0.0
        %2242 = vmatpush2.xpose.msra.mxu0 0.0
        %2243 = vmatprep.subr.mxu0 0.0
        %2244 = vmatpush2.xpose.msra.mxu0 0.0
        %2245 = vmatprep.subr.mxu0 0.0
        %2246 = vmatpush2.xpose.msra.mxu0 0.0
        %2247 = vmatprep.subr.mxu0 0.0
        %2248 = vmatpush2.xpose.msra.mxu0 0.0
        %2249 = vmatprep.subr.mxu0 0.0
        %2250 = vmatpush2.xpose.msra.mxu0 0.0
        %2251 = vmatprep.subr.mxu0 0.0
        %2252 = vmatpush2.xpose.msra.mxu0 0.0
        %2253 = vmatprep.subr.mxu0 0.0
        %2254 = vmatpush2.xpose.msra.mxu0 0.0
        %2255 = vmatprep.subr.mxu0 0.0
        %2256 = vmatpush2.xpose.msra.mxu0 0.0
        %2257 = vmatprep.mubr.f32.mxu0 0.0
        %2258 = vmatmul.mubr.f32.gmra.mxu0 %v2161
        %v2259 = vpop.f32.mrf.mxu0
        %v2260 = vadd.f32 0.0, %v2259
        %v2261 = vpop.f32.mrf.mxu0
        %2262 = vmatprep.mubr.f32.mxu0 0.0
        %2263 = vmatmul.mubr.f32.gmra.mxu0 %v2163
        %v2264 = vpop.f32.mrf.mxu0
        %v2265 = vadd.f32 0.0, %v2264
        %v2266 = vpop.f32.mrf.mxu0
        %2267 = vmatprep.mubr.f32.mxu0 0.0
        %2268 = vmatmul.mubr.f32.gmra.mxu0 %v2165
        %v2269 = vpop.f32.mrf.mxu0
        %v2270 = vadd.f32 0.0, %v2269
        %v2271 = vpop.f32.mrf.mxu0
        %2272 = vmatprep.mubr.f32.mxu0 0.0
        %2273 = vmatmul.mubr.f32.gmra.mxu0 %v2167
        %v2274 = vpop.f32.mrf.mxu0
        %v2275 = vadd.f32 0.0, %v2274
        %v2276 = vpop.f32.mrf.mxu0
        %2277 = vmatprep.mubr.f32.mxu0 0.0
        %2278 = vmatmul.mubr.f32.gmra.mxu0 %v2169
        %v2279 = vpop.f32.mrf.mxu0
        %v2280 = vadd.f32 0.0, %v2279
        %v2281 = vpop.f32.mrf.mxu0
        %2282 = vmatprep.mubr.f32.mxu0 0.0
        %2283 = vmatmul.mubr.f32.gmra.mxu0 %v2171
        %v2284 = vpop.f32.mrf.mxu0
        %v2285 = vadd.f32 0.0, %v2284
        %v2286 = vpop.f32.mrf.mxu0
        %2287 = vmatprep.mubr.f32.mxu0 0.0
        %2288 = vmatmul.mubr.f32.gmra.mxu0 %v2173
        %v2289 = vpop.f32.mrf.mxu0
        %v2290 = vadd.f32 0.0, %v2289
        %v2291 = vpop.f32.mrf.mxu0
        %2292 = vmatprep.mubr.f32.mxu0 0.0
        %2293 = vmatmul.mubr.f32.gmra.mxu0 %v2175
        %v2294 = vpop.f32.mrf.mxu0
        %v2295 = vadd.f32 0.0, %v2294
        %v2296 = vpop.f32.mrf.mxu0
        %2297 = vdwg.mxu0
        %v2298 = vsel %vm673, %v2260, -inf
        %2299 = vmax.xlane.f32.xlu0 %v2298
        %v2300 = vpop.xlane.xlu0 %2299
        %v2301 = vsel %vm673, %v2265, -inf
        %2302 = vmax.xlane.f32.xlu0 %v2301
        %v2303 = vpop.xlane.xlu0 %2302
        %v2304 = vsel %vm673, %v2270, -inf
        %2305 = vmax.xlane.f32.xlu0 %v2304
        %v2306 = vpop.xlane.xlu0 %2305
        %v2307 = vsel %vm673, %v2275, -inf
        %2308 = vmax.xlane.f32.xlu0 %v2307
        %v2309 = vpop.xlane.xlu0 %2308
        %v2310 = vsel %vm673, %v2280, -inf
        %2311 = vmax.xlane.f32.xlu0 %v2310
        %v2312 = vpop.xlane.xlu0 %2311
        %v2313 = vsel %vm673, %v2285, -inf
        %2314 = vmax.xlane.f32.xlu0 %v2313
        %v2315 = vpop.xlane.xlu0 %2314
        %v2316 = vsel %vm673, %v2290, -inf
        %2317 = vmax.xlane.f32.xlu0 %v2316
        %v2318 = vpop.xlane.xlu0 %2317
        %v2319 = vsel %vm673, %v2295, -inf
        %2320 = vmax.xlane.f32.xlu0 %v2319
        %v2321 = vpop.xlane.xlu0 %2320
        %v2322 = vsub.f32 %v2260, %v2300
        %v2323 = vsub.f32 %v2265, %v2303
        %v2324 = vsub.f32 %v2270, %v2306
        %v2325 = vsub.f32 %v2275, %v2309
        %v2326 = vsub.f32 %v2280, %v2312
        %v2327 = vsub.f32 %v2285, %v2315
        %v2328 = vsub.f32 %v2290, %v2318
        %v2329 = vsub.f32 %v2295, %v2321
        %v2330 = vmul.f32 %v2322, 1.442695
        %v2331 = vpow.pop %v2330
        %v2332 = vmul.f32 %v2323, 1.442695
        %v2333 = vpow.pop %v2332
        %v2334 = vmul.f32 %v2324, 1.442695
        %v2335 = vpow.pop %v2334
        %v2336 = vmul.f32 %v2325, 1.442695
        %v2337 = vpow.pop %v2336
        %v2338 = vmul.f32 %v2326, 1.442695
        %v2339 = vpow.pop %v2338
        %v2340 = vmul.f32 %v2327, 1.442695
        %v2341 = vpow.pop %v2340
        %v2342 = vmul.f32 %v2328, 1.442695
        %v2343 = vpow.pop %v2342
        %v2344 = vmul.f32 %v2329, 1.442695
        %v2345 = vpow.pop %v2344
        %v2346 = vsel %vm673, %v2331, 0.0
        %2347 = vadd.xlane.f32.xlu0 %v2346
        %v2348 = vpop.xlane.xlu0 %2347
        %v2349 = vsel %vm673, %v2333, 0.0
        %2350 = vadd.xlane.f32.xlu0 %v2349
        %v2351 = vpop.xlane.xlu0 %2350
        %v2352 = vsel %vm673, %v2335, 0.0
        %2353 = vadd.xlane.f32.xlu0 %v2352
        %v2354 = vpop.xlane.xlu0 %2353
        %v2355 = vsel %vm673, %v2337, 0.0
        %2356 = vadd.xlane.f32.xlu0 %v2355
        %v2357 = vpop.xlane.xlu0 %2356
        %v2358 = vsel %vm673, %v2339, 0.0
        %2359 = vadd.xlane.f32.xlu0 %v2358
        %v2360 = vpop.xlane.xlu0 %2359
        %v2361 = vsel %vm673, %v2341, 0.0
        %2362 = vadd.xlane.f32.xlu0 %v2361
        %v2363 = vpop.xlane.xlu0 %2362
        %v2364 = vsel %vm673, %v2343, 0.0
        %2365 = vadd.xlane.f32.xlu0 %v2364
        %v2366 = vpop.xlane.xlu0 %2365
        %v2367 = vsel %vm673, %v2345, 0.0
        %2368 = vadd.xlane.f32.xlu0 %v2367
        %v2369 = vpop.xlane.xlu0 %2368
        %2370 = vrot.lane.b32.xlu0 %v481, 64
        %v2371 = vpop.permute.xlu0 %2370
        %2372 = vrot.lane.b32.xlu0 %v486, 64
        %v2373 = vpop.permute.xlu0 %2372
        %2374 = vrot.lane.b32.xlu0 %v491, 64
        %v2375 = vpop.permute.xlu0 %2374
        %2376 = vrot.lane.b32.xlu0 %v496, 64
        %v2377 = vpop.permute.xlu0 %2376
        %2378 = vrot.lane.b32.xlu0 %v501, 64
        %v2379 = vpop.permute.xlu0 %2378
        %2380 = vrot.lane.b32.xlu0 %v506, 64
        %v2381 = vpop.permute.xlu0 %2380
        %2382 = vrot.lane.b32.xlu0 %v511, 64
        %v2383 = vpop.permute.xlu0 %2382
        %2384 = vrot.lane.b32.xlu0 %v516, 64
        %v2385 = vpop.permute.xlu0 %2384
        %v2395 = vsel %vm673, %v2331, 0
        %v2398 = vsel %vm673, %v2333, 0
        %v2401 = vsel %vm673, %v2335, 0
        %v2404 = vsel %vm673, %v2337, 0
        %v2407 = vsel %vm673, %v2339, 0
        %v2410 = vsel %vm673, %v2341, 0
        %v2413 = vsel %vm673, %v2343, 0
        %v2416 = vsel %vm673, %v2345, 0
        %2418 = vmatprep.subr.mxu0 0.0
        %2419 = vmatpush1.msra.mxu0 0.0
        %2420 = vmatprep.subr.mxu0 0.0
        %2421 = vmatpush1.msra.mxu0 0.0
        %2422 = vmatprep.subr.mxu0 0.0
        %2423 = vmatpush1.msra.mxu0 0.0
        %2424 = vmatprep.subr.mxu0 0.0
        %2425 = vmatpush1.msra.mxu0 0.0
        %2426 = vmatprep.subr.mxu0 0.0
        %2427 = vmatpush1.msra.mxu0 0.0
        %2428 = vmatprep.subr.mxu0 0.0
        %2429 = vmatpush1.msra.mxu0 0.0
        %2430 = vmatprep.subr.mxu0 0.0
        %2431 = vmatpush1.msra.mxu0 0.0
        %2432 = vmatprep.subr.mxu0 0.0
        %2433 = vmatpush1.msra.mxu0 0.0
        %2434 = vmatprep.subr.mxu0 0.0
        %2435 = vmatpush1.msra.mxu0 %v2385
        %2436 = vmatprep.subr.mxu0 0.0
        %2437 = vmatpush1.msra.mxu0 %v2383
        %2438 = vmatprep.subr.mxu0 0.0
        %2439 = vmatpush1.msra.mxu0 %v2381
        %2440 = vmatprep.subr.mxu0 0.0
        %2441 = vmatpush1.msra.mxu0 %v2379
        %2442 = vmatprep.subr.mxu0 0.0
        %2443 = vmatpush1.msra.mxu0 %v2377
        %2444 = vmatprep.subr.mxu0 0.0
        %2445 = vmatpush1.msra.mxu0 %v2375
        %2446 = vmatprep.subr.mxu0 0.0
        %2447 = vmatpush1.msra.mxu0 %v2373
        %2448 = vmatprep.subr.mxu0 0.0
        %2449 = vmatpush1.msra.mxu0 %v2371
        %2450 = vmatprep.subr.mxu0 0.0
        %2451 = vmatpush2.msra.mxu0 0.0
        %2452 = vmatprep.subr.mxu0 0.0
        %2453 = vmatpush2.msra.mxu0 0.0
        %2454 = vmatprep.subr.mxu0 0.0
        %2455 = vmatpush2.msra.mxu0 0.0
        %2456 = vmatprep.subr.mxu0 0.0
        %2457 = vmatpush2.msra.mxu0 0.0
        %2458 = vmatprep.subr.mxu0 0.0
        %2459 = vmatpush2.msra.mxu0 0.0
        %2460 = vmatprep.subr.mxu0 0.0
        %2461 = vmatpush2.msra.mxu0 0.0
        %2462 = vmatprep.subr.mxu0 0.0
        %2463 = vmatpush2.msra.mxu0 0.0
        %2464 = vmatprep.subr.mxu0 0.0
        %2465 = vmatpush2.msra.mxu0 0.0
        %2466 = vmatprep.subr.mxu0 0.0
        %2467 = vmatpush2.msra.mxu0 0.0
        %2468 = vmatprep.subr.mxu0 0.0
        %2469 = vmatpush2.msra.mxu0 0.0
        %2470 = vmatprep.subr.mxu0 0.0
        %2471 = vmatpush2.msra.mxu0 0.0
        %2472 = vmatprep.subr.mxu0 0.0
        %2473 = vmatpush2.msra.mxu0 0.0
        %2474 = vmatprep.subr.mxu0 0.0
        %2475 = vmatpush2.msra.mxu0 0.0
        %2476 = vmatprep.subr.mxu0 0.0
        %2477 = vmatpush2.msra.mxu0 0.0
        %2478 = vmatprep.subr.mxu0 0.0
        %2479 = vmatpush2.msra.mxu0 0.0
        %2480 = vmatprep.subr.mxu0 0.0
        %2481 = vmatpush2.msra.mxu0 0.0
        %2482 = vmatprep.mubr.f32.mxu0 0.0
        %2483 = vmatmul.mubr.f32.gmra.mxu0 %v2395
        %v2484 = vpop.f32.mrf.mxu0
        %v2485 = vadd.f32 0.0, %v2484
        %v2486 = vpop.f32.mrf.mxu0
        %2487 = vmatprep.mubr.f32.mxu0 0.0
        %2488 = vmatmul.mubr.f32.gmra.mxu0 %v2398
        %v2489 = vpop.f32.mrf.mxu0
        %v2490 = vadd.f32 0.0, %v2489
        %v2491 = vpop.f32.mrf.mxu0
        %2492 = vmatprep.mubr.f32.mxu0 0.0
        %2493 = vmatmul.mubr.f32.gmra.mxu0 %v2401
        %v2494 = vpop.f32.mrf.mxu0
        %v2495 = vadd.f32 0.0, %v2494
        %v2496 = vpop.f32.mrf.mxu0
        %2497 = vmatprep.mubr.f32.mxu0 0.0
        %2498 = vmatmul.mubr.f32.gmra.mxu0 %v2404
        %v2499 = vpop.f32.mrf.mxu0
        %v2500 = vadd.f32 0.0, %v2499
        %v2501 = vpop.f32.mrf.mxu0
        %2502 = vmatprep.mubr.f32.mxu0 0.0
        %2503 = vmatmul.mubr.f32.gmra.mxu0 %v2407
        %v2504 = vpop.f32.mrf.mxu0
        %v2505 = vadd.f32 0.0, %v2504
        %v2506 = vpop.f32.mrf.mxu0
        %2507 = vmatprep.mubr.f32.mxu0 0.0
        %2508 = vmatmul.mubr.f32.gmra.mxu0 %v2410
        %v2509 = vpop.f32.mrf.mxu0
        %v2510 = vadd.f32 0.0, %v2509
        %v2511 = vpop.f32.mrf.mxu0
        %2512 = vmatprep.mubr.f32.mxu0 0.0
        %2513 = vmatmul.mubr.f32.gmra.mxu0 %v2413
        %v2514 = vpop.f32.mrf.mxu0
        %v2515 = vadd.f32 0.0, %v2514
        %v2516 = vpop.f32.mrf.mxu0
        %2517 = vmatprep.mubr.f32.mxu0 0.0
        %2518 = vmatmul.mubr.f32.gmra.mxu0 %v2416
        %v2519 = vpop.f32.mrf.mxu0
        %v2520 = vadd.f32 0.0, %v2519
        %v2521 = vpop.f32.mrf.mxu0
        %2522 = vdwg.mxu0
        %v2523 = vrcp.pop %v2348
        %v2524 = vrcp.pop %v2351
        %v2525 = vrcp.pop %v2354
        %v2526 = vrcp.pop %v2357
        %v2527 = vrcp.pop %v2360
        %v2528 = vrcp.pop %v2363
        %v2529 = vrcp.pop %v2366
        %v2530 = vrcp.pop %v2369
        %v2531 = vmul.f32 %v2485, %v2523
        %v2532 = vmul.f32 %v2490, %v2524
        %v2533 = vmul.f32 %v2495, %v2525
        %v2534 = vmul.f32 %v2500, %v2526
        %v2535 = vmul.f32 %v2505, %v2527
        %v2536 = vmul.f32 %v2510, %v2528
        %v2537 = vmul.f32 %v2515, %v2529
        %v2538 = vmul.f32 %v2520, %v2530
        %2539 = vrot.lane.b32.xlu0 %v368, 48
        %v2540 = vpop.permute.xlu0 %2539
        %2541 = vrot.lane.b32.xlu0 %v374, 48
        %v2542 = vpop.permute.xlu0 %2541
        %2543 = vrot.lane.b32.xlu0 %v380, 48
        %v2544 = vpop.permute.xlu0 %2543
        %2545 = vrot.lane.b32.xlu0 %v386, 48
        %v2546 = vpop.permute.xlu0 %2545
        %2547 = vrot.lane.b32.xlu0 %v392, 48
        %v2548 = vpop.permute.xlu0 %2547
        %2549 = vrot.lane.b32.xlu0 %v398, 48
        %v2550 = vpop.permute.xlu0 %2549
        %2551 = vrot.lane.b32.xlu0 %v404, 48
        %v2552 = vpop.permute.xlu0 %2551
        %2553 = vrot.lane.b32.xlu0 %v410, 48
        %v2554 = vpop.permute.xlu0 %2553
        %2555 = vrot.lane.b32.xlu0 %v370, 48
        %v2556 = vpop.permute.xlu0 %2555
        %2557 = vrot.lane.b32.xlu0 %v376, 48
        %v2558 = vpop.permute.xlu0 %2557
        %2559 = vrot.lane.b32.xlu0 %v382, 48
        %v2560 = vpop.permute.xlu0 %2559
        %2561 = vrot.lane.b32.xlu0 %v388, 48
        %v2562 = vpop.permute.xlu0 %2561
        %2563 = vrot.lane.b32.xlu0 %v394, 48
        %v2564 = vpop.permute.xlu0 %2563
        %2565 = vrot.lane.b32.xlu0 %v400, 48
        %v2566 = vpop.permute.xlu0 %2565
        %2567 = vrot.lane.b32.xlu0 %v406, 48
        %v2568 = vpop.permute.xlu0 %2567
        %2569 = vrot.lane.b32.xlu0 %v412, 48
        %v2570 = vpop.permute.xlu0 %2569
        %v2571 = vsel %vm519, %v2540, 0
        %v2573 = vsel %vm519, %v2542, 0
        %v2575 = vsel %vm519, %v2544, 0
        %v2577 = vsel %vm519, %v2546, 0
        %v2579 = vsel %vm519, %v2548, 0
        %v2581 = vsel %vm519, %v2550, 0
        %v2583 = vsel %vm519, %v2552, 0
        %v2585 = vsel %vm519, %v2554, 0
        %v2587 = vsel %vm519, %v2556, 0
        %v2589 = vsel %vm519, %v2558, 0
        %v2591 = vsel %vm519, %v2560, 0
        %v2593 = vsel %vm519, %v2562, 0
        %v2595 = vsel %vm519, %v2564, 0
        %v2597 = vsel %vm519, %v2566, 0
        %v2599 = vsel %vm519, %v2568, 0
        %v2601 = vsel %vm519, %v2570, 0
        %2603 = vmatprep.subr.mxu0 0.0
        %2604 = vmatpush1.xpose.msra.mxu0 0.0
        %2605 = vmatprep.subr.mxu0 0.0
        %2606 = vmatpush1.xpose.msra.mxu0 0.0
        %2607 = vmatprep.subr.mxu0 0.0
        %2608 = vmatpush1.xpose.msra.mxu0 0.0
        %2609 = vmatprep.subr.mxu0 0.0
        %2610 = vmatpush1.xpose.msra.mxu0 0.0
        %2611 = vmatprep.subr.mxu0 0.0
        %2612 = vmatpush1.xpose.msra.mxu0 0.0
        %2613 = vmatprep.subr.mxu0 0.0
        %2614 = vmatpush1.xpose.msra.mxu0 0.0
        %2615 = vmatprep.subr.mxu0 0.0
        %2616 = vmatpush1.xpose.msra.mxu0 0.0
        %2617 = vmatprep.subr.mxu0 0.0
        %2618 = vmatpush1.xpose.msra.mxu0 0.0
        %2619 = vmatprep.subr.mxu0 0.0
        %2620 = vmatpush1.xpose.msra.mxu0 %v2601
        %2621 = vmatprep.subr.mxu0 0.0
        %2622 = vmatpush1.xpose.msra.mxu0 %v2599
        %2623 = vmatprep.subr.mxu0 0.0
        %2624 = vmatpush1.xpose.msra.mxu0 %v2597
        %2625 = vmatprep.subr.mxu0 0.0
        %2626 = vmatpush1.xpose.msra.mxu0 %v2595
        %2627 = vmatprep.subr.mxu0 0.0
        %2628 = vmatpush1.xpose.msra.mxu0 %v2593
        %2629 = vmatprep.subr.mxu0 0.0
        %2630 = vmatpush1.xpose.msra.mxu0 %v2591
        %2631 = vmatprep.subr.mxu0 0.0
        %2632 = vmatpush1.xpose.msra.mxu0 %v2589
        %2633 = vmatprep.subr.mxu0 0.0
        %2634 = vmatpush1.xpose.msra.mxu0 %v2587
        %2635 = vmatprep.subr.mxu0 0.0
        %2636 = vmatpush2.xpose.msra.mxu0 0.0
        %2637 = vmatprep.subr.mxu0 0.0
        %2638 = vmatpush2.xpose.msra.mxu0 0.0
        %2639 = vmatprep.subr.mxu0 0.0
        %2640 = vmatpush2.xpose.msra.mxu0 0.0
        %2641 = vmatprep.subr.mxu0 0.0
        %2642 = vmatpush2.xpose.msra.mxu0 0.0
        %2643 = vmatprep.subr.mxu0 0.0
        %2644 = vmatpush2.xpose.msra.mxu0 0.0
        %2645 = vmatprep.subr.mxu0 0.0
        %2646 = vmatpush2.xpose.msra.mxu0 0.0
        %2647 = vmatprep.subr.mxu0 0.0
        %2648 = vmatpush2.xpose.msra.mxu0 0.0
        %2649 = vmatprep.subr.mxu0 0.0
        %2650 = vmatpush2.xpose.msra.mxu0 0.0
        %2651 = vmatprep.subr.mxu0 0.0
        %2652 = vmatpush2.xpose.msra.mxu0 0.0
        %2653 = vmatprep.subr.mxu0 0.0
        %2654 = vmatpush2.xpose.msra.mxu0 0.0
        %2655 = vmatprep.subr.mxu0 0.0
        %2656 = vmatpush2.xpose.msra.mxu0 0.0
        %2657 = vmatprep.subr.mxu0 0.0
        %2658 = vmatpush2.xpose.msra.mxu0 0.0
        %2659 = vmatprep.subr.mxu0 0.0
        %2660 = vmatpush2.xpose.msra.mxu0 0.0
        %2661 = vmatprep.subr.mxu0 0.0
        %2662 = vmatpush2.xpose.msra.mxu0 0.0
        %2663 = vmatprep.subr.mxu0 0.0
        %2664 = vmatpush2.xpose.msra.mxu0 0.0
        %2665 = vmatprep.subr.mxu0 0.0
        %2666 = vmatpush2.xpose.msra.mxu0 0.0
        %2667 = vmatprep.mubr.f32.mxu0 0.0
        %2668 = vmatmul.mubr.f32.gmra.mxu0 %v2571
        %v2669 = vpop.f32.mrf.mxu0
        %v2670 = vadd.f32 0.0, %v2669
        %v2671 = vpop.f32.mrf.mxu0
        %2672 = vmatprep.mubr.f32.mxu0 0.0
        %2673 = vmatmul.mubr.f32.gmra.mxu0 %v2573
        %v2674 = vpop.f32.mrf.mxu0
        %v2675 = vadd.f32 0.0, %v2674
        %v2676 = vpop.f32.mrf.mxu0
        %2677 = vmatprep.mubr.f32.mxu0 0.0
        %2678 = vmatmul.mubr.f32.gmra.mxu0 %v2575
        %v2679 = vpop.f32.mrf.mxu0
        %v2680 = vadd.f32 0.0, %v2679
        %v2681 = vpop.f32.mrf.mxu0
        %2682 = vmatprep.mubr.f32.mxu0 0.0
        %2683 = vmatmul.mubr.f32.gmra.mxu0 %v2577
        %v2684 = vpop.f32.mrf.mxu0
        %v2685 = vadd.f32 0.0, %v2684
        %v2686 = vpop.f32.mrf.mxu0
        %2687 = vmatprep.mubr.f32.mxu0 0.0
        %2688 = vmatmul.mubr.f32.gmra.mxu0 %v2579
        %v2689 = vpop.f32.mrf.mxu0
        %v2690 = vadd.f32 0.0, %v2689
        %v2691 = vpop.f32.mrf.mxu0
        %2692 = vmatprep.mubr.f32.mxu0 0.0
        %2693 = vmatmul.mubr.f32.gmra.mxu0 %v2581
        %v2694 = vpop.f32.mrf.mxu0
        %v2695 = vadd.f32 0.0, %v2694
        %v2696 = vpop.f32.mrf.mxu0
        %2697 = vmatprep.mubr.f32.mxu0 0.0
        %2698 = vmatmul.mubr.f32.gmra.mxu0 %v2583
        %v2699 = vpop.f32.mrf.mxu0
        %v2700 = vadd.f32 0.0, %v2699
        %v2701 = vpop.f32.mrf.mxu0
        %2702 = vmatprep.mubr.f32.mxu0 0.0
        %2703 = vmatmul.mubr.f32.gmra.mxu0 %v2585
        %v2704 = vpop.f32.mrf.mxu0
        %v2705 = vadd.f32 0.0, %v2704
        %v2706 = vpop.f32.mrf.mxu0
        %2707 = vdwg.mxu0
        %v2708 = vsel %vm673, %v2670, -inf
        %2709 = vmax.xlane.f32.xlu0 %v2708
        %v2710 = vpop.xlane.xlu0 %2709
        %v2711 = vsel %vm673, %v2675, -inf
        %2712 = vmax.xlane.f32.xlu0 %v2711
        %v2713 = vpop.xlane.xlu0 %2712
        %v2714 = vsel %vm673, %v2680, -inf
        %2715 = vmax.xlane.f32.xlu0 %v2714
        %v2716 = vpop.xlane.xlu0 %2715
        %v2717 = vsel %vm673, %v2685, -inf
        %2718 = vmax.xlane.f32.xlu0 %v2717
        %v2719 = vpop.xlane.xlu0 %2718
        %v2720 = vsel %vm673, %v2690, -inf
        %2721 = vmax.xlane.f32.xlu0 %v2720
        %v2722 = vpop.xlane.xlu0 %2721
        %v2723 = vsel %vm673, %v2695, -inf
        %2724 = vmax.xlane.f32.xlu0 %v2723
        %v2725 = vpop.xlane.xlu0 %2724
        %v2726 = vsel %vm673, %v2700, -inf
        %2727 = vmax.xlane.f32.xlu0 %v2726
        %v2728 = vpop.xlane.xlu0 %2727
        %v2729 = vsel %vm673, %v2705, -inf
        %2730 = vmax.xlane.f32.xlu0 %v2729
        %v2731 = vpop.xlane.xlu0 %2730
        %v2732 = vsub.f32 %v2670, %v2710
        %v2733 = vsub.f32 %v2675, %v2713
        %v2734 = vsub.f32 %v2680, %v2716
        %v2735 = vsub.f32 %v2685, %v2719
        %v2736 = vsub.f32 %v2690, %v2722
        %v2737 = vsub.f32 %v2695, %v2725
        %v2738 = vsub.f32 %v2700, %v2728
        %v2739 = vsub.f32 %v2705, %v2731
        %v2740 = vmul.f32 %v2732, 1.442695
        %v2741 = vpow.pop %v2740
        %v2742 = vmul.f32 %v2733, 1.442695
        %v2743 = vpow.pop %v2742
        %v2744 = vmul.f32 %v2734, 1.442695
        %v2745 = vpow.pop %v2744
        %v2746 = vmul.f32 %v2735, 1.442695
        %v2747 = vpow.pop %v2746
        %v2748 = vmul.f32 %v2736, 1.442695
        %v2749 = vpow.pop %v2748
        %v2750 = vmul.f32 %v2737, 1.442695
        %v2751 = vpow.pop %v2750
        %v2752 = vmul.f32 %v2738, 1.442695
        %v2753 = vpow.pop %v2752
        %v2754 = vmul.f32 %v2739, 1.442695
        %v2755 = vpow.pop %v2754
        %v2756 = vsel %vm673, %v2741, 0.0
        %2757 = vadd.xlane.f32.xlu0 %v2756
        %v2758 = vpop.xlane.xlu0 %2757
        %v2759 = vsel %vm673, %v2743, 0.0
        %2760 = vadd.xlane.f32.xlu0 %v2759
        %v2761 = vpop.xlane.xlu0 %2760
        %v2762 = vsel %vm673, %v2745, 0.0
        %2763 = vadd.xlane.f32.xlu0 %v2762
        %v2764 = vpop.xlane.xlu0 %2763
        %v2765 = vsel %vm673, %v2747, 0.0
        %2766 = vadd.xlane.f32.xlu0 %v2765
        %v2767 = vpop.xlane.xlu0 %2766
        %v2768 = vsel %vm673, %v2749, 0.0
        %2769 = vadd.xlane.f32.xlu0 %v2768
        %v2770 = vpop.xlane.xlu0 %2769
        %v2771 = vsel %vm673, %v2751, 0.0
        %2772 = vadd.xlane.f32.xlu0 %v2771
        %v2773 = vpop.xlane.xlu0 %2772
        %v2774 = vsel %vm673, %v2753, 0.0
        %2775 = vadd.xlane.f32.xlu0 %v2774
        %v2776 = vpop.xlane.xlu0 %2775
        %v2777 = vsel %vm673, %v2755, 0.0
        %2778 = vadd.xlane.f32.xlu0 %v2777
        %v2779 = vpop.xlane.xlu0 %2778
        %2780 = vrot.lane.b32.xlu0 %v481, 48
        %v2781 = vpop.permute.xlu0 %2780
        %2782 = vrot.lane.b32.xlu0 %v486, 48
        %v2783 = vpop.permute.xlu0 %2782
        %2784 = vrot.lane.b32.xlu0 %v491, 48
        %v2785 = vpop.permute.xlu0 %2784
        %2786 = vrot.lane.b32.xlu0 %v496, 48
        %v2787 = vpop.permute.xlu0 %2786
        %2788 = vrot.lane.b32.xlu0 %v501, 48
        %v2789 = vpop.permute.xlu0 %2788
        %2790 = vrot.lane.b32.xlu0 %v506, 48
        %v2791 = vpop.permute.xlu0 %2790
        %2792 = vrot.lane.b32.xlu0 %v511, 48
        %v2793 = vpop.permute.xlu0 %2792
        %2794 = vrot.lane.b32.xlu0 %v516, 48
        %v2795 = vpop.permute.xlu0 %2794
        %v2805 = vsel %vm673, %v2741, 0
        %v2808 = vsel %vm673, %v2743, 0
        %v2811 = vsel %vm673, %v2745, 0
        %v2814 = vsel %vm673, %v2747, 0
        %v2817 = vsel %vm673, %v2749, 0
        %v2820 = vsel %vm673, %v2751, 0
        %v2823 = vsel %vm673, %v2753, 0
        %v2826 = vsel %vm673, %v2755, 0
        %2828 = vmatprep.subr.mxu0 0.0
        %2829 = vmatpush1.msra.mxu0 0.0
        %2830 = vmatprep.subr.mxu0 0.0
        %2831 = vmatpush1.msra.mxu0 0.0
        %2832 = vmatprep.subr.mxu0 0.0
        %2833 = vmatpush1.msra.mxu0 0.0
        %2834 = vmatprep.subr.mxu0 0.0
        %2835 = vmatpush1.msra.mxu0 0.0
        %2836 = vmatprep.subr.mxu0 0.0
        %2837 = vmatpush1.msra.mxu0 0.0
        %2838 = vmatprep.subr.mxu0 0.0
        %2839 = vmatpush1.msra.mxu0 0.0
        %2840 = vmatprep.subr.mxu0 0.0
        %2841 = vmatpush1.msra.mxu0 0.0
        %2842 = vmatprep.subr.mxu0 0.0
        %2843 = vmatpush1.msra.mxu0 0.0
        %2844 = vmatprep.subr.mxu0 0.0
        %2845 = vmatpush1.msra.mxu0 %v2795
        %2846 = vmatprep.subr.mxu0 0.0
        %2847 = vmatpush1.msra.mxu0 %v2793
        %2848 = vmatprep.subr.mxu0 0.0
        %2849 = vmatpush1.msra.mxu0 %v2791
        %2850 = vmatprep.subr.mxu0 0.0
        %2851 = vmatpush1.msra.mxu0 %v2789
        %2852 = vmatprep.subr.mxu0 0.0
        %2853 = vmatpush1.msra.mxu0 %v2787
        %2854 = vmatprep.subr.mxu0 0.0
        %2855 = vmatpush1.msra.mxu0 %v2785
        %2856 = vmatprep.subr.mxu0 0.0
        %2857 = vmatpush1.msra.mxu0 %v2783
        %2858 = vmatprep.subr.mxu0 0.0
        %2859 = vmatpush1.msra.mxu0 %v2781
        %2860 = vmatprep.subr.mxu0 0.0
        %2861 = vmatpush2.msra.mxu0 0.0
        %2862 = vmatprep.subr.mxu0 0.0
        %2863 = vmatpush2.msra.mxu0 0.0
        %2864 = vmatprep.subr.mxu0 0.0
        %2865 = vmatpush2.msra.mxu0 0.0
        %2866 = vmatprep.subr.mxu0 0.0
        %2867 = vmatpush2.msra.mxu0 0.0
        %2868 = vmatprep.subr.mxu0 0.0
        %2869 = vmatpush2.msra.mxu0 0.0
        %2870 = vmatprep.subr.mxu0 0.0
        %2871 = vmatpush2.msra.mxu0 0.0
        %2872 = vmatprep.subr.mxu0 0.0
        %2873 = vmatpush2.msra.mxu0 0.0
        %2874 = vmatprep.subr.mxu0 0.0
        %2875 = vmatpush2.msra.mxu0 0.0
        %2876 = vmatprep.subr.mxu0 0.0
        %2877 = vmatpush2.msra.mxu0 0.0
        %2878 = vmatprep.subr.mxu0 0.0
        %2879 = vmatpush2.msra.mxu0 0.0
        %2880 = vmatprep.subr.mxu0 0.0
        %2881 = vmatpush2.msra.mxu0 0.0
        %2882 = vmatprep.subr.mxu0 0.0
        %2883 = vmatpush2.msra.mxu0 0.0
        %2884 = vmatprep.subr.mxu0 0.0
        %2885 = vmatpush2.msra.mxu0 0.0
        %2886 = vmatprep.subr.mxu0 0.0
        %2887 = vmatpush2.msra.mxu0 0.0
        %2888 = vmatprep.subr.mxu0 0.0
        %2889 = vmatpush2.msra.mxu0 0.0
        %2890 = vmatprep.subr.mxu0 0.0
        %2891 = vmatpush2.msra.mxu0 0.0
        %2892 = vmatprep.mubr.f32.mxu0 0.0
        %2893 = vmatmul.mubr.f32.gmra.mxu0 %v2805
        %v2894 = vpop.f32.mrf.mxu0
        %v2895 = vadd.f32 0.0, %v2894
        %v2896 = vpop.f32.mrf.mxu0
        %2897 = vmatprep.mubr.f32.mxu0 0.0
        %2898 = vmatmul.mubr.f32.gmra.mxu0 %v2808
        %v2899 = vpop.f32.mrf.mxu0
        %v2900 = vadd.f32 0.0, %v2899
        %v2901 = vpop.f32.mrf.mxu0
        %2902 = vmatprep.mubr.f32.mxu0 0.0
        %2903 = vmatmul.mubr.f32.gmra.mxu0 %v2811
        %v2904 = vpop.f32.mrf.mxu0
        %v2905 = vadd.f32 0.0, %v2904
        %v2906 = vpop.f32.mrf.mxu0
        %2907 = vmatprep.mubr.f32.mxu0 0.0
        %2908 = vmatmul.mubr.f32.gmra.mxu0 %v2814
        %v2909 = vpop.f32.mrf.mxu0
        %v2910 = vadd.f32 0.0, %v2909
        %v2911 = vpop.f32.mrf.mxu0
        %2912 = vmatprep.mubr.f32.mxu0 0.0
        %2913 = vmatmul.mubr.f32.gmra.mxu0 %v2817
        %v2914 = vpop.f32.mrf.mxu0
        %v2915 = vadd.f32 0.0, %v2914
        %v2916 = vpop.f32.mrf.mxu0
        %2917 = vmatprep.mubr.f32.mxu0 0.0
        %2918 = vmatmul.mubr.f32.gmra.mxu0 %v2820
        %v2919 = vpop.f32.mrf.mxu0
        %v2920 = vadd.f32 0.0, %v2919
        %v2921 = vpop.f32.mrf.mxu0
        %2922 = vmatprep.mubr.f32.mxu0 0.0
        %2923 = vmatmul.mubr.f32.gmra.mxu0 %v2823
        %v2924 = vpop.f32.mrf.mxu0
        %v2925 = vadd.f32 0.0, %v2924
        %v2926 = vpop.f32.mrf.mxu0
        %2927 = vmatprep.mubr.f32.mxu0 0.0
        %2928 = vmatmul.mubr.f32.gmra.mxu0 %v2826
        %v2929 = vpop.f32.mrf.mxu0
        %v2930 = vadd.f32 0.0, %v2929
        %v2931 = vpop.f32.mrf.mxu0
        %2932 = vdwg.mxu0
        %v2933 = vrcp.pop %v2758
        %v2934 = vrcp.pop %v2761
        %v2935 = vrcp.pop %v2764
        %v2936 = vrcp.pop %v2767
        %v2937 = vrcp.pop %v2770
        %v2938 = vrcp.pop %v2773
        %v2939 = vrcp.pop %v2776
        %v2940 = vrcp.pop %v2779
        %v2941 = vmul.f32 %v2895, %v2933
        %v2942 = vmul.f32 %v2900, %v2934
        %v2943 = vmul.f32 %v2905, %v2935
        %v2944 = vmul.f32 %v2910, %v2936
        %v2945 = vmul.f32 %v2915, %v2937
        %v2946 = vmul.f32 %v2920, %v2938
        %v2947 = vmul.f32 %v2925, %v2939
        %v2948 = vmul.f32 %v2930, %v2940
        %2949 = vrot.lane.b32.xlu0 %v368, 32
        %v2950 = vpop.permute.xlu0 %2949
        %2951 = vrot.lane.b32.xlu0 %v374, 32
        %v2952 = vpop.permute.xlu0 %2951
        %2953 = vrot.lane.b32.xlu0 %v380, 32
        %v2954 = vpop.permute.xlu0 %2953
        %2955 = vrot.lane.b32.xlu0 %v386, 32
        %v2956 = vpop.permute.xlu0 %2955
        %2957 = vrot.lane.b32.xlu0 %v392, 32
        %v2958 = vpop.permute.xlu0 %2957
        %2959 = vrot.lane.b32.xlu0 %v398, 32
        %v2960 = vpop.permute.xlu0 %2959
        %2961 = vrot.lane.b32.xlu0 %v404, 32
        %v2962 = vpop.permute.xlu0 %2961
        %2963 = vrot.lane.b32.xlu0 %v410, 32
        %v2964 = vpop.permute.xlu0 %2963
        %2965 = vrot.lane.b32.xlu0 %v370, 32
        %v2966 = vpop.permute.xlu0 %2965
        %2967 = vrot.lane.b32.xlu0 %v376, 32
        %v2968 = vpop.permute.xlu0 %2967
        %2969 = vrot.lane.b32.xlu0 %v382, 32
        %v2970 = vpop.permute.xlu0 %2969
        %2971 = vrot.lane.b32.xlu0 %v388, 32
        %v2972 = vpop.permute.xlu0 %2971
        %2973 = vrot.lane.b32.xlu0 %v394, 32
        %v2974 = vpop.permute.xlu0 %2973
        %2975 = vrot.lane.b32.xlu0 %v400, 32
        %v2976 = vpop.permute.xlu0 %2975
        %2977 = vrot.lane.b32.xlu0 %v406, 32
        %v2978 = vpop.permute.xlu0 %2977
        %2979 = vrot.lane.b32.xlu0 %v412, 32
        %v2980 = vpop.permute.xlu0 %2979
        %v2981 = vsel %vm519, %v2950, 0
        %v2983 = vsel %vm519, %v2952, 0
        %v2985 = vsel %vm519, %v2954, 0
        %v2987 = vsel %vm519, %v2956, 0
        %v2989 = vsel %vm519, %v2958, 0
        %v2991 = vsel %vm519, %v2960, 0
        %v2993 = vsel %vm519, %v2962, 0
        %v2995 = vsel %vm519, %v2964, 0
        %v2997 = vsel %vm519, %v2966, 0
        %v2999 = vsel %vm519, %v2968, 0
        %v3001 = vsel %vm519, %v2970, 0
        %v3003 = vsel %vm519, %v2972, 0
        %v3005 = vsel %vm519, %v2974, 0
        %v3007 = vsel %vm519, %v2976, 0
        %v3009 = vsel %vm519, %v2978, 0
        %v3011 = vsel %vm519, %v2980, 0
        %3013 = vmatprep.subr.mxu0 0.0
        %3014 = vmatpush1.xpose.msra.mxu0 0.0
        %3015 = vmatprep.subr.mxu0 0.0
        %3016 = vmatpush1.xpose.msra.mxu0 0.0
        %3017 = vmatprep.subr.mxu0 0.0
        %3018 = vmatpush1.xpose.msra.mxu0 0.0
        %3019 = vmatprep.subr.mxu0 0.0
        %3020 = vmatpush1.xpose.msra.mxu0 0.0
        %3021 = vmatprep.subr.mxu0 0.0
        %3022 = vmatpush1.xpose.msra.mxu0 0.0
        %3023 = vmatprep.subr.mxu0 0.0
        %3024 = vmatpush1.xpose.msra.mxu0 0.0
        %3025 = vmatprep.subr.mxu0 0.0
        %3026 = vmatpush1.xpose.msra.mxu0 0.0
        %3027 = vmatprep.subr.mxu0 0.0
        %3028 = vmatpush1.xpose.msra.mxu0 0.0
        %3029 = vmatprep.subr.mxu0 0.0
        %3030 = vmatpush1.xpose.msra.mxu0 %v3011
        %3031 = vmatprep.subr.mxu0 0.0
        %3032 = vmatpush1.xpose.msra.mxu0 %v3009
        %3033 = vmatprep.subr.mxu0 0.0
        %3034 = vmatpush1.xpose.msra.mxu0 %v3007
        %3035 = vmatprep.subr.mxu0 0.0
        %3036 = vmatpush1.xpose.msra.mxu0 %v3005
        %3037 = vmatprep.subr.mxu0 0.0
        %3038 = vmatpush1.xpose.msra.mxu0 %v3003
        %3039 = vmatprep.subr.mxu0 0.0
        %3040 = vmatpush1.xpose.msra.mxu0 %v3001
        %3041 = vmatprep.subr.mxu0 0.0
        %3042 = vmatpush1.xpose.msra.mxu0 %v2999
        %3043 = vmatprep.subr.mxu0 0.0
        %3044 = vmatpush1.xpose.msra.mxu0 %v2997
        %3045 = vmatprep.subr.mxu0 0.0
        %3046 = vmatpush2.xpose.msra.mxu0 0.0
        %3047 = vmatprep.subr.mxu0 0.0
        %3048 = vmatpush2.xpose.msra.mxu0 0.0
        %3049 = vmatprep.subr.mxu0 0.0
        %3050 = vmatpush2.xpose.msra.mxu0 0.0
        %3051 = vmatprep.subr.mxu0 0.0
        %3052 = vmatpush2.xpose.msra.mxu0 0.0
        %3053 = vmatprep.subr.mxu0 0.0
        %3054 = vmatpush2.xpose.msra.mxu0 0.0
        %3055 = vmatprep.subr.mxu0 0.0
        %3056 = vmatpush2.xpose.msra.mxu0 0.0
        %3057 = vmatprep.subr.mxu0 0.0
        %3058 = vmatpush2.xpose.msra.mxu0 0.0
        %3059 = vmatprep.subr.mxu0 0.0
        %3060 = vmatpush2.xpose.msra.mxu0 0.0
        %3061 = vmatprep.subr.mxu0 0.0
        %3062 = vmatpush2.xpose.msra.mxu0 0.0
        %3063 = vmatprep.subr.mxu0 0.0
        %3064 = vmatpush2.xpose.msra.mxu0 0.0
        %3065 = vmatprep.subr.mxu0 0.0
        %3066 = vmatpush2.xpose.msra.mxu0 0.0
        %3067 = vmatprep.subr.mxu0 0.0
        %3068 = vmatpush2.xpose.msra.mxu0 0.0
        %3069 = vmatprep.subr.mxu0 0.0
        %3070 = vmatpush2.xpose.msra.mxu0 0.0
        %3071 = vmatprep.subr.mxu0 0.0
        %3072 = vmatpush2.xpose.msra.mxu0 0.0
        %3073 = vmatprep.subr.mxu0 0.0
        %3074 = vmatpush2.xpose.msra.mxu0 0.0
        %3075 = vmatprep.subr.mxu0 0.0
        %3076 = vmatpush2.xpose.msra.mxu0 0.0
        %3077 = vmatprep.mubr.f32.mxu0 0.0
        %3078 = vmatmul.mubr.f32.gmra.mxu0 %v2981
        %v3079 = vpop.f32.mrf.mxu0
        %v3080 = vadd.f32 0.0, %v3079
        %v3081 = vpop.f32.mrf.mxu0
        %3082 = vmatprep.mubr.f32.mxu0 0.0
        %3083 = vmatmul.mubr.f32.gmra.mxu0 %v2983
        %v3084 = vpop.f32.mrf.mxu0
        %v3085 = vadd.f32 0.0, %v3084
        %v3086 = vpop.f32.mrf.mxu0
        %3087 = vmatprep.mubr.f32.mxu0 0.0
        %3088 = vmatmul.mubr.f32.gmra.mxu0 %v2985
        %v3089 = vpop.f32.mrf.mxu0
        %v3090 = vadd.f32 0.0, %v3089
        %v3091 = vpop.f32.mrf.mxu0
        %3092 = vmatprep.mubr.f32.mxu0 0.0
        %3093 = vmatmul.mubr.f32.gmra.mxu0 %v2987
        %v3094 = vpop.f32.mrf.mxu0
        %v3095 = vadd.f32 0.0, %v3094
        %v3096 = vpop.f32.mrf.mxu0
        %3097 = vmatprep.mubr.f32.mxu0 0.0
        %3098 = vmatmul.mubr.f32.gmra.mxu0 %v2989
        %v3099 = vpop.f32.mrf.mxu0
        %v3100 = vadd.f32 0.0, %v3099
        %v3101 = vpop.f32.mrf.mxu0
        %3102 = vmatprep.mubr.f32.mxu0 0.0
        %3103 = vmatmul.mubr.f32.gmra.mxu0 %v2991
        %v3104 = vpop.f32.mrf.mxu0
        %v3105 = vadd.f32 0.0, %v3104
        %v3106 = vpop.f32.mrf.mxu0
        %3107 = vmatprep.mubr.f32.mxu0 0.0
        %3108 = vmatmul.mubr.f32.gmra.mxu0 %v2993
        %v3109 = vpop.f32.mrf.mxu0
        %v3110 = vadd.f32 0.0, %v3109
        %v3111 = vpop.f32.mrf.mxu0
        %3112 = vmatprep.mubr.f32.mxu0 0.0
        %3113 = vmatmul.mubr.f32.gmra.mxu0 %v2995
        %v3114 = vpop.f32.mrf.mxu0
        %v3115 = vadd.f32 0.0, %v3114
        %v3116 = vpop.f32.mrf.mxu0
        %3117 = vdwg.mxu0
        %v3118 = vsel %vm673, %v3080, -inf
        %3119 = vmax.xlane.f32.xlu0 %v3118
        %v3120 = vpop.xlane.xlu0 %3119
        %v3121 = vsel %vm673, %v3085, -inf
        %3122 = vmax.xlane.f32.xlu0 %v3121
        %v3123 = vpop.xlane.xlu0 %3122
        %v3124 = vsel %vm673, %v3090, -inf
        %3125 = vmax.xlane.f32.xlu0 %v3124
        %v3126 = vpop.xlane.xlu0 %3125
        %v3127 = vsel %vm673, %v3095, -inf
        %3128 = vmax.xlane.f32.xlu0 %v3127
        %v3129 = vpop.xlane.xlu0 %3128
        %v3130 = vsel %vm673, %v3100, -inf
        %3131 = vmax.xlane.f32.xlu0 %v3130
        %v3132 = vpop.xlane.xlu0 %3131
        %v3133 = vsel %vm673, %v3105, -inf
        %3134 = vmax.xlane.f32.xlu0 %v3133
        %v3135 = vpop.xlane.xlu0 %3134
        %v3136 = vsel %vm673, %v3110, -inf
        %3137 = vmax.xlane.f32.xlu0 %v3136
        %v3138 = vpop.xlane.xlu0 %3137
        %v3139 = vsel %vm673, %v3115, -inf
        %3140 = vmax.xlane.f32.xlu0 %v3139
        %v3141 = vpop.xlane.xlu0 %3140
        %v3142 = vsub.f32 %v3080, %v3120
        %v3143 = vsub.f32 %v3085, %v3123
        %v3144 = vsub.f32 %v3090, %v3126
        %v3145 = vsub.f32 %v3095, %v3129
        %v3146 = vsub.f32 %v3100, %v3132
        %v3147 = vsub.f32 %v3105, %v3135
        %v3148 = vsub.f32 %v3110, %v3138
        %v3149 = vsub.f32 %v3115, %v3141
        %v3150 = vmul.f32 %v3142, 1.442695
        %v3151 = vpow.pop %v3150
        %v3152 = vmul.f32 %v3143, 1.442695
        %v3153 = vpow.pop %v3152
        %v3154 = vmul.f32 %v3144, 1.442695
        %v3155 = vpow.pop %v3154
        %v3156 = vmul.f32 %v3145, 1.442695
        %v3157 = vpow.pop %v3156
        %v3158 = vmul.f32 %v3146, 1.442695
        %v3159 = vpow.pop %v3158
        %v3160 = vmul.f32 %v3147, 1.442695
        %v3161 = vpow.pop %v3160
        %v3162 = vmul.f32 %v3148, 1.442695
        %v3163 = vpow.pop %v3162
        %v3164 = vmul.f32 %v3149, 1.442695
        %v3165 = vpow.pop %v3164
        %v3166 = vsel %vm673, %v3151, 0.0
        %3167 = vadd.xlane.f32.xlu0 %v3166
        %v3168 = vpop.xlane.xlu0 %3167
        %v3169 = vsel %vm673, %v3153, 0.0
        %3170 = vadd.xlane.f32.xlu0 %v3169
        %v3171 = vpop.xlane.xlu0 %3170
        %v3172 = vsel %vm673, %v3155, 0.0
        %3173 = vadd.xlane.f32.xlu0 %v3172
        %v3174 = vpop.xlane.xlu0 %3173
        %v3175 = vsel %vm673, %v3157, 0.0
        %3176 = vadd.xlane.f32.xlu0 %v3175
        %v3177 = vpop.xlane.xlu0 %3176
        %v3178 = vsel %vm673, %v3159, 0.0
        %3179 = vadd.xlane.f32.xlu0 %v3178
        %v3180 = vpop.xlane.xlu0 %3179
        %v3181 = vsel %vm673, %v3161, 0.0
        %3182 = vadd.xlane.f32.xlu0 %v3181
        %v3183 = vpop.xlane.xlu0 %3182
        %v3184 = vsel %vm673, %v3163, 0.0
        %3185 = vadd.xlane.f32.xlu0 %v3184
        %v3186 = vpop.xlane.xlu0 %3185
        %v3187 = vsel %vm673, %v3165, 0.0
        %3188 = vadd.xlane.f32.xlu0 %v3187
        %v3189 = vpop.xlane.xlu0 %3188
        %3190 = vrot.lane.b32.xlu0 %v481, 32
        %v3191 = vpop.permute.xlu0 %3190
        %3192 = vrot.lane.b32.xlu0 %v486, 32
        %v3193 = vpop.permute.xlu0 %3192
        %3194 = vrot.lane.b32.xlu0 %v491, 32
        %v3195 = vpop.permute.xlu0 %3194
        %3196 = vrot.lane.b32.xlu0 %v496, 32
        %v3197 = vpop.permute.xlu0 %3196
        %3198 = vrot.lane.b32.xlu0 %v501, 32
        %v3199 = vpop.permute.xlu0 %3198
        %3200 = vrot.lane.b32.xlu0 %v506, 32
        %v3201 = vpop.permute.xlu0 %3200
        %3202 = vrot.lane.b32.xlu0 %v511, 32
        %v3203 = vpop.permute.xlu0 %3202
        %3204 = vrot.lane.b32.xlu0 %v516, 32
        %v3205 = vpop.permute.xlu0 %3204
        %v3215 = vsel %vm673, %v3151, 0
        %v3218 = vsel %vm673, %v3153, 0
        %v3221 = vsel %vm673, %v3155, 0
        %v3224 = vsel %vm673, %v3157, 0
        %v3227 = vsel %vm673, %v3159, 0
        %v3230 = vsel %vm673, %v3161, 0
        %v3233 = vsel %vm673, %v3163, 0
        %v3236 = vsel %vm673, %v3165, 0
        %3238 = vmatprep.subr.mxu0 0.0
        %3239 = vmatpush1.msra.mxu0 0.0
        %3240 = vmatprep.subr.mxu0 0.0
        %3241 = vmatpush1.msra.mxu0 0.0
        %3242 = vmatprep.subr.mxu0 0.0
        %3243 = vmatpush1.msra.mxu0 0.0
        %3244 = vmatprep.subr.mxu0 0.0
        %3245 = vmatpush1.msra.mxu0 0.0
        %3246 = vmatprep.subr.mxu0 0.0
        %3247 = vmatpush1.msra.mxu0 0.0
        %3248 = vmatprep.subr.mxu0 0.0
        %3249 = vmatpush1.msra.mxu0 0.0
        %3250 = vmatprep.subr.mxu0 0.0
        %3251 = vmatpush1.msra.mxu0 0.0
        %3252 = vmatprep.subr.mxu0 0.0
        %3253 = vmatpush1.msra.mxu0 0.0
        %3254 = vmatprep.subr.mxu0 0.0
        %3255 = vmatpush1.msra.mxu0 %v3205
        %3256 = vmatprep.subr.mxu0 0.0
        %3257 = vmatpush1.msra.mxu0 %v3203
        %3258 = vmatprep.subr.mxu0 0.0
        %3259 = vmatpush1.msra.mxu0 %v3201
        %3260 = vmatprep.subr.mxu0 0.0
        %3261 = vmatpush1.msra.mxu0 %v3199
        %3262 = vmatprep.subr.mxu0 0.0
        %3263 = vmatpush1.msra.mxu0 %v3197
        %3264 = vmatprep.subr.mxu0 0.0
        %3265 = vmatpush1.msra.mxu0 %v3195
        %3266 = vmatprep.subr.mxu0 0.0
        %3267 = vmatpush1.msra.mxu0 %v3193
        %3268 = vmatprep.subr.mxu0 0.0
        %3269 = vmatpush1.msra.mxu0 %v3191
        %3270 = vmatprep.subr.mxu0 0.0
        %3271 = vmatpush2.msra.mxu0 0.0
        %3272 = vmatprep.subr.mxu0 0.0
        %3273 = vmatpush2.msra.mxu0 0.0
        %3274 = vmatprep.subr.mxu0 0.0
        %3275 = vmatpush2.msra.mxu0 0.0
        %3276 = vmatprep.subr.mxu0 0.0
        %3277 = vmatpush2.msra.mxu0 0.0
        %3278 = vmatprep.subr.mxu0 0.0
        %3279 = vmatpush2.msra.mxu0 0.0
        %3280 = vmatprep.subr.mxu0 0.0
        %3281 = vmatpush2.msra.mxu0 0.0
        %3282 = vmatprep.subr.mxu0 0.0
        %3283 = vmatpush2.msra.mxu0 0.0
        %3284 = vmatprep.subr.mxu0 0.0
        %3285 = vmatpush2.msra.mxu0 0.0
        %3286 = vmatprep.subr.mxu0 0.0
        %3287 = vmatpush2.msra.mxu0 0.0
        %3288 = vmatprep.subr.mxu0 0.0
        %3289 = vmatpush2.msra.mxu0 0.0
        %3290 = vmatprep.subr.mxu0 0.0
        %3291 = vmatpush2.msra.mxu0 0.0
        %3292 = vmatprep.subr.mxu0 0.0
        %3293 = vmatpush2.msra.mxu0 0.0
        %3294 = vmatprep.subr.mxu0 0.0
        %3295 = vmatpush2.msra.mxu0 0.0
        %3296 = vmatprep.subr.mxu0 0.0
        %3297 = vmatpush2.msra.mxu0 0.0
        %3298 = vmatprep.subr.mxu0 0.0
        %3299 = vmatpush2.msra.mxu0 0.0
        %3300 = vmatprep.subr.mxu0 0.0
        %3301 = vmatpush2.msra.mxu0 0.0
        %3302 = vmatprep.mubr.f32.mxu0 0.0
        %3303 = vmatmul.mubr.f32.gmra.mxu0 %v3215
        %v3304 = vpop.f32.mrf.mxu0
        %v3305 = vadd.f32 0.0, %v3304
        %v3306 = vpop.f32.mrf.mxu0
        %3307 = vmatprep.mubr.f32.mxu0 0.0
        %3308 = vmatmul.mubr.f32.gmra.mxu0 %v3218
        %v3309 = vpop.f32.mrf.mxu0
        %v3310 = vadd.f32 0.0, %v3309
        %v3311 = vpop.f32.mrf.mxu0
        %3312 = vmatprep.mubr.f32.mxu0 0.0
        %3313 = vmatmul.mubr.f32.gmra.mxu0 %v3221
        %v3314 = vpop.f32.mrf.mxu0
        %v3315 = vadd.f32 0.0, %v3314
        %v3316 = vpop.f32.mrf.mxu0
        %3317 = vmatprep.mubr.f32.mxu0 0.0
        %3318 = vmatmul.mubr.f32.gmra.mxu0 %v3224
        %v3319 = vpop.f32.mrf.mxu0
        %v3320 = vadd.f32 0.0, %v3319
        %v3321 = vpop.f32.mrf.mxu0
        %3322 = vmatprep.mubr.f32.mxu0 0.0
        %3323 = vmatmul.mubr.f32.gmra.mxu0 %v3227
        %v3324 = vpop.f32.mrf.mxu0
        %v3325 = vadd.f32 0.0, %v3324
        %v3326 = vpop.f32.mrf.mxu0
        %3327 = vmatprep.mubr.f32.mxu0 0.0
        %3328 = vmatmul.mubr.f32.gmra.mxu0 %v3230
        %v3329 = vpop.f32.mrf.mxu0
        %v3330 = vadd.f32 0.0, %v3329
        %v3331 = vpop.f32.mrf.mxu0
        %3332 = vmatprep.mubr.f32.mxu0 0.0
        %3333 = vmatmul.mubr.f32.gmra.mxu0 %v3233
        %v3334 = vpop.f32.mrf.mxu0
        %v3335 = vadd.f32 0.0, %v3334
        %v3336 = vpop.f32.mrf.mxu0
        %3337 = vmatprep.mubr.f32.mxu0 0.0
        %3338 = vmatmul.mubr.f32.gmra.mxu0 %v3236
        %v3339 = vpop.f32.mrf.mxu0
        %v3340 = vadd.f32 0.0, %v3339
        %v3341 = vpop.f32.mrf.mxu0
        %3342 = vdwg.mxu0
        %v3343 = vrcp.pop %v3168
        %v3344 = vrcp.pop %v3171
        %v3345 = vrcp.pop %v3174
        %v3346 = vrcp.pop %v3177
        %v3347 = vrcp.pop %v3180
        %v3348 = vrcp.pop %v3183
        %v3349 = vrcp.pop %v3186
        %v3350 = vrcp.pop %v3189
        %v3351 = vmul.f32 %v3305, %v3343
        %v3352 = vmul.f32 %v3310, %v3344
        %v3353 = vmul.f32 %v3315, %v3345
        %v3354 = vmul.f32 %v3320, %v3346
        %v3355 = vmul.f32 %v3325, %v3347
        %v3356 = vmul.f32 %v3330, %v3348
        %v3357 = vmul.f32 %v3335, %v3349
        %v3358 = vmul.f32 %v3340, %v3350
        %3359 = vrot.lane.b32.xlu0 %v368, 16
        %v3360 = vpop.permute.xlu0 %3359
        %3361 = vrot.lane.b32.xlu0 %v374, 16
        %v3362 = vpop.permute.xlu0 %3361
        %3363 = vrot.lane.b32.xlu0 %v380, 16
        %v3364 = vpop.permute.xlu0 %3363
        %3365 = vrot.lane.b32.xlu0 %v386, 16
        %v3366 = vpop.permute.xlu0 %3365
        %3367 = vrot.lane.b32.xlu0 %v392, 16
        %v3368 = vpop.permute.xlu0 %3367
        %3369 = vrot.lane.b32.xlu0 %v398, 16
        %v3370 = vpop.permute.xlu0 %3369
        %3371 = vrot.lane.b32.xlu0 %v404, 16
        %v3372 = vpop.permute.xlu0 %3371
        %3373 = vrot.lane.b32.xlu0 %v410, 16
        %v3374 = vpop.permute.xlu0 %3373
        %3375 = vrot.lane.b32.xlu0 %v370, 16
        %v3376 = vpop.permute.xlu0 %3375
        %3377 = vrot.lane.b32.xlu0 %v376, 16
        %v3378 = vpop.permute.xlu0 %3377
        %3379 = vrot.lane.b32.xlu0 %v382, 16
        %v3380 = vpop.permute.xlu0 %3379
        %3381 = vrot.lane.b32.xlu0 %v388, 16
        %v3382 = vpop.permute.xlu0 %3381
        %3383 = vrot.lane.b32.xlu0 %v394, 16
        %v3384 = vpop.permute.xlu0 %3383
        %3385 = vrot.lane.b32.xlu0 %v400, 16
        %v3386 = vpop.permute.xlu0 %3385
        %3387 = vrot.lane.b32.xlu0 %v406, 16
        %v3388 = vpop.permute.xlu0 %3387
        %3389 = vrot.lane.b32.xlu0 %v412, 16
        %v3390 = vpop.permute.xlu0 %3389
        %v3391 = vsel %vm519, %v3360, 0
        %v3393 = vsel %vm519, %v3362, 0
        %v3395 = vsel %vm519, %v3364, 0
        %v3397 = vsel %vm519, %v3366, 0
        %v3399 = vsel %vm519, %v3368, 0
        %v3401 = vsel %vm519, %v3370, 0
        %v3403 = vsel %vm519, %v3372, 0
        %v3405 = vsel %vm519, %v3374, 0
        %v3407 = vsel %vm519, %v3376, 0
        %v3409 = vsel %vm519, %v3378, 0
        %v3411 = vsel %vm519, %v3380, 0
        %v3413 = vsel %vm519, %v3382, 0
        %v3415 = vsel %vm519, %v3384, 0
        %v3417 = vsel %vm519, %v3386, 0
        %v3419 = vsel %vm519, %v3388, 0
        %v3421 = vsel %vm519, %v3390, 0
        %3423 = vmatprep.subr.mxu0 0.0
        %3424 = vmatpush1.xpose.msra.mxu0 0.0
        %3425 = vmatprep.subr.mxu0 0.0
        %3426 = vmatpush1.xpose.msra.mxu0 0.0
        %3427 = vmatprep.subr.mxu0 0.0
        %3428 = vmatpush1.xpose.msra.mxu0 0.0
        %3429 = vmatprep.subr.mxu0 0.0
        %3430 = vmatpush1.xpose.msra.mxu0 0.0
        %3431 = vmatprep.subr.mxu0 0.0
        %3432 = vmatpush1.xpose.msra.mxu0 0.0
        %3433 = vmatprep.subr.mxu0 0.0
        %3434 = vmatpush1.xpose.msra.mxu0 0.0
        %3435 = vmatprep.subr.mxu0 0.0
        %3436 = vmatpush1.xpose.msra.mxu0 0.0
        %3437 = vmatprep.subr.mxu0 0.0
        %3438 = vmatpush1.xpose.msra.mxu0 0.0
        %3439 = vmatprep.subr.mxu0 0.0
        %3440 = vmatpush1.xpose.msra.mxu0 %v3421
        %3441 = vmatprep.subr.mxu0 0.0
        %3442 = vmatpush1.xpose.msra.mxu0 %v3419
        %3443 = vmatprep.subr.mxu0 0.0
        %3444 = vmatpush1.xpose.msra.mxu0 %v3417
        %3445 = vmatprep.subr.mxu0 0.0
        %3446 = vmatpush1.xpose.msra.mxu0 %v3415
        %3447 = vmatprep.subr.mxu0 0.0
        %3448 = vmatpush1.xpose.msra.mxu0 %v3413
        %3449 = vmatprep.subr.mxu0 0.0
        %3450 = vmatpush1.xpose.msra.mxu0 %v3411
        %3451 = vmatprep.subr.mxu0 0.0
        %3452 = vmatpush1.xpose.msra.mxu0 %v3409
        %3453 = vmatprep.subr.mxu0 0.0
        %3454 = vmatpush1.xpose.msra.mxu0 %v3407
        %3455 = vmatprep.subr.mxu0 0.0
        %3456 = vmatpush2.xpose.msra.mxu0 0.0
        %3457 = vmatprep.subr.mxu0 0.0
        %3458 = vmatpush2.xpose.msra.mxu0 0.0
        %3459 = vmatprep.subr.mxu0 0.0
        %3460 = vmatpush2.xpose.msra.mxu0 0.0
        %3461 = vmatprep.subr.mxu0 0.0
        %3462 = vmatpush2.xpose.msra.mxu0 0.0
        %3463 = vmatprep.subr.mxu0 0.0
        %3464 = vmatpush2.xpose.msra.mxu0 0.0
        %3465 = vmatprep.subr.mxu0 0.0
        %3466 = vmatpush2.xpose.msra.mxu0 0.0
        %3467 = vmatprep.subr.mxu0 0.0
        %3468 = vmatpush2.xpose.msra.mxu0 0.0
        %3469 = vmatprep.subr.mxu0 0.0
        %3470 = vmatpush2.xpose.msra.mxu0 0.0
        %3471 = vmatprep.subr.mxu0 0.0
        %3472 = vmatpush2.xpose.msra.mxu0 0.0
        %3473 = vmatprep.subr.mxu0 0.0
        %3474 = vmatpush2.xpose.msra.mxu0 0.0
        %3475 = vmatprep.subr.mxu0 0.0
        %3476 = vmatpush2.xpose.msra.mxu0 0.0
        %3477 = vmatprep.subr.mxu0 0.0
        %3478 = vmatpush2.xpose.msra.mxu0 0.0
        %3479 = vmatprep.subr.mxu0 0.0
        %3480 = vmatpush2.xpose.msra.mxu0 0.0
        %3481 = vmatprep.subr.mxu0 0.0
        %3482 = vmatpush2.xpose.msra.mxu0 0.0
        %3483 = vmatprep.subr.mxu0 0.0
        %3484 = vmatpush2.xpose.msra.mxu0 0.0
        %3485 = vmatprep.subr.mxu0 0.0
        %3486 = vmatpush2.xpose.msra.mxu0 0.0
        %3487 = vmatprep.mubr.f32.mxu0 0.0
        %3488 = vmatmul.mubr.f32.gmra.mxu0 %v3391
        %v3489 = vpop.f32.mrf.mxu0
        %v3490 = vadd.f32 0.0, %v3489
        %v3491 = vpop.f32.mrf.mxu0
        %3492 = vmatprep.mubr.f32.mxu0 0.0
        %3493 = vmatmul.mubr.f32.gmra.mxu0 %v3393
        %v3494 = vpop.f32.mrf.mxu0
        %v3495 = vadd.f32 0.0, %v3494
        %v3496 = vpop.f32.mrf.mxu0
        %3497 = vmatprep.mubr.f32.mxu0 0.0
        %3498 = vmatmul.mubr.f32.gmra.mxu0 %v3395
        %v3499 = vpop.f32.mrf.mxu0
        %v3500 = vadd.f32 0.0, %v3499
        %v3501 = vpop.f32.mrf.mxu0
        %3502 = vmatprep.mubr.f32.mxu0 0.0
        %3503 = vmatmul.mubr.f32.gmra.mxu0 %v3397
        %v3504 = vpop.f32.mrf.mxu0
        %v3505 = vadd.f32 0.0, %v3504
        %v3506 = vpop.f32.mrf.mxu0
        %3507 = vmatprep.mubr.f32.mxu0 0.0
        %3508 = vmatmul.mubr.f32.gmra.mxu0 %v3399
        %v3509 = vpop.f32.mrf.mxu0
        %v3510 = vadd.f32 0.0, %v3509
        %v3511 = vpop.f32.mrf.mxu0
        %3512 = vmatprep.mubr.f32.mxu0 0.0
        %3513 = vmatmul.mubr.f32.gmra.mxu0 %v3401
        %v3514 = vpop.f32.mrf.mxu0
        %v3515 = vadd.f32 0.0, %v3514
        %v3516 = vpop.f32.mrf.mxu0
        %3517 = vmatprep.mubr.f32.mxu0 0.0
        %3518 = vmatmul.mubr.f32.gmra.mxu0 %v3403
        %v3519 = vpop.f32.mrf.mxu0
        %v3520 = vadd.f32 0.0, %v3519
        %v3521 = vpop.f32.mrf.mxu0
        %3522 = vmatprep.mubr.f32.mxu0 0.0
        %3523 = vmatmul.mubr.f32.gmra.mxu0 %v3405
        %v3524 = vpop.f32.mrf.mxu0
        %v3525 = vadd.f32 0.0, %v3524
        %v3526 = vpop.f32.mrf.mxu0
        %3527 = vdwg.mxu0
        %v3528 = vsel %vm673, %v3490, -inf
        %3529 = vmax.xlane.f32.xlu0 %v3528
        %v3530 = vpop.xlane.xlu0 %3529
        %v3531 = vsel %vm673, %v3495, -inf
        %3532 = vmax.xlane.f32.xlu0 %v3531
        %v3533 = vpop.xlane.xlu0 %3532
        %v3534 = vsel %vm673, %v3500, -inf
        %3535 = vmax.xlane.f32.xlu0 %v3534
        %v3536 = vpop.xlane.xlu0 %3535
        %v3537 = vsel %vm673, %v3505, -inf
        %3538 = vmax.xlane.f32.xlu0 %v3537
        %v3539 = vpop.xlane.xlu0 %3538
        %v3540 = vsel %vm673, %v3510, -inf
        %3541 = vmax.xlane.f32.xlu0 %v3540
        %v3542 = vpop.xlane.xlu0 %3541
        %v3543 = vsel %vm673, %v3515, -inf
        %3544 = vmax.xlane.f32.xlu0 %v3543
        %v3545 = vpop.xlane.xlu0 %3544
        %v3546 = vsel %vm673, %v3520, -inf
        %3547 = vmax.xlane.f32.xlu0 %v3546
        %v3548 = vpop.xlane.xlu0 %3547
        %v3549 = vsel %vm673, %v3525, -inf
        %3550 = vmax.xlane.f32.xlu0 %v3549
        %v3551 = vpop.xlane.xlu0 %3550
        %v3552 = vsub.f32 %v3490, %v3530
        %v3553 = vsub.f32 %v3495, %v3533
        %v3554 = vsub.f32 %v3500, %v3536
        %v3555 = vsub.f32 %v3505, %v3539
        %v3556 = vsub.f32 %v3510, %v3542
        %v3557 = vsub.f32 %v3515, %v3545
        %v3558 = vsub.f32 %v3520, %v3548
        %v3559 = vsub.f32 %v3525, %v3551
        %v3560 = vmul.f32 %v3552, 1.442695
        %v3561 = vpow.pop %v3560
        %v3562 = vmul.f32 %v3553, 1.442695
        %v3563 = vpow.pop %v3562
        %v3564 = vmul.f32 %v3554, 1.442695
        %v3565 = vpow.pop %v3564
        %v3566 = vmul.f32 %v3555, 1.442695
        %v3567 = vpow.pop %v3566
        %v3568 = vmul.f32 %v3556, 1.442695
        %v3569 = vpow.pop %v3568
        %v3570 = vmul.f32 %v3557, 1.442695
        %v3571 = vpow.pop %v3570
        %v3572 = vmul.f32 %v3558, 1.442695
        %v3573 = vpow.pop %v3572
        %v3574 = vmul.f32 %v3559, 1.442695
        %v3575 = vpow.pop %v3574
        %v3576 = vsel %vm673, %v3561, 0.0
        %3577 = vadd.xlane.f32.xlu0 %v3576
        %v3578 = vpop.xlane.xlu0 %3577
        %v3579 = vsel %vm673, %v3563, 0.0
        %3580 = vadd.xlane.f32.xlu0 %v3579
        %v3581 = vpop.xlane.xlu0 %3580
        %v3582 = vsel %vm673, %v3565, 0.0
        %3583 = vadd.xlane.f32.xlu0 %v3582
        %v3584 = vpop.xlane.xlu0 %3583
        %v3585 = vsel %vm673, %v3567, 0.0
        %3586 = vadd.xlane.f32.xlu0 %v3585
        %v3587 = vpop.xlane.xlu0 %3586
        %v3588 = vsel %vm673, %v3569, 0.0
        %3589 = vadd.xlane.f32.xlu0 %v3588
        %v3590 = vpop.xlane.xlu0 %3589
        %v3591 = vsel %vm673, %v3571, 0.0
        %3592 = vadd.xlane.f32.xlu0 %v3591
        %v3593 = vpop.xlane.xlu0 %3592
        %v3594 = vsel %vm673, %v3573, 0.0
        %3595 = vadd.xlane.f32.xlu0 %v3594
        %v3596 = vpop.xlane.xlu0 %3595
        %v3597 = vsel %vm673, %v3575, 0.0
        %3598 = vadd.xlane.f32.xlu0 %v3597
        %v3599 = vpop.xlane.xlu0 %3598
        %3600 = vrot.lane.b32.xlu0 %v481, 16
        %v3601 = vpop.permute.xlu0 %3600
        %3602 = vrot.lane.b32.xlu0 %v486, 16
        %v3603 = vpop.permute.xlu0 %3602
        %3604 = vrot.lane.b32.xlu0 %v491, 16
        %v3605 = vpop.permute.xlu0 %3604
        %3606 = vrot.lane.b32.xlu0 %v496, 16
        %v3607 = vpop.permute.xlu0 %3606
        %3608 = vrot.lane.b32.xlu0 %v501, 16
        %v3609 = vpop.permute.xlu0 %3608
        %3610 = vrot.lane.b32.xlu0 %v506, 16
        %v3611 = vpop.permute.xlu0 %3610
        %3612 = vrot.lane.b32.xlu0 %v511, 16
        %v3613 = vpop.permute.xlu0 %3612
        %3614 = vrot.lane.b32.xlu0 %v516, 16
        %v3615 = vpop.permute.xlu0 %3614
        %v3625 = vsel %vm673, %v3561, 0
        %v3628 = vsel %vm673, %v3563, 0
        %v3631 = vsel %vm673, %v3565, 0
        %v3634 = vsel %vm673, %v3567, 0
        %v3637 = vsel %vm673, %v3569, 0
        %v3640 = vsel %vm673, %v3571, 0
        %v3643 = vsel %vm673, %v3573, 0
        %v3646 = vsel %vm673, %v3575, 0
        %3648 = vmatprep.subr.mxu0 0.0
        %3649 = vmatpush1.msra.mxu0 0.0
        %3650 = vmatprep.subr.mxu0 0.0
        %3651 = vmatpush1.msra.mxu0 0.0
        %3652 = vmatprep.subr.mxu0 0.0
        %3653 = vmatpush1.msra.mxu0 0.0
        %3654 = vmatprep.subr.mxu0 0.0
        %3655 = vmatpush1.msra.mxu0 0.0
        %3656 = vmatprep.subr.mxu0 0.0
        %3657 = vmatpush1.msra.mxu0 0.0
        %3658 = vmatprep.subr.mxu0 0.0
        %3659 = vmatpush1.msra.mxu0 0.0
        %3660 = vmatprep.subr.mxu0 0.0
        %3661 = vmatpush1.msra.mxu0 0.0
        %3662 = vmatprep.subr.mxu0 0.0
        %3663 = vmatpush1.msra.mxu0 0.0
        %3664 = vmatprep.subr.mxu0 0.0
        %3665 = vmatpush1.msra.mxu0 %v3615
        %3666 = vmatprep.subr.mxu0 0.0
        %3667 = vmatpush1.msra.mxu0 %v3613
        %3668 = vmatprep.subr.mxu0 0.0
        %3669 = vmatpush1.msra.mxu0 %v3611
        %3670 = vmatprep.subr.mxu0 0.0
        %3671 = vmatpush1.msra.mxu0 %v3609
        %3672 = vmatprep.subr.mxu0 0.0
        %3673 = vmatpush1.msra.mxu0 %v3607
        %3674 = vmatprep.subr.mxu0 0.0
        %3675 = vmatpush1.msra.mxu0 %v3605
        %3676 = vmatprep.subr.mxu0 0.0
        %3677 = vmatpush1.msra.mxu0 %v3603
        %3678 = vmatprep.subr.mxu0 0.0
        %3679 = vmatpush1.msra.mxu0 %v3601
        %3680 = vmatprep.subr.mxu0 0.0
        %3681 = vmatpush2.msra.mxu0 0.0
        %3682 = vmatprep.subr.mxu0 0.0
        %3683 = vmatpush2.msra.mxu0 0.0
        %3684 = vmatprep.subr.mxu0 0.0
        %3685 = vmatpush2.msra.mxu0 0.0
        %3686 = vmatprep.subr.mxu0 0.0
        %3687 = vmatpush2.msra.mxu0 0.0
        %3688 = vmatprep.subr.mxu0 0.0
        %3689 = vmatpush2.msra.mxu0 0.0
        %3690 = vmatprep.subr.mxu0 0.0
        %3691 = vmatpush2.msra.mxu0 0.0
        %3692 = vmatprep.subr.mxu0 0.0
        %3693 = vmatpush2.msra.mxu0 0.0
        %3694 = vmatprep.subr.mxu0 0.0
        %3695 = vmatpush2.msra.mxu0 0.0
        %3696 = vmatprep.subr.mxu0 0.0
        %3697 = vmatpush2.msra.mxu0 0.0
        %3698 = vmatprep.subr.mxu0 0.0
        %3699 = vmatpush2.msra.mxu0 0.0
        %3700 = vmatprep.subr.mxu0 0.0
        %3701 = vmatpush2.msra.mxu0 0.0
        %3702 = vmatprep.subr.mxu0 0.0
        %3703 = vmatpush2.msra.mxu0 0.0
        %3704 = vmatprep.subr.mxu0 0.0
        %3705 = vmatpush2.msra.mxu0 0.0
        %3706 = vmatprep.subr.mxu0 0.0
        %3707 = vmatpush2.msra.mxu0 0.0
        %3708 = vmatprep.subr.mxu0 0.0
        %3709 = vmatpush2.msra.mxu0 0.0
        %3710 = vmatprep.subr.mxu0 0.0
        %3711 = vmatpush2.msra.mxu0 0.0
        %3712 = vmatprep.mubr.f32.mxu0 0.0
        %3713 = vmatmul.mubr.f32.gmra.mxu0 %v3625
        %v3714 = vpop.f32.mrf.mxu0
        %v3715 = vadd.f32 0.0, %v3714
        %v3716 = vpop.f32.mrf.mxu0
        %3717 = vmatprep.mubr.f32.mxu0 0.0
        %3718 = vmatmul.mubr.f32.gmra.mxu0 %v3628
        %v3719 = vpop.f32.mrf.mxu0
        %v3720 = vadd.f32 0.0, %v3719
        %v3721 = vpop.f32.mrf.mxu0
        %3722 = vmatprep.mubr.f32.mxu0 0.0
        %3723 = vmatmul.mubr.f32.gmra.mxu0 %v3631
        %v3724 = vpop.f32.mrf.mxu0
        %v3725 = vadd.f32 0.0, %v3724
        %v3726 = vpop.f32.mrf.mxu0
        %3727 = vmatprep.mubr.f32.mxu0 0.0
        %3728 = vmatmul.mubr.f32.gmra.mxu0 %v3634
        %v3729 = vpop.f32.mrf.mxu0
        %v3730 = vadd.f32 0.0, %v3729
        %v3731 = vpop.f32.mrf.mxu0
        %3732 = vmatprep.mubr.f32.mxu0 0.0
        %3733 = vmatmul.mubr.f32.gmra.mxu0 %v3637
        %v3734 = vpop.f32.mrf.mxu0
        %v3735 = vadd.f32 0.0, %v3734
        %v3736 = vpop.f32.mrf.mxu0
        %3737 = vmatprep.mubr.f32.mxu0 0.0
        %3738 = vmatmul.mubr.f32.gmra.mxu0 %v3640
        %v3739 = vpop.f32.mrf.mxu0
        %v3740 = vadd.f32 0.0, %v3739
        %v3741 = vpop.f32.mrf.mxu0
        %3742 = vmatprep.mubr.f32.mxu0 0.0
        %3743 = vmatmul.mubr.f32.gmra.mxu0 %v3643
        %v3744 = vpop.f32.mrf.mxu0
        %v3745 = vadd.f32 0.0, %v3744
        %v3746 = vpop.f32.mrf.mxu0
        %3747 = vmatprep.mubr.f32.mxu0 0.0
        %3748 = vmatmul.mubr.f32.gmra.mxu0 %v3646
        %v3749 = vpop.f32.mrf.mxu0
        %v3750 = vadd.f32 0.0, %v3749
        %v3751 = vpop.f32.mrf.mxu0
        %3752 = vdwg.mxu0
        %v3753 = vrcp.pop %v3578
        %v3754 = vrcp.pop %v3581
        %v3755 = vrcp.pop %v3584
        %v3756 = vrcp.pop %v3587
        %v3757 = vrcp.pop %v3590
        %v3758 = vrcp.pop %v3593
        %v3759 = vrcp.pop %v3596
        %v3760 = vrcp.pop %v3599
        %v3761 = vmul.f32 %v3715, %v3753
        %v3762 = vmul.f32 %v3720, %v3754
        %v3763 = vmul.f32 %v3725, %v3755
        %v3764 = vmul.f32 %v3730, %v3756
        %v3765 = vmul.f32 %v3735, %v3757
        %v3766 = vmul.f32 %v3740, %v3758
        %v3767 = vmul.f32 %v3745, %v3759
        %v3768 = vmul.f32 %v3750, %v3760
        %3777 = vrot.lane.b32.xlu0 %v1301, 16
        %v3778 = vpop.permute.xlu0 %3777
        %3779 = vrot.lane.b32.xlu0 %v1302, 16
        %v3780 = vpop.permute.xlu0 %3779
        %3781 = vrot.lane.b32.xlu0 %v1303, 16
        %v3782 = vpop.permute.xlu0 %3781
        %3783 = vrot.lane.b32.xlu0 %v1304, 16
        %v3784 = vpop.permute.xlu0 %3783
        %3785 = vrot.lane.b32.xlu0 %v1305, 16
        %v3786 = vpop.permute.xlu0 %3785
        %3787 = vrot.lane.b32.xlu0 %v1306, 16
        %v3788 = vpop.permute.xlu0 %3787
        %3789 = vrot.lane.b32.xlu0 %v1307, 16
        %v3790 = vpop.permute.xlu0 %3789
        %3791 = vrot.lane.b32.xlu0 %v1308, 16
        %v3792 = vpop.permute.xlu0 %3791
        %3809 = vrot.lane.b32.xlu0 %v1711, 32
        %v3810 = vpop.permute.xlu0 %3809
        %3811 = vrot.lane.b32.xlu0 %v1712, 32
        %v3812 = vpop.permute.xlu0 %3811
        %3813 = vrot.lane.b32.xlu0 %v1713, 32
        %v3814 = vpop.permute.xlu0 %3813
        %3815 = vrot.lane.b32.xlu0 %v1714, 32
        %v3816 = vpop.permute.xlu0 %3815
        %3817 = vrot.lane.b32.xlu0 %v1715, 32
        %v3818 = vpop.permute.xlu0 %3817
        %3819 = vrot.lane.b32.xlu0 %v1716, 32
        %v3820 = vpop.permute.xlu0 %3819
        %3821 = vrot.lane.b32.xlu0 %v1717, 32
        %v3822 = vpop.permute.xlu0 %3821
        %3823 = vrot.lane.b32.xlu0 %v1718, 32
        %v3824 = vpop.permute.xlu0 %3823
        %3841 = vrot.lane.b32.xlu0 %v2121, 48
        %v3842 = vpop.permute.xlu0 %3841
        %3843 = vrot.lane.b32.xlu0 %v2122, 48
        %v3844 = vpop.permute.xlu0 %3843
        %3845 = vrot.lane.b32.xlu0 %v2123, 48
        %v3846 = vpop.permute.xlu0 %3845
        %3847 = vrot.lane.b32.xlu0 %v2124, 48
        %v3848 = vpop.permute.xlu0 %3847
        %3849 = vrot.lane.b32.xlu0 %v2125, 48
        %v3850 = vpop.permute.xlu0 %3849
        %3851 = vrot.lane.b32.xlu0 %v2126, 48
        %v3852 = vpop.permute.xlu0 %3851
        %3853 = vrot.lane.b32.xlu0 %v2127, 48
        %v3854 = vpop.permute.xlu0 %3853
        %3855 = vrot.lane.b32.xlu0 %v2128, 48
        %v3856 = vpop.permute.xlu0 %3855
        %3873 = vrot.lane.b32.xlu0 %v2531, 64
        %v3874 = vpop.permute.xlu0 %3873
        %3875 = vrot.lane.b32.xlu0 %v2532, 64
        %v3876 = vpop.permute.xlu0 %3875
        %3877 = vrot.lane.b32.xlu0 %v2533, 64
        %v3878 = vpop.permute.xlu0 %3877
        %3879 = vrot.lane.b32.xlu0 %v2534, 64
        %v3880 = vpop.permute.xlu0 %3879
        %3881 = vrot.lane.b32.xlu0 %v2535, 64
        %v3882 = vpop.permute.xlu0 %3881
        %3883 = vrot.lane.b32.xlu0 %v2536, 64
        %v3884 = vpop.permute.xlu0 %3883
        %3885 = vrot.lane.b32.xlu0 %v2537, 64
        %v3886 = vpop.permute.xlu0 %3885
        %3887 = vrot.lane.b32.xlu0 %v2538, 64
        %v3888 = vpop.permute.xlu0 %3887
        %3905 = vrot.lane.b32.xlu0 %v2941, 80
        %v3906 = vpop.permute.xlu0 %3905
        %3907 = vrot.lane.b32.xlu0 %v2942, 80
        %v3908 = vpop.permute.xlu0 %3907
        %3909 = vrot.lane.b32.xlu0 %v2943, 80
        %v3910 = vpop.permute.xlu0 %3909
        %3911 = vrot.lane.b32.xlu0 %v2944, 80
        %v3912 = vpop.permute.xlu0 %3911
        %3913 = vrot.lane.b32.xlu0 %v2945, 80
        %v3914 = vpop.permute.xlu0 %3913
        %3915 = vrot.lane.b32.xlu0 %v2946, 80
        %v3916 = vpop.permute.xlu0 %3915
        %3917 = vrot.lane.b32.xlu0 %v2947, 80
        %v3918 = vpop.permute.xlu0 %3917
        %3919 = vrot.lane.b32.xlu0 %v2948, 80
        %v3920 = vpop.permute.xlu0 %3919
        %3937 = vrot.lane.b32.xlu0 %v3351, 96
        %v3938 = vpop.permute.xlu0 %3937
        %3939 = vrot.lane.b32.xlu0 %v3352, 96
        %v3940 = vpop.permute.xlu0 %3939
        %3941 = vrot.lane.b32.xlu0 %v3353, 96
        %v3942 = vpop.permute.xlu0 %3941
        %3943 = vrot.lane.b32.xlu0 %v3354, 96
        %v3944 = vpop.permute.xlu0 %3943
        %3945 = vrot.lane.b32.xlu0 %v3355, 96
        %v3946 = vpop.permute.xlu0 %3945
        %3947 = vrot.lane.b32.xlu0 %v3356, 96
        %v3948 = vpop.permute.xlu0 %3947
        %3949 = vrot.lane.b32.xlu0 %v3357, 96
        %v3950 = vpop.permute.xlu0 %3949
        %3951 = vrot.lane.b32.xlu0 %v3358, 96
        %v3952 = vpop.permute.xlu0 %3951
        %3969 = vrot.lane.b32.xlu0 %v3761, 112
        %v3970 = vpop.permute.xlu0 %3969
        %3971 = vrot.lane.b32.xlu0 %v3762, 112
        %v3972 = vpop.permute.xlu0 %3971
        %3973 = vrot.lane.b32.xlu0 %v3763, 112
        %v3974 = vpop.permute.xlu0 %3973
        %3975 = vrot.lane.b32.xlu0 %v3764, 112
        %v3976 = vpop.permute.xlu0 %3975
        %3977 = vrot.lane.b32.xlu0 %v3765, 112
        %v3978 = vpop.permute.xlu0 %3977
        %3979 = vrot.lane.b32.xlu0 %v3766, 112
        %v3980 = vpop.permute.xlu0 %3979
        %3981 = vrot.lane.b32.xlu0 %v3767, 112
        %v3982 = vpop.permute.xlu0 %3981
        %3983 = vrot.lane.b32.xlu0 %v3768, 112
        %v3984 = vpop.permute.xlu0 %3983
        %v3993 = vsel %vm519, %v883, %v3778
        %v3994 = vsel %vm519, %v884, %v3780
        %v3995 = vsel %vm519, %v885, %v3782
        %v3996 = vsel %vm519, %v886, %v3784
        %v3997 = vsel %vm519, %v887, %v3786
        %v3998 = vsel %vm519, %v888, %v3788
        %v3999 = vsel %vm519, %v889, %v3790
        %v4000 = vsel %vm519, %v890, %v3792
        %vm4001 = vcmask 261120
        %v4002 = vsel %vm4001, %v3993, %v3810
        %v4003 = vsel %vm4001, %v3994, %v3812
        %v4004 = vsel %vm4001, %v3995, %v3814
        %v4005 = vsel %vm4001, %v3996, %v3816
        %v4006 = vsel %vm4001, %v3997, %v3818
        %v4007 = vsel %vm4001, %v3998, %v3820
        %v4008 = vsel %vm4001, %v3999, %v3822
        %v4009 = vsel %vm4001, %v4000, %v3824
        %vm4010 = vcmask 392192
        %v4011 = vsel %vm4010, %v4002, %v3842
        %v4012 = vsel %vm4010, %v4003, %v3844
        %v4013 = vsel %vm4010, %v4004, %v3846
        %v4014 = vsel %vm4010, %v4005, %v3848
        %v4015 = vsel %vm4010, %v4006, %v3850
        %v4016 = vsel %vm4010, %v4007, %v3852
        %v4017 = vsel %vm4010, %v4008, %v3854
        %v4018 = vsel %vm4010, %v4009, %v3856
        %v4019 = vsel %vm673, %v4011, %v3874
        %v4020 = vsel %vm673, %v4012, %v3876
        %v4021 = vsel %vm673, %v4013, %v3878
        %v4022 = vsel %vm673, %v4014, %v3880
        %v4023 = vsel %vm673, %v4015, %v3882
        %v4024 = vsel %vm673, %v4016, %v3884
        %v4025 = vsel %vm673, %v4017, %v3886
        %v4026 = vsel %vm673, %v4018, %v3888
        %vm4027 = vcmask 654336
        %v4028 = vsel %vm4027, %v4019, %v3906
        %v4029 = vsel %vm4027, %v4020, %v3908
        %v4030 = vsel %vm4027, %v4021, %v3910
        %v4031 = vsel %vm4027, %v4022, %v3912
        %v4032 = vsel %vm4027, %v4023, %v3914
        %v4033 = vsel %vm4027, %v4024, %v3916
        %v4034 = vsel %vm4027, %v4025, %v3918
        %v4035 = vsel %vm4027, %v4026, %v3920
        %vm4036 = vcmask 785408
        %v4037 = vsel %vm4036, %v4028, %v3938
        %v4038 = vsel %vm4036, %v4029, %v3940
        %v4039 = vsel %vm4036, %v4030, %v3942
        %v4040 = vsel %vm4036, %v4031, %v3944
        %v4041 = vsel %vm4036, %v4032, %v3946
        %v4042 = vsel %vm4036, %v4033, %v3948
        %v4043 = vsel %vm4036, %v4034, %v3950
        %v4044 = vsel %vm4036, %v4035, %v3952
        %vm4045 = vcmask 916480
        %v4046 = vsel %vm4045, %v4037, %v3970
        %v4047 = vsel %vm4045, %v4038, %v3972
        %v4048 = vsel %vm4045, %v4039, %v3974
        %v4049 = vsel %vm4045, %v4040, %v3976
        %v4050 = vsel %vm4045, %v4041, %v3978
        %v4051 = vsel %vm4045, %v4042, %v3980
        %v4052 = vsel %vm4045, %v4043, %v3982
        %v4053 = vsel %vm4045, %v4044, %v3984
        %v4054 = vld [vmem:[#allocation7] sm:$0xff]
        %v4055 = vld [vmem:[#allocation7 + $0x8] sm:$0xff]
        %v4056 = vld [vmem:[#allocation7 + $0x10] sm:$0xff]
        %v4057 = vld [vmem:[#allocation7 + $0x18] sm:$0xff]
        %v4058 = vld [vmem:[#allocation7 + $0x20] sm:$0xff]
        %v4059 = vld [vmem:[#allocation7 + $0x28] sm:$0xff]
        %v4060 = vld [vmem:[#allocation7 + $0x30] sm:$0xff]
        %v4061 = vld [vmem:[#allocation7 + $0x38] sm:$0xff]
        %v4062 = vld [vmem:[#allocation7 + $0x40] sm:$0xff]
        %v4063 = vld [vmem:[#allocation7 + $0x48] sm:$0xff]
        %v4064 = vld [vmem:[#allocation7 + $0x50] sm:$0xff]
        %v4065 = vld [vmem:[#allocation7 + $0x58] sm:$0xff]
        %v4066 = vld [vmem:[#allocation7 + $0x60] sm:$0xff]
        %v4067 = vld [vmem:[#allocation7 + $0x68] sm:$0xff]
        %v4068 = vld [vmem:[#allocation7 + $0x70] sm:$0xff]
        %v4069 = vld [vmem:[#allocation7 + $0x78] sm:$0xff]
        %v4070 = vld [vmem:[%s3] sm:$0x1]
        %v4072 = vlaneseq
        %v4073 = vshrl.u32 %v4072, 7
        %v4074 = vsub.s32 0, %v4073
        %v4075 = vrot.slane %v4070, %v4074
        %4077 = vmatprep.subr.mxu0 0.0
        %4078 = vmatpush1.msra.mxu0 %v4069
        %4079 = vmatprep.subr.mxu0 0.0
        %4080 = vmatpush1.msra.mxu0 %v4068
        %4081 = vmatprep.subr.mxu0 0.0
        %4082 = vmatpush1.msra.mxu0 %v4067
        %4083 = vmatprep.subr.mxu0 0.0
        %4084 = vmatpush1.msra.mxu0 %v4066
        %4085 = vmatprep.subr.mxu0 0.0
        %4086 = vmatpush1.msra.mxu0 %v4065
        %4087 = vmatprep.subr.mxu0 0.0
        %4088 = vmatpush1.msra.mxu0 %v4064
        %4089 = vmatprep.subr.mxu0 0.0
        %4090 = vmatpush1.msra.mxu0 %v4063
        %4091 = vmatprep.subr.mxu0 0.0
        %4092 = vmatpush1.msra.mxu0 %v4062
        %4093 = vmatprep.subr.mxu0 0.0
        %4094 = vmatpush1.msra.mxu0 %v4061
        %4095 = vmatprep.subr.mxu0 0.0
        %4096 = vmatpush1.msra.mxu0 %v4060
        %4097 = vmatprep.subr.mxu0 0.0
        %4098 = vmatpush1.msra.mxu0 %v4059
        %4099 = vmatprep.subr.mxu0 0.0
        %4100 = vmatpush1.msra.mxu0 %v4058
        %4101 = vmatprep.subr.mxu0 0.0
        %4102 = vmatpush1.msra.mxu0 %v4057
        %4103 = vmatprep.subr.mxu0 0.0
        %4104 = vmatpush1.msra.mxu0 %v4056
        %4105 = vmatprep.subr.mxu0 0.0
        %4106 = vmatpush1.msra.mxu0 %v4055
        %4107 = vmatprep.subr.mxu0 0.0
        %4108 = vmatpush1.msra.mxu0 %v4054
        %4109 = vmatprep.subr.mxu0 0.0
        %4110 = vmatpush2.msra.mxu0 0.0
        %4111 = vmatprep.subr.mxu0 0.0
        %4112 = vmatpush2.msra.mxu0 0.0
        %4113 = vmatprep.subr.mxu0 0.0
        %4114 = vmatpush2.msra.mxu0 0.0
        %4115 = vmatprep.subr.mxu0 0.0
        %4116 = vmatpush2.msra.mxu0 0.0
        %4117 = vmatprep.subr.mxu0 0.0
        %4118 = vmatpush2.msra.mxu0 0.0
        %4119 = vmatprep.subr.mxu0 0.0
        %4120 = vmatpush2.msra.mxu0 0.0
        %4121 = vmatprep.subr.mxu0 0.0
        %4122 = vmatpush2.msra.mxu0 0.0
        %4123 = vmatprep.subr.mxu0 0.0
        %4124 = vmatpush2.msra.mxu0 0.0
        %4125 = vmatprep.subr.mxu0 0.0
        %4126 = vmatpush2.msra.mxu0 0.0
        %4127 = vmatprep.subr.mxu0 0.0
        %4128 = vmatpush2.msra.mxu0 0.0
        %4129 = vmatprep.subr.mxu0 0.0
        %4130 = vmatpush2.msra.mxu0 0.0
        %4131 = vmatprep.subr.mxu0 0.0
        %4132 = vmatpush2.msra.mxu0 0.0
        %4133 = vmatprep.subr.mxu0 0.0
        %4134 = vmatpush2.msra.mxu0 0.0
        %4135 = vmatprep.subr.mxu0 0.0
        %4136 = vmatpush2.msra.mxu0 0.0
        %4137 = vmatprep.subr.mxu0 0.0
        %4138 = vmatpush2.msra.mxu0 0.0
        %4139 = vmatprep.subr.mxu0 0.0
        %4140 = vmatpush2.msra.mxu0 0.0
        %4141 = vmatprep.mubr.f32.mxu0 0.0
        %4142 = vmatmul.mubr.f32.gmra.mxu0 %v4046
        %v4143 = vpop.f32.mrf.mxu0
        %v4144 = vadd.f32 %v4075, %v4143
        %v4145 = vpop.f32.mrf.mxu0
        %4146 = vmatprep.mubr.f32.mxu0 0.0
        %4147 = vmatmul.mubr.f32.gmra.mxu0 %v4047
        %v4148 = vpop.f32.mrf.mxu0
        %v4149 = vadd.f32 %v4075, %v4148
        %v4150 = vpop.f32.mrf.mxu0
        %4151 = vmatprep.mubr.f32.mxu0 0.0
        %4152 = vmatmul.mubr.f32.gmra.mxu0 %v4048
        %v4153 = vpop.f32.mrf.mxu0
        %v4154 = vadd.f32 %v4075, %v4153
        %v4155 = vpop.f32.mrf.mxu0
        %4156 = vmatprep.mubr.f32.mxu0 0.0
        %4157 = vmatmul.mubr.f32.gmra.mxu0 %v4049
        %v4158 = vpop.f32.mrf.mxu0
        %v4159 = vadd.f32 %v4075, %v4158
        %v4160 = vpop.f32.mrf.mxu0
        %4161 = vmatprep.mubr.f32.mxu0 0.0
        %4162 = vmatmul.mubr.f32.gmra.mxu0 %v4050
        %v4163 = vpop.f32.mrf.mxu0
        %v4164 = vadd.f32 %v4075, %v4163
        %v4165 = vpop.f32.mrf.mxu0
        %4166 = vmatprep.mubr.f32.mxu0 0.0
        %4167 = vmatmul.mubr.f32.gmra.mxu0 %v4051
        %v4168 = vpop.f32.mrf.mxu0
        %v4169 = vadd.f32 %v4075, %v4168
        %v4170 = vpop.f32.mrf.mxu0
        %4171 = vmatprep.mubr.f32.mxu0 0.0
        %4172 = vmatmul.mubr.f32.gmra.mxu0 %v4052
        %v4173 = vpop.f32.mrf.mxu0
        %v4174 = vadd.f32 %v4075, %v4173
        %v4175 = vpop.f32.mrf.mxu0
        %4176 = vmatprep.mubr.f32.mxu0 0.0
        %4177 = vmatmul.mubr.f32.gmra.mxu0 %v4053
        %v4178 = vpop.f32.mrf.mxu0
        %v4179 = vadd.f32 %v4075, %v4178
        %v4180 = vpop.f32.mrf.mxu0
        %4181 = vdwg.mxu0
        %4182 = vst [vmem:[%s244] sm:$0xff] %v4144
        %4183 = vst [vmem:[%s244 + $0x8] sm:$0xff] %v4149
        %4184 = vst [vmem:[%s244 + $0x10] sm:$0xff] %v4154
        %4185 = vst [vmem:[%s244 + $0x18] sm:$0xff] %v4159
        %4186 = vst [vmem:[%s244 + $0x20] sm:$0xff] %v4164
        %4187 = vst [vmem:[%s244 + $0x28] sm:$0xff] %v4169
        %4188 = vst [vmem:[%s244 + $0x30] sm:$0xff] %v4174
        %4189 = vst [vmem:[%s244 + $0x38] sm:$0xff] %v4179
        %s4190 = sand.u32 %s119, 1
        %s4191 = scalar_lea.sflag [#allocation4], %s4190
        %s4192 = sand.u32 %s119, 1
        %s4193 = smul.addr %s4192, 64
        %s4194 = scalar_lea.vmem [#allocation8], %s4193
        // Predicated region
        $region49: #{pvt_attention.1} parent=35 // pred_check
          %p4195 = pneg %p129
        $region50: #{pvt_attention.1} parent=35 // pred_check_branch
          %4197 = sbr.rel (%p4195) target = $region52
        $region51: #{pvt_attention.1} parent=35 // pred_region
          %s4199 = ssub.s32 1024, 1024
          %4200 = vsyncadd %s4191, %s4199
          %s4201 = smul.addr %s22, 8
          %s4202 = smul.addr %s4201, 128
          %s4203 = scalar_lea.hbm %s4, %s4202
          %s4204 = sshll.u32 %s4194, 4
          %s4205 = int_to_ptr.vmem [resolvable:$true] %s4204
          %4210 = dma.vmem_to_hbm [thread:$0]  %s4205, 1024, %s4203, %s4191, 128, 128, 8
        $region52: #{pvt_attention.1} parent=35 // pred_fallthru
          _
      $region36: #{pvt_attention.1} parent=5 // pred_fallthru
        _
      %p4211 = scmp.le.s32.totalorder 2, %s17
      // Predicated region
      $region53: #{pvt_attention.1} parent=5 // pred_check
        %p4212 = pneg %p4211
      $region54: #{pvt_attention.1} parent=5 // pred_check_branch
        %4214 = sbr.rel (%p4212) target = $region56
      $region55: #{pvt_attention.1} parent=5 // pred_region
        %s4215 = ssub.s32 %s17, 2
        // Predicated region
        $region57: #{pvt_attention.1} parent=55 // pred_check
          %p4216 = pneg %p135
        $region58: #{pvt_attention.1} parent=55 // pred_check_branch
          %4218 = sbr.rel (%p4216) target = $region60
        $region59: #{pvt_attention.1} parent=55 // pred_region
          %s4219 = sand.u32 %s120, 1
          %s4220 = scalar_lea.sflag [#allocation4], %s4219
          %s4221 = sand.u32 %s120, 1
          %s4222 = smul.addr %s4221, 64
          %s4223 = scalar_lea.vmem [#allocation8], %s4222
          %4224 = dma.done %s4220, 1024
        $region60: #{pvt_attention.1} parent=55 // pred_fallthru
          _
      $region56: #{pvt_attention.1} parent=5 // pred_fallthru
        _
    $region6: #{pvt_attention.1} parent=1 // loop_footer
      %s21 = sadd.s32 1, %s17
    $region7: #{pvt_attention.1} parent=1 // loop_footer_branch
      %16 = sbr.rel target = $region3
    $region8: #{pvt_attention.1} parent=1 // loop_exit
      _
    %4225 = vsyncpa [#allocation3], 1
    %s4226 = scalar_lea.sflag [#allocation3], 1
    %4227 = vsyncpa %s4226, 1
    %4228 = vsyncpa [#allocation6], 1
    %4229 = vsyncpa [#allocation4], 1
    %s4230 = scalar_lea.sflag [#allocation4], 1
    %4231 = vsyncpa %s4230, 1

</llo_original>
